<compile_context>
chip_gen: v7x
topology: tpu7x:2x2x1
jax: 0.10.0
libtpu: 0.0.40
codegen_flags: <defaults>
</compile_context>

<pallas_src>
import functools
import math

import numpy as np
import jax
import jax.numpy as jnp
from jax import lax
from jax.experimental import pallas as pl
from jax.experimental.pallas import tpu as pltpu


_MASK_VALUE = -0.7 * float(np.finfo(np.float32).max)   # additive bias for masked keys


@functools.lru_cache(maxsize=None)
def _vmem_limit():
    """Generation-aware scoped-VMEM budget (v7x: 32 MiB, v5e/v6e: 64 MiB)."""
    default = 32 * 1024 * 1024
    try:
        phys = int(pltpu.get_tpu_info().vmem_capacity_bytes)
    except Exception:
        return default
    return int(min(max(phys // 2, default), 64 * 1024 * 1024))


def _pick_tile(dim, target, align):
    """Largest multiple of `align` <= target that divides dim; else the full dim."""
    if dim <= target:
        return dim
    t = (min(target, dim) // align) * align
    while t >= align:
        if dim % t == 0:
            return t
        t -= align
    return dim


def _pick_tile_m(M, target):
    """Prefer MXU-friendly (128-aligned) M tiles, fall back to 8-aligned."""
    t = _pick_tile(M, target, 128)
    if t == M and M > target:
        t = _pick_tile(M, target, 8)
    return t


# --------------------------------------------------------------------------
# Tiled projection matmul: bf16 operands, f32 accumulation in VMEM scratch.
# --------------------------------------------------------------------------
def _matmul_kernel(x_ref, w_ref, o_ref, acc_ref):
    @pl.when(pl.program_id(2) == 0)
    def _():
        acc_ref[...] = jnp.zeros_like(acc_ref)

    acc_ref[...] += jnp.dot(x_ref[...], w_ref[...],
                            preferred_element_type=jnp.float32)

    @pl.when(pl.program_id(2) == pl.num_programs(2) - 1)
    def _():
        o_ref[...] = acc_ref[...].astype(o_ref.dtype)


def pallas_matmul(x, w, out_dtype=jnp.bfloat16, tiles=(512, 512, 512)):
    """x: (M, K), w: (K, N) -> (M, N) in out_dtype; MXU runs on bf16 operands."""
    x = x.astype(jnp.bfloat16)
    w = w.astype(jnp.bfloat16)
    M, K = x.shape
    K2, N = w.shape
    assert K == K2
    bm = _pick_tile_m(M, tiles[0])
    bn = _pick_tile(N, tiles[1], 128)
    bk = _pick_tile(K, tiles[2], 128)
    grid = (M // bm, N // bn, K // bk)
    out_bytes = M * N * np.dtype(out_dtype).itemsize
    return pl.pallas_call(
        _matmul_kernel,
        out_shape=jax.ShapeDtypeStruct((M, N), out_dtype),
        grid=grid,
        in_specs=[
            pl.BlockSpec((bm, bk), lambda i, j, k: (i, k)),
            pl.BlockSpec((bk, bn), lambda i, j, k: (k, j)),
        ],
        out_specs=pl.BlockSpec((bm, bn), lambda i, j, k: (i, j)),
        scratch_shapes=[pltpu.VMEM((bm, bn), jnp.float32)],
        compiler_params=pltpu.CompilerParams(
            dimension_semantics=("parallel", "parallel", "arbitrary"),
            vmem_limit_bytes=_vmem_limit()),
        cost_estimate=pl.CostEstimate(
            flops=2 * M * N * K, transcendentals=0,
            bytes_accessed=2 * M * K + 2 * K * N + out_bytes),
    )(x, w)


# --------------------------------------------------------------------------
# One-pass RoPE kernel applied to the fused QKV projection output.
# x: (B, T, H*D) bf16 -> x*cos + roll(x, D/2)*sin_signed, bf16.
# --------------------------------------------------------------------------
def _rope_kernel(x_ref, cos_ref, sin_ref, o_ref, *, shift):
    x = x_ref[...].astype(jnp.float32)
    cos = cos_ref[...].astype(jnp.float32)
    sin = sin_ref[...].astype(jnp.float32)
    o_ref[...] = (x * cos + pltpu.roll(x, shift=shift, axis=1) * sin
                  ).astype(o_ref.dtype)


def pallas_rope(x, cos_bf16, sin_signed_bf16, *, head_dim, t_block=256):
    B, T, HD = x.shape
    H = HD // head_dim
    tb = _pick_tile(T, t_block, 8)
    grid = (B, H, T // tb)
    return pl.pallas_call(
        functools.partial(_rope_kernel, shift=head_dim // 2),
        out_shape=jax.ShapeDtypeStruct((B, T, HD), jnp.bfloat16),
        grid=grid,
        in_specs=[
            pl.BlockSpec((None, tb, head_dim), lambda b, h, t: (b, t, h)),
            pl.BlockSpec((tb, head_dim), lambda b, h, t: (t, 0)),
            pl.BlockSpec((tb, head_dim), lambda b, h, t: (t, 0)),
        ],
        out_specs=pl.BlockSpec((None, tb, head_dim), lambda b, h, t: (b, t, h)),
        compiler_params=pltpu.CompilerParams(
            dimension_semantics=("parallel", "parallel", "parallel"),
            vmem_limit_bytes=_vmem_limit()),
        cost_estimate=pl.CostEstimate(
            flops=4 * B * T * HD, transcendentals=0,
            bytes_accessed=4 * B * T * HD + 4 * T * head_dim),
    )(x, cos_bf16, sin_signed_bf16)


# --------------------------------------------------------------------------
# GQA flash attention: grid (B, KV-head group, q-tile, kv-tile).
# Per grid point the kernel streams one K/V tile for the group and updates the
# online-softmax state of all h = HQ/HK query heads of that group.
# Causal masking is generated in-kernel (iota) and fully-masked kv tiles are
# skipped (compute via pl.when, DMA via a clamped index_map).
# --------------------------------------------------------------------------
def _flash_kernel(*refs, q_block, kv_block, h, d_head, causal, has_bias):
    if has_bias:
        q_ref, k_ref, v_ref, bias_ref, o_ref, m_ref, l_ref, acc_ref = refs
    else:
        q_ref, k_ref, v_ref, o_ref, m_ref, l_ref, acc_ref = refs
        bias_ref = None

    qi = pl.program_id(2)
    kv = pl.program_id(3)

    @pl.when(kv == 0)
    def _init():
        m_ref[...] = jnp.full_like(m_ref, -jnp.inf)
        l_ref[...] = jnp.zeros_like(l_ref)
        acc_ref[...] = jnp.zeros_like(acc_ref)

    def _update():
        k_t = k_ref[...]                     # (kv_block, d_head) bf16, RoPE'd
        v_t = v_ref[...]                     # (kv_block, d_head) bf16, RoPE'd
        if causal:
            rows = qi * q_block + lax.broadcasted_iota(
                jnp.int32, (q_block, kv_block), 0)
            cols = kv * kv_block + lax.broadcasted_iota(
                jnp.int32, (q_block, kv_block), 1)
            bias = jnp.where(rows >= cols, 0.0, _MASK_VALUE).astype(jnp.float32)
        elif has_bias:
            bias = bias_ref[...].astype(jnp.float32)
        else:
            bias = None
        # static loop over the query heads of this KV group (h is small)
        for j in range(h):
            q_j = q_ref[:, j * d_head:(j + 1) * d_head]   # (q_block, d_head) bf16
            s = lax.dot_general(q_j, k_t, (((1,), (1,)), ((), ())),
                                preferred_element_type=jnp.float32)
            if bias is not None:
                s = s + bias
            m_prev = m_ref[j]
            m_new = jnp.maximum(m_prev, jnp.max(s, axis=-1, keepdims=True))
            alpha = jnp.exp(m_prev - m_new)
            # TODO(synk): on v6e/v7x a bf16 exp here would double EUP throughput.
            p = jnp.exp(s - m_new)
            l_ref[j] = alpha * l_ref[j] + jnp.sum(p, axis=-1, keepdims=True)
            acc_ref[j] = alpha * acc_ref[j] + lax.dot_general(
                p.astype(jnp.bfloat16), v_t, (((1,), (0,)), ((), ())),
                preferred_element_type=jnp.float32)
            m_ref[j] = m_new

    if causal:
        # skip kv tiles strictly above the diagonal of this q tile
        pl.when(kv * kv_block < (qi + 1) * q_block)(_update)
    else:
        _update()

    @pl.when(kv == pl.num_programs(3) - 1)
    def _finalize():
        for j in range(h):
            o_ref[:, j * d_head:(j + 1) * d_head] = (
                acc_ref[j] * pl.reciprocal(l_ref[j], approx=False)
            ).astype(o_ref.dtype)


def pallas_flash_attention(qkv_r, bias, *, num_heads, num_q_heads, d_head,
                           causal, q_block=256, kv_block=256):
    """qkv_r: (B, T, (HQ + 2*HK)*D) RoPE'd bf16, head-major [q | k | v]."""
    B, T, Ntot = qkv_r.shape
    HK, HQ = num_heads, num_q_heads
    h = HQ // HK
    assert Ntot == (HQ + 2 * HK) * d_head
    qb = _pick_tile(T, q_block, 128)
    kb = _pick_tile(T, kv_block, 128)
    assert T % qb == 0 and T % kb == 0
    nq, nkv = T // qb, T // kb
    has_bias = bias is not None
    assert not (causal and has_bias)

    kernel = functools.partial(
        _flash_kernel, q_block=qb, kv_block=kb, h=h, d_head=d_head,
        causal=causal, has_bias=has_bias)

    # Column-block offsets into the single fused [q | k | v] array (all heads
    # are D = 128-wide, lane-dense); the same array is passed three times with
    # different BlockSpecs so no wrapper slices/copies are needed.
    def q_map(b, g, qi, kv):
        return (b, qi, g)                          # blocks of h*D q columns

    if causal:
        def _clamp(qi, kv):
            return jnp.minimum(kv, ((qi + 1) * qb - 1) // kb)

        def k_map(b, g, qi, kv):
            return (b, _clamp(qi, kv), HQ + g)     # blocks of D k columns

        def v_map(b, g, qi, kv):
            return (b, _clamp(qi, kv), HQ + HK + g)
    else:
        def k_map(b, g, qi, kv):
            return (b, kv, HQ + g)

        def v_map(b, g, qi, kv):
            return (b, kv, HQ + HK + g)

    in_specs = [
        pl.BlockSpec((None, qb, h * d_head), q_map),
        pl.BlockSpec((None, kb, d_head), k_map),
        pl.BlockSpec((None, kb, d_head), v_map),
    ]
    args = [qkv_r, qkv_r, qkv_r]
    if has_bias:
        in_specs.append(pl.BlockSpec((qb, kb), lambda b, g, qi, kv: (qi, kv)))
        args.append(bias)

    flops = 4 * B * HQ * T * T * d_head
    transc = B * HQ * T * T
    if causal:
        flops //= 2
        transc //= 2

    return pl.pallas_call(
        kernel,
        out_shape=jax.ShapeDtypeStruct((B, T, HQ * d_head), jnp.bfloat16),
        grid=(B, HK, nq, nkv),
        in_specs=in_specs,
        out_specs=pl.BlockSpec((None, qb, h * d_head),
                               lambda b, g, qi, kv: (b, qi, g)),
        scratch_shapes=[
            pltpu.VMEM((h, qb, 1), jnp.float32),        # running max
            pltpu.VMEM((h, qb, 1), jnp.float32),        # running denominator
            pltpu.VMEM((h, qb, d_head), jnp.float32),   # output accumulator
        ],
        compiler_params=pltpu.CompilerParams(
            dimension_semantics=("parallel", "parallel", "parallel", "arbitrary"),
            vmem_limit_bytes=_vmem_limit()),
        cost_estimate=pl.CostEstimate(
            flops=flops, transcendentals=transc,
            bytes_accessed=2 * B * T * Ntot * nq + 2 * B * T * HQ * d_head),
    )(*args)


# --------------------------------------------------------------------------
# Module wrapper (parameter setup + reshape glue in plain JAX; no transposes)
# --------------------------------------------------------------------------
class MultiHeadAttentionBlockPallas:
    def __init__(self, dim, causal=True, num_heads=8, num_q_heads=None,
                 k_dim_head=128, v_dim_head=128, rope_seq_len=8192,
                 rope_theta=10000.0, q_block=256, kv_block=256,
                 mm_tiles=(512, 512, 512), key=None):
        self.dim = dim
        self.num_heads = num_heads
        self.num_q_heads = num_q_heads or num_heads
        assert (self.num_q_heads % self.num_heads == 0
                and self.num_q_heads >= self.num_heads)
        self.k_dim_head = k_dim_head
        self.v_dim_head = v_dim_head
        self.causal = causal                 # kept for parity; forward matches ref
        self.rope_half = dim // 2            # RoPE(dim): angle vector length
        self.rope_theta = rope_theta
        self.rope_cached_len = rope_seq_len
        self.q_block = q_block
        self.kv_block = kv_block
        self.mm_tiles = mm_tiles
        # Reference RoPE plumbing only works when head dims == dim // 2:
        assert self.k_dim_head == self.v_dim_head == self.rope_half, \
            "reference RoPE plumbing requires k_dim_head == v_dim_head == dim // 2"
        assert self.k_dim_head % 128 == 0, \
            "head dim must be a multiple of 128 (TPU lane width)"

        v_dim = v_dim_head * self.num_heads
        k_dim = k_dim_head * self.num_heads
        q_dim = k_dim_head * self.num_q_heads

        keys = jax.random.split(key, 4)

        def linear_w(k, in_f, out_f):
            bound = 1.0 / math.sqrt(in_f)    # nn.Linear default init
            # stored pre-transposed as (in, out) so no .T per forward
            return jax.random.uniform(k, (in_f, out_f), jnp.float32, -bound, bound)

        self.w_q = linear_w(keys[0], dim, q_dim)
        self.w_k = linear_w(keys[1], dim, k_dim)
        self.w_v = linear_w(keys[2], dim, v_dim)
        self.w_o = linear_w(keys[3], q_dim, dim)

        # fused [Wq/sqrt(Dk) | Wk | Wv]; the q scale commutes with RoPE (linear)
        self.w_qkv = jnp.concatenate(
            [self.w_q / math.sqrt(self.k_dim_head), self.w_k, self.w_v],
            axis=1).astype(jnp.bfloat16)

    def _rope_tables(self, T):
        half = self.rope_half
        assert T <= self.rope_cached_len
        # TODO(synk): cache-regrow path (seq_len > cached) not needed at these shapes.
        inv = self.rope_theta ** (-(jnp.arange(half, dtype=jnp.float32) / half))
        pos = jnp.arange(self.rope_cached_len - T, self.rope_cached_len,
                         dtype=jnp.float32)      # last T rows of cached table
        ang = pos[:, None] * inv[None, :]        # (T, half)
        cos, sin = jnp.cos(ang), jnp.sin(ang)
        sign = jnp.concatenate([-jnp.ones((half // 2,), jnp.float32),
                                jnp.ones((half - half // 2,), jnp.float32)])
        return cos, sin, sin * sign[None, :]     # cos, sin, sign-folded sin

    def __call__(self, q, k, v, mask=None, *, causal_mask=False):
        """causal_mask=True generates the causal mask in-kernel (no HBM bias);
        otherwise an explicit (T, T) keep-mask may be passed as in the ref."""
        B, T, _ = q.shape
        assert q.shape[-1] == k.shape[-1] == self.dim and v.shape[-1] == self.dim
        assert q.shape == k.shape == v.shape
        assert T % 128 == 0 or T <= 256, "pad T to a multiple of 128"
        HK, HQ = self.num_heads, self.num_q_heads
        D = self.k_dim_head
        n_tot = (HQ + 2 * HK) * D

        if (q is k) and (k is v):
            # self-attention (the Grok case): one fused QKV projection
            qkv_p = pallas_matmul(q.reshape(B * T, self.dim), self.w_qkv,
                                  jnp.bfloat16, self.mm_tiles)
        else:
            # TODO(synk): cross-attention path uses three projections + a concat.
            q_p = pallas_matmul(q.reshape(B * T, self.dim),
                                self.w_qkv[:, :HQ * D], jnp.bfloat16, self.mm_tiles)
            k_p = pallas_matmul(k.reshape(B * T, self.dim),
                                self.w_qkv[:, HQ * D:(HQ + HK) * D],
                                jnp.bfloat16, self.mm_tiles)
            v_p = pallas_matmul(v.reshape(B * T, self.dim),
                                self.w_qkv[:, (HQ + HK) * D:],
                                jnp.bfloat16, self.mm_tiles)
            qkv_p = jnp.concatenate([q_p, k_p, v_p], axis=-1)

        qkv_p = qkv_p.reshape(B, T, n_tot)

        # RoPE applied exactly once per element (q already carries 1/sqrt(Dk)).
        # TODO(synk): could be fused into the projection-matmul epilogue to save
        # one HBM round-trip of the QKV activations.
        cos, _sin, sin_signed = self._rope_tables(T)
        qkv_r = pallas_rope(qkv_p, cos.astype(jnp.bfloat16),
                            sin_signed.astype(jnp.bfloat16), head_dim=D)

        if causal_mask:
            assert mask is None, "causal_mask=True generates the mask in-kernel"
            bias = None
        elif mask is not None:
            assert mask.shape == (T, T)
            bias = jnp.where(mask.astype(bool), 0.0, _MASK_VALUE
                             ).astype(jnp.bfloat16)
        else:
            bias = None

        vals = pallas_flash_attention(
            qkv_r, bias, num_heads=HK, num_q_heads=HQ, d_head=D,
            causal=causal_mask, q_block=self.q_block, kv_block=self.kv_block)

        out = pallas_matmul(vals.reshape(B * T, HQ * D), self.w_o,
                            jnp.float32, self.mm_tiles)
        return out.reshape(B, T, self.dim)


# --------------------------------------------------------------------------
# Pure-JAX f32 reference (same math, no Pallas) for correctness checking
# --------------------------------------------------------------------------
def _rope_rotate_half(x):
    d = x.shape[-1] // 2
    return jnp.concatenate([-x[..., d:], x[..., :d]], axis=-1)


def reference_forward(mod, q, k, v, mask=None):
    B, T, _ = q.shape
    HK, HQ = mod.num_heads, mod.num_q_heads
    h = HQ // HK
    Dk, Dv = mod.k_dim_head, mod.v_dim_head

    q_p = q.reshape(B * T, mod.dim) @ mod.w_q
    k_p = k.reshape(B * T, mod.dim) @ mod.w_k
    v_p = v.reshape(B * T, mod.dim) @ mod.w_v
    q_i = (q_p.reshape(B, T, HQ, Dk).transpose(0, 2, 1, 3)
           .reshape(B, HK, h, T, Dk))
    k_i = k_p.reshape(B, T, HK, Dk).transpose(0, 2, 1, 3)
    v_i = v_p.reshape(B, T, HK, Dv).transpose(0, 2, 1, 3)

    cos, sin, _ = mod._rope_tables(T)
    rope = lambda x: x * cos + _rope_rotate_half(x) * sin
    q_i, k_i, v_i = rope(q_i), rope(k_i), rope(v_i)

    s = jnp.einsum('bghid,bgjd->bghij', q_i, k_i) / math.sqrt(Dk)
    if mask is not None:
        s = jnp.where(mask.astype(bool)[None, None, None], s,
                      -jnp.finfo(s.dtype).max)
    p = jax.nn.softmax(s, axis=-1)
    vals = jnp.einsum('bghij,bgjv->bghiv', p, v_i)
    vals = vals.transpose(0, 3, 1, 2, 4).reshape(B, T, HQ * Dv)
    out = vals.reshape(B * T, -1) @ mod.w_o
    return out.reshape(B, T, mod.dim)


if __name__ == "__main__":
    key = jax.random.PRNGKey(0)
    k_params, k_x = jax.random.split(key, 2)

    # Small test config with head_dim = 128 (lane-dense, as in real Grok),
    # GQA (HQ=4, HK=2 -> h=2), and T = 512 so the flash kernel exercises
    # 2 query tiles x 2 KV tiles including the causal-skip path.
    dim, num_heads, num_q_heads = 256, 2, 4
    head_dim = dim // 2            # 128; required by the reference RoPE plumbing
    B, T = 2, 512

    mod = MultiHeadAttentionBlockPallas(
        dim, causal=True, num_heads=num_heads, num_q_heads=num_q_heads,
        k_dim_head=head_dim, v_dim_head=head_dim,
        q_block=256, kv_block=256, key=k_params)

    x = jax.random.normal(k_x, (B, T, dim), jnp.float32)
    mask = jnp.tril(jnp.ones((T, T), dtype=bool))   # True = keep (causal)

    # 1) in-kernel causal mask path (no HBM bias, kv-tile skipping)
    out_causal = jax.block_until_ready(mod(x, x, x, causal_mask=True))
    assert out_causal.shape == (B, T, dim)

    # 2) arbitrary-mask (bf16 additive bias) path with the same causal mask
    out_bias = jax.block_until_ready(mod(x, x, x, mask=mask))
    assert out_bias.shape == (B, T, dim)

    ref = reference_forward(mod, x, x, x, mask)
    # bf16 MXU operands + bf16 RoPE tables -> modest tolerance.
    np.testing.assert_allclose(np.asarray(out_causal), np.asarray(ref),
                               rtol=5e-2, atol=5e-2)
    np.testing.assert_allclose(np.asarray(out_bias), np.asarray(ref),
                               rtol=5e-2, atol=5e-2)
    print("KERNEL_OK")
</pallas_src>

<mosaic_0001>
module attributes {stable_mosaic.version = 11 : i64} {
  func.func @_matmul_kernel(%arg0: i32, %arg1: i32, %arg2: i32, %arg3: memref<512x256xbf16, #tpu.memory_space<vmem>>, %arg4: memref<256x512xbf16, #tpu.memory_space<vmem>>, %arg5: memref<512x512xbf16, #tpu.memory_space<vmem>>, %arg6: memref<512x512xf32, #tpu.memory_space<vmem>>) attributes {dimension_semantics = [#tpu.dimension_semantics<parallel>, #tpu.dimension_semantics<parallel>, #tpu.dimension_semantics<arbitrary>], iteration_bounds = array<i64: 2, 2, 1>, scalar_prefetch = 0 : i64, scratch_operands = 1 : i64, tpu.core_type = #tpu.core_type<tc>, window_params = [{transform_indices = @transform_0, window_bounds = array<i64: 512, 256>}, {transform_indices = @transform_1, window_bounds = array<i64: 256, 512>}, {transform_indices = @transform_2, window_bounds = array<i64: 512, 512>}]} {
    %c0_i32 = arith.constant 0 : i32
    %0 = arith.cmpi eq, %arg2, %c0_i32 : i32
    %1 = arith.extui %0 : i1 to i32
    %c0_i32_0 = arith.constant 0 : i32
    %2 = arith.cmpi ne, %1, %c0_i32_0 : i32
    scf.if %2 {
      %cst_10 = arith.constant 0.000000e+00 : f32
      %12 = vector.broadcast %cst_10 : f32 to vector<512x512xf32>
      %c0_11 = arith.constant 0 : index
      %c0_12 = arith.constant 0 : index
      %13 = vector.load %arg6[%c0_11, %c0_12] : memref<512x512xf32, #tpu.memory_space<vmem>>, vector<512x512xf32>
      tpu.vector_store %arg6[%c0_11, %c0_12], %12 {strides = array<i32>} : memref<512x512xf32, #tpu.memory_space<vmem>>, vector<512x512xf32>,
    } else {
    }
    %c0 = arith.constant 0 : index
    %c0_1 = arith.constant 0 : index
    %3 = vector.load %arg6[%c0, %c0_1] : memref<512x512xf32, #tpu.memory_space<vmem>>, vector<512x512xf32>
    %c0_2 = arith.constant 0 : index
    %c0_3 = arith.constant 0 : index
    %4 = vector.load %arg3[%c0_2, %c0_3] : memref<512x256xbf16, #tpu.memory_space<vmem>>, vector<512x256xbf16>
    %c0_4 = arith.constant 0 : index
    %c0_5 = arith.constant 0 : index
    %5 = vector.load %arg4[%c0_4, %c0_5] : memref<256x512xbf16, #tpu.memory_space<vmem>>, vector<256x512xbf16>
    %cst = arith.constant dense<0.000000e+00> : vector<512x512xf32>
    %6 = tpu.matmul %4, %5, %cst {dimension_numbers = #tpu.dot_dimension_numbers<[1], [0], [0], [1], [0, 0, 1, 1], [], []>} : vector<512x256xbf16>, vector<256x512xbf16>, vector<512x512xf32> -> vector<512x512xf32>
    %7 = arith.addf %3, %6 : vector<512x512xf32>
    %c0_6 = arith.constant 0 : index
    %c0_7 = arith.constant 0 : index
    %8 = vector.load %arg6[%c0_6, %c0_7] : memref<512x512xf32, #tpu.memory_space<vmem>>, vector<512x512xf32>
    tpu.vector_store %arg6[%c0_6, %c0_7], %7 {strides = array<i32>} : memref<512x512xf32, #tpu.memory_space<vmem>>, vector<512x512xf32>,
    %c0_i32_8 = arith.constant 0 : i32
    %9 = arith.cmpi eq, %arg2, %c0_i32_8 : i32
    %10 = arith.extui %9 : i1 to i32
    %c0_i32_9 = arith.constant 0 : i32
    %11 = arith.cmpi ne, %10, %c0_i32_9 : i32
    scf.if %11 {
      %c0_10 = arith.constant 0 : index
      %c0_11 = arith.constant 0 : index
      %12 = vector.load %arg6[%c0_10, %c0_11] : memref<512x512xf32, #tpu.memory_space<vmem>>, vector<512x512xf32>
      %13 = arith.truncf %12 : vector<512x512xf32> to vector<512x512xbf16>
      %c0_12 = arith.constant 0 : index
      %c0_13 = arith.constant 0 : index
      %14 = vector.load %arg5[%c0_12, %c0_13] : memref<512x512xbf16, #tpu.memory_space<vmem>>, vector<512x512xbf16>
      tpu.vector_store %arg5[%c0_12, %c0_13], %13 {strides = array<i32>} : memref<512x512xbf16, #tpu.memory_space<vmem>>, vector<512x512xbf16>,
    } else {
    }
    return
  }
  func.func @transform_0(%arg0: i32, %arg1: i32, %arg2: i32) -> (i32, i32) {
    %c0_i32 = arith.constant 0 : i32
    return %arg0, %arg2 : i32, i32
  }
  func.func @transform_1(%arg0: i32, %arg1: i32, %arg2: i32) -> (i32, i32) {
    %c0_i32 = arith.constant 0 : i32
    return %arg2, %arg1 : i32, i32
  }
  func.func @transform_2(%arg0: i32, %arg1: i32, %arg2: i32) -> (i32, i32) {
    %c0_i32 = arith.constant 0 : i32
    return %arg0, %arg1 : i32, i32
  }
}

</mosaic_0001>

<llo_original>
// kernel: tpu_custom_call.1
$region0: #{tpu_custom_call.1}
  #allocation0 [shape = 'u32[]', space=smem, size = 0x4, offset = 0x4, fixed_abs, tag = 'smem constant byte address 0x4 - core index']
  #allocation1 [shape = 'u32[144,128]{1,0:T(1,128)}', space=vmem, size = 0x12000, scoped, tag = 'internal scratch']
  #allocation2 [shape = 'f32[512,512]{1,0:T(8,128)}', space=vmem, size = 0x100000, scoped, tag = 'scratch operand']
  %s0 = inlined_call_operand.hbm [shape: bf16[1024,256], index: 0, kind: input, shape index: {}]
  %s1 = inlined_call_operand.hbm [shape: bf16[256,1024], index: 1, kind: input, shape index: {}]
  %s2 = inlined_call_operand.hbm [shape: bf16[1024,1024], index: 2, kind: output, shape index: {}]
  %s3 = sld [smem:[#allocation0]]
  $region57: #{tpu_custom_call.1} parent=0
    _
  %s5 = ssub.s32 1, %s3
  %s6 = scalar_select 0, %s5, %s3
  $region1: #{tpu_custom_call.1} parent=0
    #allocation3 [shape = 'u8[524288]{0}', space=vmem, size = 0x80000, scoped, tag = 'input window, operand 0']
    #allocation4 [shape = 's32[2]{0}', space=sflag, size = 0x8, scoped, tag = 'scoped memory for tpu_custom_call.1']
    #allocation5 [shape = 's32[2]{0}', space=sflag, size = 0x8, scoped, tag = 'scoped memory for tpu_custom_call.1']
    #allocation6 [shape = 'u8[524288]{0}', space=vmem, size = 0x80000, scoped, tag = 'input window, operand 1']
    #allocation7 [shape = 's32[2]{0}', space=sflag, size = 0x8, scoped, tag = 'scoped memory for tpu_custom_call.1']
    #allocation8 [shape = 'u8[1048576]{0}', space=vmem, size = 0x100000, scoped, tag = 'output window, operand 0']
    %7 = vsyncpa [#allocation4], 0
    %s8 = scalar_lea.sflag [#allocation4], 1
    %9 = vsyncpa %s8, 0
    %10 = vsyncpa [#allocation7], 0
    %s11 = scalar_lea.sflag [#allocation7], 1
    %12 = vsyncpa %s11, 0
    %13 = vsyncpa [#allocation5], 0
    %s14 = scalar_lea.sflag [#allocation5], 1
    %15 = vsyncpa %s14, 0
    loop: start=0, step=1, limit=6
    $region2: #{tpu_custom_call.1} parent=1 // loop_pre_header
      _
    $region3: #{tpu_custom_call.1} parent=1 // loop_header
      %s17 = sphi 0, %s21
      %p18 = scmp.ge.s32.totalorder %s17, 6
      %s24 = sphi 0, %s43
      %s25 = sphi 0, %s39
      %s26 = sphi 0, %s35
      %s27 = sphi 0, %s24
      %s28 = sphi 0, %s25
      %s29 = sphi 0, %s26
      %s30 = sphi 0, %s27
      %s31 = sphi 0, %s28
      %s32 = sphi 0, %s29
      %s48 = sphi 0, %s50
      %s51 = sphi 0, %s48
      %s52 = sphi 0, %s51
      %s68 = sphi 0, %s52
      %s76 = sphi 0, %s78
      %s79 = sphi 0, %s76
      %s80 = sphi 0, %s79
      %s96 = sphi 0, %s80
      %s104 = sphi 0, %s106
      %s107 = sphi 0, %s104
      %s108 = sphi 0, %s107
      %s124 = sphi 0, %s108
    $region4: #{tpu_custom_call.1} parent=1 // loop_header_branch
      %20 = sbr.rel (%p18) target = $region8
    $region5: #{tpu_custom_call.1} parent=1 // loop_body
      %s22 = ssub.s32 %s17, 1
      %s23 = ssub.s32 %s17, 2
      %s33 = sadd.s32 1, %s26
      %p34 = scmp.ge.s32.totalorder %s33, 1
      %s35 = scalar_select %p34, 0, %s33
      %s36 = sadd.s32 1, %s25
      %s37 = scalar_select %p34, %s36, %s25
      %p38 = scmp.ge.s32.totalorder %s37, 2
      %s39 = scalar_select %p38, 0, %s37
      %s40 = sadd.s32 1, %s24
      %s41 = scalar_select %p38, %s40, %s24
      %p42 = scmp.ge.s32.totalorder %s41, 2
      %s43 = scalar_select %p42, 0, %s41
      %s44 = ssub.s32 %s24, %s43
      %s45 = ssub.s32 %s26, %s35
      %s46 = sor.u32 %s44, %s45
      %p47 = scmp.eq.s32.totalorder %s46, 0
      %s49 = sadd.s32 %s48, 1
      %s50 = scalar_select %p47, %s48, %s49
      %p53 = pneg %p47
      %p54 = scmp.eq.s32.totalorder %s17, 3
      %p55 = por %p53, %p54
      %p56 = scmp.ne.s32.totalorder %s48, %s51
      %p57 = scmp.eq.s32.totalorder %s17, 0
      %p58 = por %p56, %p57
      %p59 = scmp.ne.s32.totalorder %s48, %s51
      %p60 = scmp.eq.s32.totalorder %s22, 3
      %p61 = por %p59, %p60
      %p62 = scmp.ne.s32.totalorder %s51, %s52
      %p63 = scmp.eq.s32.totalorder %s22, 0
      %p64 = por %p62, %p63
      %p65 = scmp.ne.s32.totalorder %s51, %s52
      %p66 = scmp.eq.s32.totalorder %s23, 3
      %p67 = por %p65, %p66
      %p69 = scmp.ne.s32.totalorder %s52, %s68
      %p70 = scmp.eq.s32.totalorder %s23, 0
      %p71 = por %p69, %p70
      %s72 = ssub.s32 %s26, %s35
      %s73 = ssub.s32 %s25, %s39
      %s74 = sor.u32 %s72, %s73
      %p75 = scmp.eq.s32.totalorder %s74, 0
      %s77 = sadd.s32 %s76, 1
      %s78 = scalar_select %p75, %s76, %s77
      %p81 = pneg %p75
      %p82 = scmp.eq.s32.totalorder %s17, 3
      %p83 = por %p81, %p82
      %p84 = scmp.ne.s32.totalorder %s76, %s79
      %p85 = scmp.eq.s32.totalorder %s17, 0
      %p86 = por %p84, %p85
      %p87 = scmp.ne.s32.totalorder %s76, %s79
      %p88 = scmp.eq.s32.totalorder %s22, 3
      %p89 = por %p87, %p88
      %p90 = scmp.ne.s32.totalorder %s79, %s80
      %p91 = scmp.eq.s32.totalorder %s22, 0
      %p92 = por %p90, %p91
      %p93 = scmp.ne.s32.totalorder %s79, %s80
      %p94 = scmp.eq.s32.totalorder %s23, 3
      %p95 = por %p93, %p94
      %p97 = scmp.ne.s32.totalorder %s80, %s96
      %p98 = scmp.eq.s32.totalorder %s23, 0
      %p99 = por %p97, %p98
      %s100 = ssub.s32 %s24, %s43
      %s101 = ssub.s32 %s25, %s39
      %s102 = sor.u32 %s100, %s101
      %p103 = scmp.eq.s32.totalorder %s102, 0
      %s105 = sadd.s32 %s104, 1
      %s106 = scalar_select %p103, %s104, %s105
      %p109 = pneg %p103
      %p110 = scmp.eq.s32.totalorder %s17, 3
      %p111 = por %p109, %p110
      %p112 = scmp.ne.s32.totalorder %s104, %s107
      %p113 = scmp.eq.s32.totalorder %s17, 0
      %p114 = por %p112, %p113
      %p115 = scmp.ne.s32.totalorder %s104, %s107
      %p116 = scmp.eq.s32.totalorder %s22, 3
      %p117 = por %p115, %p116
      %p118 = scmp.ne.s32.totalorder %s107, %s108
      %p119 = scmp.eq.s32.totalorder %s22, 0
      %p120 = por %p118, %p119
      %p121 = scmp.ne.s32.totalorder %s107, %s108
      %p122 = scmp.eq.s32.totalorder %s23, 3
      %p123 = por %p121, %p122
      %p125 = scmp.ne.s32.totalorder %s108, %s124
      %p126 = scmp.eq.s32.totalorder %s23, 0
      %p127 = por %p125, %p126
      %p128 = scmp.le.s32.totalorder 1, %s17
      %p129 = scmp.lt.s32.totalorder %s17, 5
      %p130 = pnand %p128, %p129
      %p131 = pneg %p130
      // Predicated region
      $region9: #{tpu_custom_call.1} parent=5 // pred_check
        _
      $region10: #{tpu_custom_call.1} parent=5 // pred_check_branch
        %133 = sbr.rel (%p130) target = $region12
      $region11: #{tpu_custom_call.1} parent=5 // pred_region
        %s134 = ssub.s32 %s17, 1
      $region12: #{tpu_custom_call.1} parent=5 // pred_fallthru
        _
      %p135 = scmp.lt.s32.totalorder %s17, 4
      // Predicated region
      $region13: #{tpu_custom_call.1} parent=5 // pred_check
        %p136 = pneg %p135
      $region14: #{tpu_custom_call.1} parent=5 // pred_check_branch
        %138 = sbr.rel (%p136) target = $region16
      $region15: #{tpu_custom_call.1} parent=5 // pred_region
        // Predicated region
        $region17: #{tpu_custom_call.1} parent=15 // pred_check
          %p139 = pneg %p58
        $region18: #{tpu_custom_call.1} parent=15 // pred_check_branch
          %141 = sbr.rel (%p139) target = $region20
        $region19: #{tpu_custom_call.1} parent=15 // pred_region
          %s142 = sand.u32 %s48, 1
          %s143 = scalar_lea.sflag [#allocation4], %s142
          %s144 = sand.u32 %s48, 1
          %s145 = smul.addr %s144, 512
          %s146 = scalar_lea.vmem [#allocation3], %s145
          %s147 = smul.u32 64, %s24
          %s148 = smul.u32 2, %s26
          %s150 = ssub.s32 8192, 8192
          %151 = vsyncadd %s143, %s150
          %s152 = smul.addr %s147, 2
          %s153 = sadd.s32 %s148, %s152
          %s154 = smul.addr %s153, 64
          %s155 = scalar_lea.hbm %s0, %s154
          %s156 = sshll.u32 %s146, 4
          %s157 = int_to_ptr.vmem [resolvable:$true] %s156
          %162 = dma.hbm_to_vmem [thread:$0]  %s155, 8192, %s157, %s143, 128, 128, 8
        $region20: #{tpu_custom_call.1} parent=15 // pred_fallthru
          _
        // Predicated region
        $region21: #{tpu_custom_call.1} parent=15 // pred_check
          %p163 = pneg %p86
        $region22: #{tpu_custom_call.1} parent=15 // pred_check_branch
          %165 = sbr.rel (%p163) target = $region24
        $region23: #{tpu_custom_call.1} parent=15 // pred_region
          %s166 = sand.u32 %s76, 1
          %s167 = scalar_lea.sflag [#allocation7], %s166
          %s168 = sand.u32 %s76, 1
          %s169 = smul.addr %s168, 512
          %s170 = scalar_lea.vmem [#allocation6], %s169
          %s171 = smul.u32 32, %s26
          %s172 = smul.u32 4, %s25
          %s174 = ssub.s32 8192, 8192
          %175 = vsyncadd %s167, %s174
          %s176 = smul.addr %s171, 8
          %s177 = sadd.s32 %s172, %s176
          %s178 = smul.addr %s177, 64
          %s179 = scalar_lea.hbm %s1, %s178
          %s180 = sshll.u32 %s170, 4
          %s181 = int_to_ptr.vmem [resolvable:$true] %s180
          %186 = dma.hbm_to_vmem [thread:$0]  %s179, 8192, %s181, %s167, 512, 256, 16
        $region24: #{tpu_custom_call.1} parent=15 // pred_fallthru
          _
      $region16: #{tpu_custom_call.1} parent=5 // pred_fallthru
        _
      %p187 = scmp.le.s32.totalorder 1, %s17
      %p188 = scmp.lt.s32.totalorder %s17, 5
      %p189 = pnand %p187, %p188
      %p190 = pneg %p189
      // Predicated region
      $region25: #{tpu_custom_call.1} parent=5 // pred_check
        _
      $region26: #{tpu_custom_call.1} parent=5 // pred_check_branch
        %192 = sbr.rel (%p189) target = $region28
      $region27: #{tpu_custom_call.1} parent=5 // pred_region
        %s193 = ssub.s32 %s17, 1
        %s194 = sand.u32 %s51, 1
        %s195 = scalar_lea.sflag [#allocation4], %s194
        %s196 = sand.u32 %s51, 1
        %s197 = smul.addr %s196, 512
        %s198 = scalar_lea.vmem [#allocation3], %s197
        // Predicated region
        $region29: #{tpu_custom_call.1} parent=27 // pred_check
          %p199 = pneg %p64
        $region30: #{tpu_custom_call.1} parent=27 // pred_check_branch
          %201 = sbr.rel (%p199) target = $region32
        $region31: #{tpu_custom_call.1} parent=27 // pred_region
          %202 = dma.done %s195, 8192
        $region32: #{tpu_custom_call.1} parent=27 // pred_fallthru
          _
        %s203 = sand.u32 %s79, 1
        %s204 = scalar_lea.sflag [#allocation7], %s203
        %s205 = sand.u32 %s79, 1
        %s206 = smul.addr %s205, 512
        %s207 = scalar_lea.vmem [#allocation6], %s206
        // Predicated region
        $region33: #{tpu_custom_call.1} parent=27 // pred_check
          %p208 = pneg %p92
        $region34: #{tpu_custom_call.1} parent=27 // pred_check_branch
          %210 = sbr.rel (%p208) target = $region36
        $region35: #{tpu_custom_call.1} parent=27 // pred_region
          %211 = dma.done %s204, 8192
        $region36: #{tpu_custom_call.1} parent=27 // pred_fallthru
          _
        %s212 = sand.u32 %s51, 1
        %s213 = scalar_lea.sflag [#allocation4], %s212
        %s214 = sand.u32 %s51, 1
        %s215 = smul.addr %s214, 512
        %s216 = scalar_lea.vmem [#allocation3], %s215
        %p217 = pneg %p64
        %p218 = pneg %p61
        %s219 = sand.u32 %s79, 1
        %s220 = scalar_lea.sflag [#allocation7], %s219
        %s221 = sand.u32 %s79, 1
        %s222 = smul.addr %s221, 512
        %s223 = scalar_lea.vmem [#allocation6], %s222
        %p224 = pneg %p92
        %p225 = pneg %p89
        %p226 = pneg %p120
        %p227 = pneg %p117
        %s228 = sand.u32 %s107, 1
        %s229 = scalar_lea.sflag [#allocation5], %s228
        %s230 = sand.u32 %s107, 1
        %s231 = smul.addr %s230, 1024
        %s232 = scalar_lea.vmem [#allocation8], %s231
        %s233 = smul.u32 64, %s27
        %s234 = smul.u32 2, %s29
        %s235 = smul.u32 32, %s29
        %s236 = smul.u32 4, %s28
        %s237 = smul.u32 64, %s27
        %s238 = smul.u32 4, %s28
        %p239 = scmp.eq.s32.totalorder %s29, 0
        // Predicated region
        $region37: #{tpu_custom_call.1} parent=27 // pred_check
          %p240 = pneg %p239
        $region38: #{tpu_custom_call.1} parent=27 // pred_check_branch
          %242 = sbr.rel (%p240) target = $region40
        $region39: #{tpu_custom_call.1} parent=27 // pred_region
          %243 = vst [vmem:[#allocation2] sm:$0xff] 0.0
          %244 = vst [vmem:[#allocation2 + $0x8] sm:$0xff] 0.0
          %245 = vst [vmem:[#allocation2 + $0x10] sm:$0xff] 0.0
          %246 = vst [vmem:[#allocation2 + $0x18] sm:$0xff] 0.0
          %247 = vst [vmem:[#allocation2 + $0x20] sm:$0xff] 0.0
          %248 = vst [vmem:[#allocation2 + $0x28] sm:$0xff] 0.0
          %249 = vst [vmem:[#allocation2 + $0x30] sm:$0xff] 0.0
          %250 = vst [vmem:[#allocation2 + $0x38] sm:$0xff] 0.0
          %251 = vst [vmem:[#allocation2 + $0x40] sm:$0xff] 0.0
          %252 = vst [vmem:[#allocation2 + $0x48] sm:$0xff] 0.0
          %253 = vst [vmem:[#allocation2 + $0x50] sm:$0xff] 0.0
          %254 = vst [vmem:[#allocation2 + $0x58] sm:$0xff] 0.0
          %255 = vst [vmem:[#allocation2 + $0x60] sm:$0xff] 0.0
          %256 = vst [vmem:[#allocation2 + $0x68] sm:$0xff] 0.0
          %257 = vst [vmem:[#allocation2 + $0x70] sm:$0xff] 0.0
          %258 = vst [vmem:[#allocation2 + $0x78] sm:$0xff] 0.0
          %259 = vst [vmem:[#allocation2 + $0x80] sm:$0xff] 0.0
          %260 = vst [vmem:[#allocation2 + $0x88] sm:$0xff] 0.0
          %261 = vst [vmem:[#allocation2 + $0x90] sm:$0xff] 0.0
          %262 = vst [vmem:[#allocation2 + $0x98] sm:$0xff] 0.0
          %263 = vst [vmem:[#allocation2 + $0xa0] sm:$0xff] 0.0
          %264 = vst [vmem:[#allocation2 + $0xa8] sm:$0xff] 0.0
          %265 = vst [vmem:[#allocation2 + $0xb0] sm:$0xff] 0.0
          %266 = vst [vmem:[#allocation2 + $0xb8] sm:$0xff] 0.0
          %267 = vst [vmem:[#allocation2 + $0xc0] sm:$0xff] 0.0
          %268 = vst [vmem:[#allocation2 + $0xc8] sm:$0xff] 0.0
          %269 = vst [vmem:[#allocation2 + $0xd0] sm:$0xff] 0.0
          %270 = vst [vmem:[#allocation2 + $0xd8] sm:$0xff] 0.0
          %271 = vst [vmem:[#allocation2 + $0xe0] sm:$0xff] 0.0
          %272 = vst [vmem:[#allocation2 + $0xe8] sm:$0xff] 0.0
          %273 = vst [vmem:[#allocation2 + $0xf0] sm:$0xff] 0.0
          %274 = vst [vmem:[#allocation2 + $0xf8] sm:$0xff] 0.0
          %275 = vst [vmem:[#allocation2 + $0x100] sm:$0xff] 0.0
          %276 = vst [vmem:[#allocation2 + $0x108] sm:$0xff] 0.0
          %277 = vst [vmem:[#allocation2 + $0x110] sm:$0xff] 0.0
          %278 = vst [vmem:[#allocation2 + $0x118] sm:$0xff] 0.0
          %279 = vst [vmem:[#allocation2 + $0x120] sm:$0xff] 0.0
          %280 = vst [vmem:[#allocation2 + $0x128] sm:$0xff] 0.0
          %281 = vst [vmem:[#allocation2 + $0x130] sm:$0xff] 0.0
          %282 = vst [vmem:[#allocation2 + $0x138] sm:$0xff] 0.0
          %283 = vst [vmem:[#allocation2 + $0x140] sm:$0xff] 0.0
          %284 = vst [vmem:[#allocation2 + $0x148] sm:$0xff] 0.0
          %285 = vst [vmem:[#allocation2 + $0x150] sm:$0xff] 0.0
          %286 = vst [vmem:[#allocation2 + $0x158] sm:$0xff] 0.0
          %287 = vst [vmem:[#allocation2 + $0x160] sm:$0xff] 0.0
          %288 = vst [vmem:[#allocation2 + $0x168] sm:$0xff] 0.0
          %289 = vst [vmem:[#allocation2 + $0x170] sm:$0xff] 0.0
          %290 = vst [vmem:[#allocation2 + $0x178] sm:$0xff] 0.0
          %291 = vst [vmem:[#allocation2 + $0x180] sm:$0xff] 0.0
          %292 = vst [vmem:[#allocation2 + $0x188] sm:$0xff] 0.0
          %293 = vst [vmem:[#allocation2 + $0x190] sm:$0xff] 0.0
          %294 = vst [vmem:[#allocation2 + $0x198] sm:$0xff] 0.0
          %295 = vst [vmem:[#allocation2 + $0x1a0] sm:$0xff] 0.0
          %296 = vst [vmem:[#allocation2 + $0x1a8] sm:$0xff] 0.0
          %297 = vst [vmem:[#allocation2 + $0x1b0] sm:$0xff] 0.0
          %298 = vst [vmem:[#allocation2 + $0x1b8] sm:$0xff] 0.0
          %299 = vst [vmem:[#allocation2 + $0x1c0] sm:$0xff] 0.0
          %300 = vst [vmem:[#allocation2 + $0x1c8] sm:$0xff] 0.0
          %301 = vst [vmem:[#allocation2 + $0x1d0] sm:$0xff] 0.0
          %302 = vst [vmem:[#allocation2 + $0x1d8] sm:$0xff] 0.0
          %303 = vst [vmem:[#allocation2 + $0x1e0] sm:$0xff] 0.0
          %304 = vst [vmem:[#allocation2 + $0x1e8] sm:$0xff] 0.0
          %305 = vst [vmem:[#allocation2 + $0x1f0] sm:$0xff] 0.0
          %306 = vst [vmem:[#allocation2 + $0x1f8] sm:$0xff] 0.0
          %307 = vst [vmem:[#allocation2 + $0x200] sm:$0xff] 0.0
          %308 = vst [vmem:[#allocation2 + $0x208] sm:$0xff] 0.0
          %309 = vst [vmem:[#allocation2 + $0x210] sm:$0xff] 0.0
          %310 = vst [vmem:[#allocation2 + $0x218] sm:$0xff] 0.0
          %311 = vst [vmem:[#allocation2 + $0x220] sm:$0xff] 0.0
          %312 = vst [vmem:[#allocation2 + $0x228] sm:$0xff] 0.0
          %313 = vst [vmem:[#allocation2 + $0x230] sm:$0xff] 0.0
          %314 = vst [vmem:[#allocation2 + $0x238] sm:$0xff] 0.0
          %315 = vst [vmem:[#allocation2 + $0x240] sm:$0xff] 0.0
          %316 = vst [vmem:[#allocation2 + $0x248] sm:$0xff] 0.0
          %317 = vst [vmem:[#allocation2 + $0x250] sm:$0xff] 0.0
          %318 = vst [vmem:[#allocation2 + $0x258] sm:$0xff] 0.0
          %319 = vst [vmem:[#allocation2 + $0x260] sm:$0xff] 0.0
          %320 = vst [vmem:[#allocation2 + $0x268] sm:$0xff] 0.0
          %321 = vst [vmem:[#allocation2 + $0x270] sm:$0xff] 0.0
          %322 = vst [vmem:[#allocation2 + $0x278] sm:$0xff] 0.0
          %323 = vst [vmem:[#allocation2 + $0x280] sm:$0xff] 0.0
          %324 = vst [vmem:[#allocation2 + $0x288] sm:$0xff] 0.0
          %325 = vst [vmem:[#allocation2 + $0x290] sm:$0xff] 0.0
          %326 = vst [vmem:[#allocation2 + $0x298] sm:$0xff] 0.0
          %327 = vst [vmem:[#allocation2 + $0x2a0] sm:$0xff] 0.0
          %328 = vst [vmem:[#allocation2 + $0x2a8] sm:$0xff] 0.0
          %329 = vst [vmem:[#allocation2 + $0x2b0] sm:$0xff] 0.0
          %330 = vst [vmem:[#allocation2 + $0x2b8] sm:$0xff] 0.0
          %331 = vst [vmem:[#allocation2 + $0x2c0] sm:$0xff] 0.0
          %332 = vst [vmem:[#allocation2 + $0x2c8] sm:$0xff] 0.0
          %333 = vst [vmem:[#allocation2 + $0x2d0] sm:$0xff] 0.0
          %334 = vst [vmem:[#allocation2 + $0x2d8] sm:$0xff] 0.0
          %335 = vst [vmem:[#allocation2 + $0x2e0] sm:$0xff] 0.0
          %336 = vst [vmem:[#allocation2 + $0x2e8] sm:$0xff] 0.0
          %337 = vst [vmem:[#allocation2 + $0x2f0] sm:$0xff] 0.0
          %338 = vst [vmem:[#allocation2 + $0x2f8] sm:$0xff] 0.0
          %339 = vst [vmem:[#allocation2 + $0x300] sm:$0xff] 0.0
          %340 = vst [vmem:[#allocation2 + $0x308] sm:$0xff] 0.0
          %341 = vst [vmem:[#allocation2 + $0x310] sm:$0xff] 0.0
          %342 = vst [vmem:[#allocation2 + $0x318] sm:$0xff] 0.0
          %343 = vst [vmem:[#allocation2 + $0x320] sm:$0xff] 0.0
          %344 = vst [vmem:[#allocation2 + $0x328] sm:$0xff] 0.0
          %345 = vst [vmem:[#allocation2 + $0x330] sm:$0xff] 0.0
          %346 = vst [vmem:[#allocation2 + $0x338] sm:$0xff] 0.0
          %347 = vst [vmem:[#allocation2 + $0x340] sm:$0xff] 0.0
          %348 = vst [vmem:[#allocation2 + $0x348] sm:$0xff] 0.0
          %349 = vst [vmem:[#allocation2 + $0x350] sm:$0xff] 0.0
          %350 = vst [vmem:[#allocation2 + $0x358] sm:$0xff] 0.0
          %351 = vst [vmem:[#allocation2 + $0x360] sm:$0xff] 0.0
          %352 = vst [vmem:[#allocation2 + $0x368] sm:$0xff] 0.0
          %353 = vst [vmem:[#allocation2 + $0x370] sm:$0xff] 0.0
          %354 = vst [vmem:[#allocation2 + $0x378] sm:$0xff] 0.0
          %355 = vst [vmem:[#allocation2 + $0x380] sm:$0xff] 0.0
          %356 = vst [vmem:[#allocation2 + $0x388] sm:$0xff] 0.0
          %357 = vst [vmem:[#allocation2 + $0x390] sm:$0xff] 0.0
          %358 = vst [vmem:[#allocation2 + $0x398] sm:$0xff] 0.0
          %359 = vst [vmem:[#allocation2 + $0x3a0] sm:$0xff] 0.0
          %360 = vst [vmem:[#allocation2 + $0x3a8] sm:$0xff] 0.0
          %361 = vst [vmem:[#allocation2 + $0x3b0] sm:$0xff] 0.0
          %362 = vst [vmem:[#allocation2 + $0x3b8] sm:$0xff] 0.0
          %363 = vst [vmem:[#allocation2 + $0x3c0] sm:$0xff] 0.0
          %364 = vst [vmem:[#allocation2 + $0x3c8] sm:$0xff] 0.0
          %365 = vst [vmem:[#allocation2 + $0x3d0] sm:$0xff] 0.0
          %366 = vst [vmem:[#allocation2 + $0x3d8] sm:$0xff] 0.0
          %367 = vst [vmem:[#allocation2 + $0x3e0] sm:$0xff] 0.0
          %368 = vst [vmem:[#allocation2 + $0x3e8] sm:$0xff] 0.0
          %369 = vst [vmem:[#allocation2 + $0x3f0] sm:$0xff] 0.0
          %370 = vst [vmem:[#allocation2 + $0x3f8] sm:$0xff] 0.0
          %371 = vst [vmem:[#allocation2 + $0x400] sm:$0xff] 0.0
          %372 = vst [vmem:[#allocation2 + $0x408] sm:$0xff] 0.0
          %373 = vst [vmem:[#allocation2 + $0x410] sm:$0xff] 0.0
          %374 = vst [vmem:[#allocation2 + $0x418] sm:$0xff] 0.0
          %375 = vst [vmem:[#allocation2 + $0x420] sm:$0xff] 0.0
          %376 = vst [vmem:[#allocation2 + $0x428] sm:$0xff] 0.0
          %377 = vst [vmem:[#allocation2 + $0x430] sm:$0xff] 0.0
          %378 = vst [vmem:[#allocation2 + $0x438] sm:$0xff] 0.0
          %379 = vst [vmem:[#allocation2 + $0x440] sm:$0xff] 0.0
          %380 = vst [vmem:[#allocation2 + $0x448] sm:$0xff] 0.0
          %381 = vst [vmem:[#allocation2 + $0x450] sm:$0xff] 0.0
          %382 = vst [vmem:[#allocation2 + $0x458] sm:$0xff] 0.0
          %383 = vst [vmem:[#allocation2 + $0x460] sm:$0xff] 0.0
          %384 = vst [vmem:[#allocation2 + $0x468] sm:$0xff] 0.0
          %385 = vst [vmem:[#allocation2 + $0x470] sm:$0xff] 0.0
          %386 = vst [vmem:[#allocation2 + $0x478] sm:$0xff] 0.0
          %387 = vst [vmem:[#allocation2 + $0x480] sm:$0xff] 0.0
          %388 = vst [vmem:[#allocation2 + $0x488] sm:$0xff] 0.0
          %389 = vst [vmem:[#allocation2 + $0x490] sm:$0xff] 0.0
          %390 = vst [vmem:[#allocation2 + $0x498] sm:$0xff] 0.0
          %391 = vst [vmem:[#allocation2 + $0x4a0] sm:$0xff] 0.0
          %392 = vst [vmem:[#allocation2 + $0x4a8] sm:$0xff] 0.0
          %393 = vst [vmem:[#allocation2 + $0x4b0] sm:$0xff] 0.0
          %394 = vst [vmem:[#allocation2 + $0x4b8] sm:$0xff] 0.0
          %395 = vst [vmem:[#allocation2 + $0x4c0] sm:$0xff] 0.0
          %396 = vst [vmem:[#allocation2 + $0x4c8] sm:$0xff] 0.0
          %397 = vst [vmem:[#allocation2 + $0x4d0] sm:$0xff] 0.0
          %398 = vst [vmem:[#allocation2 + $0x4d8] sm:$0xff] 0.0
          %399 = vst [vmem:[#allocation2 + $0x4e0] sm:$0xff] 0.0
          %400 = vst [vmem:[#allocation2 + $0x4e8] sm:$0xff] 0.0
          %401 = vst [vmem:[#allocation2 + $0x4f0] sm:$0xff] 0.0
          %402 = vst [vmem:[#allocation2 + $0x4f8] sm:$0xff] 0.0
          %403 = vst [vmem:[#allocation2 + $0x500] sm:$0xff] 0.0
          %404 = vst [vmem:[#allocation2 + $0x508] sm:$0xff] 0.0
          %405 = vst [vmem:[#allocation2 + $0x510] sm:$0xff] 0.0
          %406 = vst [vmem:[#allocation2 + $0x518] sm:$0xff] 0.0
          %407 = vst [vmem:[#allocation2 + $0x520] sm:$0xff] 0.0
          %408 = vst [vmem:[#allocation2 + $0x528] sm:$0xff] 0.0
          %409 = vst [vmem:[#allocation2 + $0x530] sm:$0xff] 0.0
          %410 = vst [vmem:[#allocation2 + $0x538] sm:$0xff] 0.0
          %411 = vst [vmem:[#allocation2 + $0x540] sm:$0xff] 0.0
          %412 = vst [vmem:[#allocation2 + $0x548] sm:$0xff] 0.0
          %413 = vst [vmem:[#allocation2 + $0x550] sm:$0xff] 0.0
          %414 = vst [vmem:[#allocation2 + $0x558] sm:$0xff] 0.0
          %415 = vst [vmem:[#allocation2 + $0x560] sm:$0xff] 0.0
          %416 = vst [vmem:[#allocation2 + $0x568] sm:$0xff] 0.0
          %417 = vst [vmem:[#allocation2 + $0x570] sm:$0xff] 0.0
          %418 = vst [vmem:[#allocation2 + $0x578] sm:$0xff] 0.0
          %419 = vst [vmem:[#allocation2 + $0x580] sm:$0xff] 0.0
          %420 = vst [vmem:[#allocation2 + $0x588] sm:$0xff] 0.0
          %421 = vst [vmem:[#allocation2 + $0x590] sm:$0xff] 0.0
          %422 = vst [vmem:[#allocation2 + $0x598] sm:$0xff] 0.0
          %423 = vst [vmem:[#allocation2 + $0x5a0] sm:$0xff] 0.0
          %424 = vst [vmem:[#allocation2 + $0x5a8] sm:$0xff] 0.0
          %425 = vst [vmem:[#allocation2 + $0x5b0] sm:$0xff] 0.0
          %426 = vst [vmem:[#allocation2 + $0x5b8] sm:$0xff] 0.0
          %427 = vst [vmem:[#allocation2 + $0x5c0] sm:$0xff] 0.0
          %428 = vst [vmem:[#allocation2 + $0x5c8] sm:$0xff] 0.0
          %429 = vst [vmem:[#allocation2 + $0x5d0] sm:$0xff] 0.0
          %430 = vst [vmem:[#allocation2 + $0x5d8] sm:$0xff] 0.0
          %431 = vst [vmem:[#allocation2 + $0x5e0] sm:$0xff] 0.0
          %432 = vst [vmem:[#allocation2 + $0x5e8] sm:$0xff] 0.0
          %433 = vst [vmem:[#allocation2 + $0x5f0] sm:$0xff] 0.0
          %434 = vst [vmem:[#allocation2 + $0x5f8] sm:$0xff] 0.0
          %435 = vst [vmem:[#allocation2 + $0x600] sm:$0xff] 0.0
          %436 = vst [vmem:[#allocation2 + $0x608] sm:$0xff] 0.0
          %437 = vst [vmem:[#allocation2 + $0x610] sm:$0xff] 0.0
          %438 = vst [vmem:[#allocation2 + $0x618] sm:$0xff] 0.0
          %439 = vst [vmem:[#allocation2 + $0x620] sm:$0xff] 0.0
          %440 = vst [vmem:[#allocation2 + $0x628] sm:$0xff] 0.0
          %441 = vst [vmem:[#allocation2 + $0x630] sm:$0xff] 0.0
          %442 = vst [vmem:[#allocation2 + $0x638] sm:$0xff] 0.0
          %443 = vst [vmem:[#allocation2 + $0x640] sm:$0xff] 0.0
          %444 = vst [vmem:[#allocation2 + $0x648] sm:$0xff] 0.0
          %445 = vst [vmem:[#allocation2 + $0x650] sm:$0xff] 0.0
          %446 = vst [vmem:[#allocation2 + $0x658] sm:$0xff] 0.0
          %447 = vst [vmem:[#allocation2 + $0x660] sm:$0xff] 0.0
          %448 = vst [vmem:[#allocation2 + $0x668] sm:$0xff] 0.0
          %449 = vst [vmem:[#allocation2 + $0x670] sm:$0xff] 0.0
          %450 = vst [vmem:[#allocation2 + $0x678] sm:$0xff] 0.0
          %451 = vst [vmem:[#allocation2 + $0x680] sm:$0xff] 0.0
          %452 = vst [vmem:[#allocation2 + $0x688] sm:$0xff] 0.0
          %453 = vst [vmem:[#allocation2 + $0x690] sm:$0xff] 0.0
          %454 = vst [vmem:[#allocation2 + $0x698] sm:$0xff] 0.0
          %455 = vst [vmem:[#allocation2 + $0x6a0] sm:$0xff] 0.0
          %456 = vst [vmem:[#allocation2 + $0x6a8] sm:$0xff] 0.0
          %457 = vst [vmem:[#allocation2 + $0x6b0] sm:$0xff] 0.0
          %458 = vst [vmem:[#allocation2 + $0x6b8] sm:$0xff] 0.0
          %459 = vst [vmem:[#allocation2 + $0x6c0] sm:$0xff] 0.0
          %460 = vst [vmem:[#allocation2 + $0x6c8] sm:$0xff] 0.0
          %461 = vst [vmem:[#allocation2 + $0x6d0] sm:$0xff] 0.0
          %462 = vst [vmem:[#allocation2 + $0x6d8] sm:$0xff] 0.0
          %463 = vst [vmem:[#allocation2 + $0x6e0] sm:$0xff] 0.0
          %464 = vst [vmem:[#allocation2 + $0x6e8] sm:$0xff] 0.0
          %465 = vst [vmem:[#allocation2 + $0x6f0] sm:$0xff] 0.0
          %466 = vst [vmem:[#allocation2 + $0x6f8] sm:$0xff] 0.0
          %467 = vst [vmem:[#allocation2 + $0x700] sm:$0xff] 0.0
          %468 = vst [vmem:[#allocation2 + $0x708] sm:$0xff] 0.0
          %469 = vst [vmem:[#allocation2 + $0x710] sm:$0xff] 0.0
          %470 = vst [vmem:[#allocation2 + $0x718] sm:$0xff] 0.0
          %471 = vst [vmem:[#allocation2 + $0x720] sm:$0xff] 0.0
          %472 = vst [vmem:[#allocation2 + $0x728] sm:$0xff] 0.0
          %473 = vst [vmem:[#allocation2 + $0x730] sm:$0xff] 0.0
          %474 = vst [vmem:[#allocation2 + $0x738] sm:$0xff] 0.0
          %475 = vst [vmem:[#allocation2 + $0x740] sm:$0xff] 0.0
          %476 = vst [vmem:[#allocation2 + $0x748] sm:$0xff] 0.0
          %477 = vst [vmem:[#allocation2 + $0x750] sm:$0xff] 0.0
          %478 = vst [vmem:[#allocation2 + $0x758] sm:$0xff] 0.0
          %479 = vst [vmem:[#allocation2 + $0x760] sm:$0xff] 0.0
          %480 = vst [vmem:[#allocation2 + $0x768] sm:$0xff] 0.0
          %481 = vst [vmem:[#allocation2 + $0x770] sm:$0xff] 0.0
          %482 = vst [vmem:[#allocation2 + $0x778] sm:$0xff] 0.0
          %483 = vst [vmem:[#allocation2 + $0x780] sm:$0xff] 0.0
          %484 = vst [vmem:[#allocation2 + $0x788] sm:$0xff] 0.0
          %485 = vst [vmem:[#allocation2 + $0x790] sm:$0xff] 0.0
          %486 = vst [vmem:[#allocation2 + $0x798] sm:$0xff] 0.0
          %487 = vst [vmem:[#allocation2 + $0x7a0] sm:$0xff] 0.0
          %488 = vst [vmem:[#allocation2 + $0x7a8] sm:$0xff] 0.0
          %489 = vst [vmem:[#allocation2 + $0x7b0] sm:$0xff] 0.0
          %490 = vst [vmem:[#allocation2 + $0x7b8] sm:$0xff] 0.0
          %491 = vst [vmem:[#allocation2 + $0x7c0] sm:$0xff] 0.0
          %492 = vst [vmem:[#allocation2 + $0x7c8] sm:$0xff] 0.0
          %493 = vst [vmem:[#allocation2 + $0x7d0] sm:$0xff] 0.0
          %494 = vst [vmem:[#allocation2 + $0x7d8] sm:$0xff] 0.0
          %495 = vst [vmem:[#allocation2 + $0x7e0] sm:$0xff] 0.0
          %496 = vst [vmem:[#allocation2 + $0x7e8] sm:$0xff] 0.0
          %497 = vst [vmem:[#allocation2 + $0x7f0] sm:$0xff] 0.0
          %498 = vst [vmem:[#allocation2 + $0x7f8] sm:$0xff] 0.0
        $region40: #{tpu_custom_call.1} parent=27 // pred_fallthru
          _
        %v499 = vld [vmem:[#allocation2] sm:$0xff]
        %v500 = vld [vmem:[#allocation2 + $0x8] sm:$0xff]
        %v501 = vld [vmem:[#allocation2 + $0x10] sm:$0xff]
        %v502 = vld [vmem:[#allocation2 + $0x18] sm:$0xff]
        %v503 = vld [vmem:[#allocation2 + $0x20] sm:$0xff]
        %v504 = vld [vmem:[#allocation2 + $0x28] sm:$0xff]
        %v505 = vld [vmem:[#allocation2 + $0x30] sm:$0xff]
        %v506 = vld [vmem:[#allocation2 + $0x38] sm:$0xff]
        %v507 = vld [vmem:[#allocation2 + $0x40] sm:$0xff]
        %v508 = vld [vmem:[#allocation2 + $0x48] sm:$0xff]
        %v509 = vld [vmem:[#allocation2 + $0x50] sm:$0xff]
        %v510 = vld [vmem:[#allocation2 + $0x58] sm:$0xff]
        %v511 = vld [vmem:[#allocation2 + $0x60] sm:$0xff]
        %v512 = vld [vmem:[#allocation2 + $0x68] sm:$0xff]
        %v513 = vld [vmem:[#allocation2 + $0x70] sm:$0xff]
        %v514 = vld [vmem:[#allocation2 + $0x78] sm:$0xff]
        %v515 = vld [vmem:[#allocation2 + $0x80] sm:$0xff]
        %v516 = vld [vmem:[#allocation2 + $0x88] sm:$0xff]
        %v517 = vld [vmem:[#allocation2 + $0x90] sm:$0xff]
        %v518 = vld [vmem:[#allocation2 + $0x98] sm:$0xff]
        %v519 = vld [vmem:[#allocation2 + $0xa0] sm:$0xff]
        %v520 = vld [vmem:[#allocation2 + $0xa8] sm:$0xff]
        %v521 = vld [vmem:[#allocation2 + $0xb0] sm:$0xff]
        %v522 = vld [vmem:[#allocation2 + $0xb8] sm:$0xff]
        %v523 = vld [vmem:[#allocation2 + $0xc0] sm:$0xff]
        %v524 = vld [vmem:[#allocation2 + $0xc8] sm:$0xff]
        %v525 = vld [vmem:[#allocation2 + $0xd0] sm:$0xff]
        %v526 = vld [vmem:[#allocation2 + $0xd8] sm:$0xff]
        %v527 = vld [vmem:[#allocation2 + $0xe0] sm:$0xff]
        %v528 = vld [vmem:[#allocation2 + $0xe8] sm:$0xff]
        %v529 = vld [vmem:[#allocation2 + $0xf0] sm:$0xff]
        %v530 = vld [vmem:[#allocation2 + $0xf8] sm:$0xff]
        %v531 = vld [vmem:[#allocation2 + $0x100] sm:$0xff]
        %v532 = vld [vmem:[#allocation2 + $0x108] sm:$0xff]
        %v533 = vld [vmem:[#allocation2 + $0x110] sm:$0xff]
        %v534 = vld [vmem:[#allocation2 + $0x118] sm:$0xff]
        %v535 = vld [vmem:[#allocation2 + $0x120] sm:$0xff]
        %v536 = vld [vmem:[#allocation2 + $0x128] sm:$0xff]
        %v537 = vld [vmem:[#allocation2 + $0x130] sm:$0xff]
        %v538 = vld [vmem:[#allocation2 + $0x138] sm:$0xff]
        %v539 = vld [vmem:[#allocation2 + $0x140] sm:$0xff]
        %v540 = vld [vmem:[#allocation2 + $0x148] sm:$0xff]
        %v541 = vld [vmem:[#allocation2 + $0x150] sm:$0xff]
        %v542 = vld [vmem:[#allocation2 + $0x158] sm:$0xff]
        %v543 = vld [vmem:[#allocation2 + $0x160] sm:$0xff]
        %v544 = vld [vmem:[#allocation2 + $0x168] sm:$0xff]
        %v545 = vld [vmem:[#allocation2 + $0x170] sm:$0xff]
        %v546 = vld [vmem:[#allocation2 + $0x178] sm:$0xff]
        %v547 = vld [vmem:[#allocation2 + $0x180] sm:$0xff]
        %v548 = vld [vmem:[#allocation2 + $0x188] sm:$0xff]
        %v549 = vld [vmem:[#allocation2 + $0x190] sm:$0xff]
        %v550 = vld [vmem:[#allocation2 + $0x198] sm:$0xff]
        %v551 = vld [vmem:[#allocation2 + $0x1a0] sm:$0xff]
        %v552 = vld [vmem:[#allocation2 + $0x1a8] sm:$0xff]
        %v553 = vld [vmem:[#allocation2 + $0x1b0] sm:$0xff]
        %v554 = vld [vmem:[#allocation2 + $0x1b8] sm:$0xff]
        %v555 = vld [vmem:[#allocation2 + $0x1c0] sm:$0xff]
        %v556 = vld [vmem:[#allocation2 + $0x1c8] sm:$0xff]
        %v557 = vld [vmem:[#allocation2 + $0x1d0] sm:$0xff]
        %v558 = vld [vmem:[#allocation2 + $0x1d8] sm:$0xff]
        %v559 = vld [vmem:[#allocation2 + $0x1e0] sm:$0xff]
        %v560 = vld [vmem:[#allocation2 + $0x1e8] sm:$0xff]
        %v561 = vld [vmem:[#allocation2 + $0x1f0] sm:$0xff]
        %v562 = vld [vmem:[#allocation2 + $0x1f8] sm:$0xff]
        %v563 = vld [vmem:[#allocation2 + $0x200] sm:$0xff]
        %v564 = vld [vmem:[#allocation2 + $0x208] sm:$0xff]
        %v565 = vld [vmem:[#allocation2 + $0x210] sm:$0xff]
        %v566 = vld [vmem:[#allocation2 + $0x218] sm:$0xff]
        %v567 = vld [vmem:[#allocation2 + $0x220] sm:$0xff]
        %v568 = vld [vmem:[#allocation2 + $0x228] sm:$0xff]
        %v569 = vld [vmem:[#allocation2 + $0x230] sm:$0xff]
        %v570 = vld [vmem:[#allocation2 + $0x238] sm:$0xff]
        %v571 = vld [vmem:[#allocation2 + $0x240] sm:$0xff]
        %v572 = vld [vmem:[#allocation2 + $0x248] sm:$0xff]
        %v573 = vld [vmem:[#allocation2 + $0x250] sm:$0xff]
        %v574 = vld [vmem:[#allocation2 + $0x258] sm:$0xff]
        %v575 = vld [vmem:[#allocation2 + $0x260] sm:$0xff]
        %v576 = vld [vmem:[#allocation2 + $0x268] sm:$0xff]
        %v577 = vld [vmem:[#allocation2 + $0x270] sm:$0xff]
        %v578 = vld [vmem:[#allocation2 + $0x278] sm:$0xff]
        %v579 = vld [vmem:[#allocation2 + $0x280] sm:$0xff]
        %v580 = vld [vmem:[#allocation2 + $0x288] sm:$0xff]
        %v581 = vld [vmem:[#allocation2 + $0x290] sm:$0xff]
        %v582 = vld [vmem:[#allocation2 + $0x298] sm:$0xff]
        %v583 = vld [vmem:[#allocation2 + $0x2a0] sm:$0xff]
        %v584 = vld [vmem:[#allocation2 + $0x2a8] sm:$0xff]
        %v585 = vld [vmem:[#allocation2 + $0x2b0] sm:$0xff]
        %v586 = vld [vmem:[#allocation2 + $0x2b8] sm:$0xff]
        %v587 = vld [vmem:[#allocation2 + $0x2c0] sm:$0xff]
        %v588 = vld [vmem:[#allocation2 + $0x2c8] sm:$0xff]
        %v589 = vld [vmem:[#allocation2 + $0x2d0] sm:$0xff]
        %v590 = vld [vmem:[#allocation2 + $0x2d8] sm:$0xff]
        %v591 = vld [vmem:[#allocation2 + $0x2e0] sm:$0xff]
        %v592 = vld [vmem:[#allocation2 + $0x2e8] sm:$0xff]
        %v593 = vld [vmem:[#allocation2 + $0x2f0] sm:$0xff]
        %v594 = vld [vmem:[#allocation2 + $0x2f8] sm:$0xff]
        %v595 = vld [vmem:[#allocation2 + $0x300] sm:$0xff]
        %v596 = vld [vmem:[#allocation2 + $0x308] sm:$0xff]
        %v597 = vld [vmem:[#allocation2 + $0x310] sm:$0xff]
        %v598 = vld [vmem:[#allocation2 + $0x318] sm:$0xff]
        %v599 = vld [vmem:[#allocation2 + $0x320] sm:$0xff]
        %v600 = vld [vmem:[#allocation2 + $0x328] sm:$0xff]
        %v601 = vld [vmem:[#allocation2 + $0x330] sm:$0xff]
        %v602 = vld [vmem:[#allocation2 + $0x338] sm:$0xff]
        %v603 = vld [vmem:[#allocation2 + $0x340] sm:$0xff]
        %v604 = vld [vmem:[#allocation2 + $0x348] sm:$0xff]
        %v605 = vld [vmem:[#allocation2 + $0x350] sm:$0xff]
        %v606 = vld [vmem:[#allocation2 + $0x358] sm:$0xff]
        %v607 = vld [vmem:[#allocation2 + $0x360] sm:$0xff]
        %v608 = vld [vmem:[#allocation2 + $0x368] sm:$0xff]
        %v609 = vld [vmem:[#allocation2 + $0x370] sm:$0xff]
        %v610 = vld [vmem:[#allocation2 + $0x378] sm:$0xff]
        %v611 = vld [vmem:[#allocation2 + $0x380] sm:$0xff]
        %v612 = vld [vmem:[#allocation2 + $0x388] sm:$0xff]
        %v613 = vld [vmem:[#allocation2 + $0x390] sm:$0xff]
        %v614 = vld [vmem:[#allocation2 + $0x398] sm:$0xff]
        %v615 = vld [vmem:[#allocation2 + $0x3a0] sm:$0xff]
        %v616 = vld [vmem:[#allocation2 + $0x3a8] sm:$0xff]
        %v617 = vld [vmem:[#allocation2 + $0x3b0] sm:$0xff]
        %v618 = vld [vmem:[#allocation2 + $0x3b8] sm:$0xff]
        %v619 = vld [vmem:[#allocation2 + $0x3c0] sm:$0xff]
        %v620 = vld [vmem:[#allocation2 + $0x3c8] sm:$0xff]
        %v621 = vld [vmem:[#allocation2 + $0x3d0] sm:$0xff]
        %v622 = vld [vmem:[#allocation2 + $0x3d8] sm:$0xff]
        %v623 = vld [vmem:[#allocation2 + $0x3e0] sm:$0xff]
        %v624 = vld [vmem:[#allocation2 + $0x3e8] sm:$0xff]
        %v625 = vld [vmem:[#allocation2 + $0x3f0] sm:$0xff]
        %v626 = vld [vmem:[#allocation2 + $0x3f8] sm:$0xff]
        %v627 = vld [vmem:[#allocation2 + $0x400] sm:$0xff]
        %v628 = vld [vmem:[#allocation2 + $0x408] sm:$0xff]
        %v629 = vld [vmem:[#allocation2 + $0x410] sm:$0xff]
        %v630 = vld [vmem:[#allocation2 + $0x418] sm:$0xff]
        %v631 = vld [vmem:[#allocation2 + $0x420] sm:$0xff]
        %v632 = vld [vmem:[#allocation2 + $0x428] sm:$0xff]
        %v633 = vld [vmem:[#allocation2 + $0x430] sm:$0xff]
        %v634 = vld [vmem:[#allocation2 + $0x438] sm:$0xff]
        %v635 = vld [vmem:[#allocation2 + $0x440] sm:$0xff]
        %v636 = vld [vmem:[#allocation2 + $0x448] sm:$0xff]
        %v637 = vld [vmem:[#allocation2 + $0x450] sm:$0xff]
        %v638 = vld [vmem:[#allocation2 + $0x458] sm:$0xff]
        %v639 = vld [vmem:[#allocation2 + $0x460] sm:$0xff]
        %v640 = vld [vmem:[#allocation2 + $0x468] sm:$0xff]
        %v641 = vld [vmem:[#allocation2 + $0x470] sm:$0xff]
        %v642 = vld [vmem:[#allocation2 + $0x478] sm:$0xff]
        %v643 = vld [vmem:[#allocation2 + $0x480] sm:$0xff]
        %v644 = vld [vmem:[#allocation2 + $0x488] sm:$0xff]
        %v645 = vld [vmem:[#allocation2 + $0x490] sm:$0xff]
        %v646 = vld [vmem:[#allocation2 + $0x498] sm:$0xff]
        %v647 = vld [vmem:[#allocation2 + $0x4a0] sm:$0xff]
        %v648 = vld [vmem:[#allocation2 + $0x4a8] sm:$0xff]
        %v649 = vld [vmem:[#allocation2 + $0x4b0] sm:$0xff]
        %v650 = vld [vmem:[#allocation2 + $0x4b8] sm:$0xff]
        %v651 = vld [vmem:[#allocation2 + $0x4c0] sm:$0xff]
        %v652 = vld [vmem:[#allocation2 + $0x4c8] sm:$0xff]
        %v653 = vld [vmem:[#allocation2 + $0x4d0] sm:$0xff]
        %v654 = vld [vmem:[#allocation2 + $0x4d8] sm:$0xff]
        %v655 = vld [vmem:[#allocation2 + $0x4e0] sm:$0xff]
        %v656 = vld [vmem:[#allocation2 + $0x4e8] sm:$0xff]
        %v657 = vld [vmem:[#allocation2 + $0x4f0] sm:$0xff]
        %v658 = vld [vmem:[#allocation2 + $0x4f8] sm:$0xff]
        %v659 = vld [vmem:[#allocation2 + $0x500] sm:$0xff]
        %v660 = vld [vmem:[#allocation2 + $0x508] sm:$0xff]
        %v661 = vld [vmem:[#allocation2 + $0x510] sm:$0xff]
        %v662 = vld [vmem:[#allocation2 + $0x518] sm:$0xff]
        %v663 = vld [vmem:[#allocation2 + $0x520] sm:$0xff]
        %v664 = vld [vmem:[#allocation2 + $0x528] sm:$0xff]
        %v665 = vld [vmem:[#allocation2 + $0x530] sm:$0xff]
        %v666 = vld [vmem:[#allocation2 + $0x538] sm:$0xff]
        %v667 = vld [vmem:[#allocation2 + $0x540] sm:$0xff]
        %v668 = vld [vmem:[#allocation2 + $0x548] sm:$0xff]
        %v669 = vld [vmem:[#allocation2 + $0x550] sm:$0xff]
        %v670 = vld [vmem:[#allocation2 + $0x558] sm:$0xff]
        %v671 = vld [vmem:[#allocation2 + $0x560] sm:$0xff]
        %v672 = vld [vmem:[#allocation2 + $0x568] sm:$0xff]
        %v673 = vld [vmem:[#allocation2 + $0x570] sm:$0xff]
        %v674 = vld [vmem:[#allocation2 + $0x578] sm:$0xff]
        %v675 = vld [vmem:[#allocation2 + $0x580] sm:$0xff]
        %v676 = vld [vmem:[#allocation2 + $0x588] sm:$0xff]
        %v677 = vld [vmem:[#allocation2 + $0x590] sm:$0xff]
        %v678 = vld [vmem:[#allocation2 + $0x598] sm:$0xff]
        %v679 = vld [vmem:[#allocation2 + $0x5a0] sm:$0xff]
        %v680 = vld [vmem:[#allocation2 + $0x5a8] sm:$0xff]
        %v681 = vld [vmem:[#allocation2 + $0x5b0] sm:$0xff]
        %v682 = vld [vmem:[#allocation2 + $0x5b8] sm:$0xff]
        %v683 = vld [vmem:[#allocation2 + $0x5c0] sm:$0xff]
        %v684 = vld [vmem:[#allocation2 + $0x5c8] sm:$0xff]
        %v685 = vld [vmem:[#allocation2 + $0x5d0] sm:$0xff]
        %v686 = vld [vmem:[#allocation2 + $0x5d8] sm:$0xff]
        %v687 = vld [vmem:[#allocation2 + $0x5e0] sm:$0xff]
        %v688 = vld [vmem:[#allocation2 + $0x5e8] sm:$0xff]
        %v689 = vld [vmem:[#allocation2 + $0x5f0] sm:$0xff]
        %v690 = vld [vmem:[#allocation2 + $0x5f8] sm:$0xff]
        %v691 = vld [vmem:[#allocation2 + $0x600] sm:$0xff]
        %v692 = vld [vmem:[#allocation2 + $0x608] sm:$0xff]
        %v693 = vld [vmem:[#allocation2 + $0x610] sm:$0xff]
        %v694 = vld [vmem:[#allocation2 + $0x618] sm:$0xff]
        %v695 = vld [vmem:[#allocation2 + $0x620] sm:$0xff]
        %v696 = vld [vmem:[#allocation2 + $0x628] sm:$0xff]
        %v697 = vld [vmem:[#allocation2 + $0x630] sm:$0xff]
        %v698 = vld [vmem:[#allocation2 + $0x638] sm:$0xff]
        %v699 = vld [vmem:[#allocation2 + $0x640] sm:$0xff]
        %v700 = vld [vmem:[#allocation2 + $0x648] sm:$0xff]
        %v701 = vld [vmem:[#allocation2 + $0x650] sm:$0xff]
        %v702 = vld [vmem:[#allocation2 + $0x658] sm:$0xff]
        %v703 = vld [vmem:[#allocation2 + $0x660] sm:$0xff]
        %v704 = vld [vmem:[#allocation2 + $0x668] sm:$0xff]
        %v705 = vld [vmem:[#allocation2 + $0x670] sm:$0xff]
        %v706 = vld [vmem:[#allocation2 + $0x678] sm:$0xff]
        %v707 = vld [vmem:[#allocation2 + $0x680] sm:$0xff]
        %v708 = vld [vmem:[#allocation2 + $0x688] sm:$0xff]
        %v709 = vld [vmem:[#allocation2 + $0x690] sm:$0xff]
        %v710 = vld [vmem:[#allocation2 + $0x698] sm:$0xff]
        %v711 = vld [vmem:[#allocation2 + $0x6a0] sm:$0xff]
        %v712 = vld [vmem:[#allocation2 + $0x6a8] sm:$0xff]
        %v713 = vld [vmem:[#allocation2 + $0x6b0] sm:$0xff]
        %v714 = vld [vmem:[#allocation2 + $0x6b8] sm:$0xff]
        %v715 = vld [vmem:[#allocation2 + $0x6c0] sm:$0xff]
        %v716 = vld [vmem:[#allocation2 + $0x6c8] sm:$0xff]
        %v717 = vld [vmem:[#allocation2 + $0x6d0] sm:$0xff]
        %v718 = vld [vmem:[#allocation2 + $0x6d8] sm:$0xff]
        %v719 = vld [vmem:[#allocation2 + $0x6e0] sm:$0xff]
        %v720 = vld [vmem:[#allocation2 + $0x6e8] sm:$0xff]
        %v721 = vld [vmem:[#allocation2 + $0x6f0] sm:$0xff]
        %v722 = vld [vmem:[#allocation2 + $0x6f8] sm:$0xff]
        %v723 = vld [vmem:[#allocation2 + $0x700] sm:$0xff]
        %v724 = vld [vmem:[#allocation2 + $0x708] sm:$0xff]
        %v725 = vld [vmem:[#allocation2 + $0x710] sm:$0xff]
        %v726 = vld [vmem:[#allocation2 + $0x718] sm:$0xff]
        %v727 = vld [vmem:[#allocation2 + $0x720] sm:$0xff]
        %v728 = vld [vmem:[#allocation2 + $0x728] sm:$0xff]
        %v729 = vld [vmem:[#allocation2 + $0x730] sm:$0xff]
        %v730 = vld [vmem:[#allocation2 + $0x738] sm:$0xff]
        %v731 = vld [vmem:[#allocation2 + $0x740] sm:$0xff]
        %v732 = vld [vmem:[#allocation2 + $0x748] sm:$0xff]
        %v733 = vld [vmem:[#allocation2 + $0x750] sm:$0xff]
        %v734 = vld [vmem:[#allocation2 + $0x758] sm:$0xff]
        %v735 = vld [vmem:[#allocation2 + $0x760] sm:$0xff]
        %v736 = vld [vmem:[#allocation2 + $0x768] sm:$0xff]
        %v737 = vld [vmem:[#allocation2 + $0x770] sm:$0xff]
        %v738 = vld [vmem:[#allocation2 + $0x778] sm:$0xff]
        %v739 = vld [vmem:[#allocation2 + $0x780] sm:$0xff]
        %v740 = vld [vmem:[#allocation2 + $0x788] sm:$0xff]
        %v741 = vld [vmem:[#allocation2 + $0x790] sm:$0xff]
        %v742 = vld [vmem:[#allocation2 + $0x798] sm:$0xff]
        %v743 = vld [vmem:[#allocation2 + $0x7a0] sm:$0xff]
        %v744 = vld [vmem:[#allocation2 + $0x7a8] sm:$0xff]
        %v745 = vld [vmem:[#allocation2 + $0x7b0] sm:$0xff]
        %v746 = vld [vmem:[#allocation2 + $0x7b8] sm:$0xff]
        %v747 = vld [vmem:[#allocation2 + $0x7c0] sm:$0xff]
        %v748 = vld [vmem:[#allocation2 + $0x7c8] sm:$0xff]
        %v749 = vld [vmem:[#allocation2 + $0x7d0] sm:$0xff]
        %v750 = vld [vmem:[#allocation2 + $0x7d8] sm:$0xff]
        %v751 = vld [vmem:[#allocation2 + $0x7e0] sm:$0xff]
        %v752 = vld [vmem:[#allocation2 + $0x7e8] sm:$0xff]
        %v753 = vld [vmem:[#allocation2 + $0x7f0] sm:$0xff]
        %v754 = vld [vmem:[#allocation2 + $0x7f8] sm:$0xff]
        %v755 = vld [vmem:[%s198] sm:$0xff]
        %v756 = vld [vmem:[%s198 + $0x8] sm:$0xff]
        %v757 = vld [vmem:[%s198 + $0x10] sm:$0xff]
        %v758 = vld [vmem:[%s198 + $0x18] sm:$0xff]
        %v759 = vld [vmem:[%s198 + $0x20] sm:$0xff]
        %v760 = vld [vmem:[%s198 + $0x28] sm:$0xff]
        %v761 = vld [vmem:[%s198 + $0x30] sm:$0xff]
        %v762 = vld [vmem:[%s198 + $0x38] sm:$0xff]
        %v763 = vld [vmem:[%s198 + $0x40] sm:$0xff]
        %v764 = vld [vmem:[%s198 + $0x48] sm:$0xff]
        %v765 = vld [vmem:[%s198 + $0x50] sm:$0xff]
        %v766 = vld [vmem:[%s198 + $0x58] sm:$0xff]
        %v767 = vld [vmem:[%s198 + $0x60] sm:$0xff]
        %v768 = vld [vmem:[%s198 + $0x68] sm:$0xff]
        %v769 = vld [vmem:[%s198 + $0x70] sm:$0xff]
        %v770 = vld [vmem:[%s198 + $0x78] sm:$0xff]
        %v771 = vld [vmem:[%s198 + $0x80] sm:$0xff]
        %v772 = vld [vmem:[%s198 + $0x88] sm:$0xff]
        %v773 = vld [vmem:[%s198 + $0x90] sm:$0xff]
        %v774 = vld [vmem:[%s198 + $0x98] sm:$0xff]
        %v775 = vld [vmem:[%s198 + $0xa0] sm:$0xff]
        %v776 = vld [vmem:[%s198 + $0xa8] sm:$0xff]
        %v777 = vld [vmem:[%s198 + $0xb0] sm:$0xff]
        %v778 = vld [vmem:[%s198 + $0xb8] sm:$0xff]
        %v779 = vld [vmem:[%s198 + $0xc0] sm:$0xff]
        %v780 = vld [vmem:[%s198 + $0xc8] sm:$0xff]
        %v781 = vld [vmem:[%s198 + $0xd0] sm:$0xff]
        %v782 = vld [vmem:[%s198 + $0xd8] sm:$0xff]
        %v783 = vld [vmem:[%s198 + $0xe0] sm:$0xff]
        %v784 = vld [vmem:[%s198 + $0xe8] sm:$0xff]
        %v785 = vld [vmem:[%s198 + $0xf0] sm:$0xff]
        %v786 = vld [vmem:[%s198 + $0xf8] sm:$0xff]
        %v787 = vld [vmem:[%s198 + $0x100] sm:$0xff]
        %v788 = vld [vmem:[%s198 + $0x108] sm:$0xff]
        %v789 = vld [vmem:[%s198 + $0x110] sm:$0xff]
        %v790 = vld [vmem:[%s198 + $0x118] sm:$0xff]
        %v791 = vld [vmem:[%s198 + $0x120] sm:$0xff]
        %v792 = vld [vmem:[%s198 + $0x128] sm:$0xff]
        %v793 = vld [vmem:[%s198 + $0x130] sm:$0xff]
        %v794 = vld [vmem:[%s198 + $0x138] sm:$0xff]
        %v795 = vld [vmem:[%s198 + $0x140] sm:$0xff]
        %v796 = vld [vmem:[%s198 + $0x148] sm:$0xff]
        %v797 = vld [vmem:[%s198 + $0x150] sm:$0xff]
        %v798 = vld [vmem:[%s198 + $0x158] sm:$0xff]
        %v799 = vld [vmem:[%s198 + $0x160] sm:$0xff]
        %v800 = vld [vmem:[%s198 + $0x168] sm:$0xff]
        %v801 = vld [vmem:[%s198 + $0x170] sm:$0xff]
        %v802 = vld [vmem:[%s198 + $0x178] sm:$0xff]
        %v803 = vld [vmem:[%s198 + $0x180] sm:$0xff]
        %v804 = vld [vmem:[%s198 + $0x188] sm:$0xff]
        %v805 = vld [vmem:[%s198 + $0x190] sm:$0xff]
        %v806 = vld [vmem:[%s198 + $0x198] sm:$0xff]
        %v807 = vld [vmem:[%s198 + $0x1a0] sm:$0xff]
        %v808 = vld [vmem:[%s198 + $0x1a8] sm:$0xff]
        %v809 = vld [vmem:[%s198 + $0x1b0] sm:$0xff]
        %v810 = vld [vmem:[%s198 + $0x1b8] sm:$0xff]
        %v811 = vld [vmem:[%s198 + $0x1c0] sm:$0xff]
        %v812 = vld [vmem:[%s198 + $0x1c8] sm:$0xff]
        %v813 = vld [vmem:[%s198 + $0x1d0] sm:$0xff]
        %v814 = vld [vmem:[%s198 + $0x1d8] sm:$0xff]
        %v815 = vld [vmem:[%s198 + $0x1e0] sm:$0xff]
        %v816 = vld [vmem:[%s198 + $0x1e8] sm:$0xff]
        %v817 = vld [vmem:[%s198 + $0x1f0] sm:$0xff]
        %v818 = vld [vmem:[%s198 + $0x1f8] sm:$0xff]
        %v819 = vld [vmem:[%s207] sm:$0xff]
        %v820 = vld [vmem:[%s207 + $0x8] sm:$0xff]
        %v821 = vld [vmem:[%s207 + $0x10] sm:$0xff]
        %v822 = vld [vmem:[%s207 + $0x18] sm:$0xff]
        %v823 = vld [vmem:[%s207 + $0x20] sm:$0xff]
        %v824 = vld [vmem:[%s207 + $0x28] sm:$0xff]
        %v825 = vld [vmem:[%s207 + $0x30] sm:$0xff]
        %v826 = vld [vmem:[%s207 + $0x38] sm:$0xff]
        %v827 = vld [vmem:[%s207 + $0x40] sm:$0xff]
        %v828 = vld [vmem:[%s207 + $0x48] sm:$0xff]
        %v829 = vld [vmem:[%s207 + $0x50] sm:$0xff]
        %v830 = vld [vmem:[%s207 + $0x58] sm:$0xff]
        %v831 = vld [vmem:[%s207 + $0x60] sm:$0xff]
        %v832 = vld [vmem:[%s207 + $0x68] sm:$0xff]
        %v833 = vld [vmem:[%s207 + $0x70] sm:$0xff]
        %v834 = vld [vmem:[%s207 + $0x78] sm:$0xff]
        %v835 = vld [vmem:[%s207 + $0x80] sm:$0xff]
        %v836 = vld [vmem:[%s207 + $0x88] sm:$0xff]
        %v837 = vld [vmem:[%s207 + $0x90] sm:$0xff]
        %v838 = vld [vmem:[%s207 + $0x98] sm:$0xff]
        %v839 = vld [vmem:[%s207 + $0xa0] sm:$0xff]
        %v840 = vld [vmem:[%s207 + $0xa8] sm:$0xff]
        %v841 = vld [vmem:[%s207 + $0xb0] sm:$0xff]
        %v842 = vld [vmem:[%s207 + $0xb8] sm:$0xff]
        %v843 = vld [vmem:[%s207 + $0xc0] sm:$0xff]
        %v844 = vld [vmem:[%s207 + $0xc8] sm:$0xff]
        %v845 = vld [vmem:[%s207 + $0xd0] sm:$0xff]
        %v846 = vld [vmem:[%s207 + $0xd8] sm:$0xff]
        %v847 = vld [vmem:[%s207 + $0xe0] sm:$0xff]
        %v848 = vld [vmem:[%s207 + $0xe8] sm:$0xff]
        %v849 = vld [vmem:[%s207 + $0xf0] sm:$0xff]
        %v850 = vld [vmem:[%s207 + $0xf8] sm:$0xff]
        %v851 = vld [vmem:[%s207 + $0x100] sm:$0xff]
        %v852 = vld [vmem:[%s207 + $0x108] sm:$0xff]
        %v853 = vld [vmem:[%s207 + $0x110] sm:$0xff]
        %v854 = vld [vmem:[%s207 + $0x118] sm:$0xff]
        %v855 = vld [vmem:[%s207 + $0x120] sm:$0xff]
        %v856 = vld [vmem:[%s207 + $0x128] sm:$0xff]
        %v857 = vld [vmem:[%s207 + $0x130] sm:$0xff]
        %v858 = vld [vmem:[%s207 + $0x138] sm:$0xff]
        %v859 = vld [vmem:[%s207 + $0x140] sm:$0xff]
        %v860 = vld [vmem:[%s207 + $0x148] sm:$0xff]
        %v861 = vld [vmem:[%s207 + $0x150] sm:$0xff]
        %v862 = vld [vmem:[%s207 + $0x158] sm:$0xff]
        %v863 = vld [vmem:[%s207 + $0x160] sm:$0xff]
        %v864 = vld [vmem:[%s207 + $0x168] sm:$0xff]
        %v865 = vld [vmem:[%s207 + $0x170] sm:$0xff]
        %v866 = vld [vmem:[%s207 + $0x178] sm:$0xff]
        %v867 = vld [vmem:[%s207 + $0x180] sm:$0xff]
        %v868 = vld [vmem:[%s207 + $0x188] sm:$0xff]
        %v869 = vld [vmem:[%s207 + $0x190] sm:$0xff]
        %v870 = vld [vmem:[%s207 + $0x198] sm:$0xff]
        %v871 = vld [vmem:[%s207 + $0x1a0] sm:$0xff]
        %v872 = vld [vmem:[%s207 + $0x1a8] sm:$0xff]
        %v873 = vld [vmem:[%s207 + $0x1b0] sm:$0xff]
        %v874 = vld [vmem:[%s207 + $0x1b8] sm:$0xff]
        %v875 = vld [vmem:[%s207 + $0x1c0] sm:$0xff]
        %v876 = vld [vmem:[%s207 + $0x1c8] sm:$0xff]
        %v877 = vld [vmem:[%s207 + $0x1d0] sm:$0xff]
        %v878 = vld [vmem:[%s207 + $0x1d8] sm:$0xff]
        %v879 = vld [vmem:[%s207 + $0x1e0] sm:$0xff]
        %v880 = vld [vmem:[%s207 + $0x1e8] sm:$0xff]
        %v881 = vld [vmem:[%s207 + $0x1f0] sm:$0xff]
        %v882 = vld [vmem:[%s207 + $0x1f8] sm:$0xff]
        %v947 = vunpack.c.l.b16 %v755
        %v948 = vunpack.c.h.b16 %v755
        %v949 = vunpack.c.l.b16 %v756
        %v950 = vunpack.c.h.b16 %v756
        %v951 = vunpack.c.l.b16 %v757
        %v952 = vunpack.c.h.b16 %v757
        %v953 = vunpack.c.l.b16 %v758
        %v954 = vunpack.c.h.b16 %v758
        %v955 = vunpack.c.l.b16 %v759
        %v956 = vunpack.c.h.b16 %v759
        %v957 = vunpack.c.l.b16 %v760
        %v958 = vunpack.c.h.b16 %v760
        %v959 = vunpack.c.l.b16 %v761
        %v960 = vunpack.c.h.b16 %v761
        %v961 = vunpack.c.l.b16 %v762
        %v962 = vunpack.c.h.b16 %v762
        %v963 = vunpack.c.l.b16 %v763
        %v964 = vunpack.c.h.b16 %v763
        %v965 = vunpack.c.l.b16 %v764
        %v966 = vunpack.c.h.b16 %v764
        %v967 = vunpack.c.l.b16 %v765
        %v968 = vunpack.c.h.b16 %v765
        %v969 = vunpack.c.l.b16 %v766
        %v970 = vunpack.c.h.b16 %v766
        %v971 = vunpack.c.l.b16 %v767
        %v972 = vunpack.c.h.b16 %v767
        %v973 = vunpack.c.l.b16 %v768
        %v974 = vunpack.c.h.b16 %v768
        %v975 = vunpack.c.l.b16 %v769
        %v976 = vunpack.c.h.b16 %v769
        %v977 = vunpack.c.l.b16 %v770
        %v978 = vunpack.c.h.b16 %v770
        %v979 = vunpack.c.l.b16 %v771
        %v980 = vunpack.c.h.b16 %v771
        %v981 = vunpack.c.l.b16 %v772
        %v982 = vunpack.c.h.b16 %v772
        %v983 = vunpack.c.l.b16 %v773
        %v984 = vunpack.c.h.b16 %v773
        %v985 = vunpack.c.l.b16 %v774
        %v986 = vunpack.c.h.b16 %v774
        %v987 = vunpack.c.l.b16 %v775
        %v988 = vunpack.c.h.b16 %v775
        %v989 = vunpack.c.l.b16 %v776
        %v990 = vunpack.c.h.b16 %v776
        %v991 = vunpack.c.l.b16 %v777
        %v992 = vunpack.c.h.b16 %v777
        %v993 = vunpack.c.l.b16 %v778
        %v994 = vunpack.c.h.b16 %v778
        %v995 = vunpack.c.l.b16 %v779
        %v996 = vunpack.c.h.b16 %v779
        %v997 = vunpack.c.l.b16 %v780
        %v998 = vunpack.c.h.b16 %v780
        %v999 = vunpack.c.l.b16 %v781
        %v1000 = vunpack.c.h.b16 %v781
        %v1001 = vunpack.c.l.b16 %v782
        %v1002 = vunpack.c.h.b16 %v782
        %v1003 = vunpack.c.l.b16 %v783
        %v1004 = vunpack.c.h.b16 %v783
        %v1005 = vunpack.c.l.b16 %v784
        %v1006 = vunpack.c.h.b16 %v784
        %v1007 = vunpack.c.l.b16 %v785
        %v1008 = vunpack.c.h.b16 %v785
        %v1009 = vunpack.c.l.b16 %v786
        %v1010 = vunpack.c.h.b16 %v786
        %v1011 = vunpack.c.l.b16 %v787
        %v1012 = vunpack.c.h.b16 %v787
        %v1013 = vunpack.c.l.b16 %v788
        %v1014 = vunpack.c.h.b16 %v788
        %v1015 = vunpack.c.l.b16 %v789
        %v1016 = vunpack.c.h.b16 %v789
        %v1017 = vunpack.c.l.b16 %v790
        %v1018 = vunpack.c.h.b16 %v790
        %v1019 = vunpack.c.l.b16 %v791
        %v1020 = vunpack.c.h.b16 %v791
        %v1021 = vunpack.c.l.b16 %v792
        %v1022 = vunpack.c.h.b16 %v792
        %v1023 = vunpack.c.l.b16 %v793
        %v1024 = vunpack.c.h.b16 %v793
        %v1025 = vunpack.c.l.b16 %v794
        %v1026 = vunpack.c.h.b16 %v794
        %v1027 = vunpack.c.l.b16 %v795
        %v1028 = vunpack.c.h.b16 %v795
        %v1029 = vunpack.c.l.b16 %v796
        %v1030 = vunpack.c.h.b16 %v796
        %v1031 = vunpack.c.l.b16 %v797
        %v1032 = vunpack.c.h.b16 %v797
        %v1033 = vunpack.c.l.b16 %v798
        %v1034 = vunpack.c.h.b16 %v798
        %v1035 = vunpack.c.l.b16 %v799
        %v1036 = vunpack.c.h.b16 %v799
        %v1037 = vunpack.c.l.b16 %v800
        %v1038 = vunpack.c.h.b16 %v800
        %v1039 = vunpack.c.l.b16 %v801
        %v1040 = vunpack.c.h.b16 %v801
        %v1041 = vunpack.c.l.b16 %v802
        %v1042 = vunpack.c.h.b16 %v802
        %v1043 = vunpack.c.l.b16 %v803
        %v1044 = vunpack.c.h.b16 %v803
        %v1045 = vunpack.c.l.b16 %v804
        %v1046 = vunpack.c.h.b16 %v804
        %v1047 = vunpack.c.l.b16 %v805
        %v1048 = vunpack.c.h.b16 %v805
        %v1049 = vunpack.c.l.b16 %v806
        %v1050 = vunpack.c.h.b16 %v806
        %v1051 = vunpack.c.l.b16 %v807
        %v1052 = vunpack.c.h.b16 %v807
        %v1053 = vunpack.c.l.b16 %v808
        %v1054 = vunpack.c.h.b16 %v808
        %v1055 = vunpack.c.l.b16 %v809
        %v1056 = vunpack.c.h.b16 %v809
        %v1057 = vunpack.c.l.b16 %v810
        %v1058 = vunpack.c.h.b16 %v810
        %v1059 = vunpack.c.l.b16 %v811
        %v1060 = vunpack.c.h.b16 %v811
        %v1061 = vunpack.c.l.b16 %v812
        %v1062 = vunpack.c.h.b16 %v812
        %v1063 = vunpack.c.l.b16 %v813
        %v1064 = vunpack.c.h.b16 %v813
        %v1065 = vunpack.c.l.b16 %v814
        %v1066 = vunpack.c.h.b16 %v814
        %v1067 = vunpack.c.l.b16 %v815
        %v1068 = vunpack.c.h.b16 %v815
        %v1069 = vunpack.c.l.b16 %v816
        %v1070 = vunpack.c.h.b16 %v816
        %v1071 = vunpack.c.l.b16 %v817
        %v1072 = vunpack.c.h.b16 %v817
        %v1073 = vunpack.c.l.b16 %v818
        %v1074 = vunpack.c.h.b16 %v818
        %v1075 = vpack.c.b16 %v949, %v947
        %v1076 = vpack.c.b16 %v950, %v948
        %v1077 = vpack.c.b16 %v953, %v951
        %v1078 = vpack.c.b16 %v954, %v952
        %v1079 = vpack.c.b16 %v957, %v955
        %v1080 = vpack.c.b16 %v958, %v956
        %v1081 = vpack.c.b16 %v961, %v959
        %v1082 = vpack.c.b16 %v962, %v960
        %v1083 = vpack.c.b16 %v965, %v963
        %v1084 = vpack.c.b16 %v966, %v964
        %v1085 = vpack.c.b16 %v969, %v967
        %v1086 = vpack.c.b16 %v970, %v968
        %v1087 = vpack.c.b16 %v973, %v971
        %v1088 = vpack.c.b16 %v974, %v972
        %v1089 = vpack.c.b16 %v977, %v975
        %v1090 = vpack.c.b16 %v978, %v976
        %v1091 = vpack.c.b16 %v981, %v979
        %v1092 = vpack.c.b16 %v982, %v980
        %v1093 = vpack.c.b16 %v985, %v983
        %v1094 = vpack.c.b16 %v986, %v984
        %v1095 = vpack.c.b16 %v989, %v987
        %v1096 = vpack.c.b16 %v990, %v988
        %v1097 = vpack.c.b16 %v993, %v991
        %v1098 = vpack.c.b16 %v994, %v992
        %v1099 = vpack.c.b16 %v997, %v995
        %v1100 = vpack.c.b16 %v998, %v996
        %v1101 = vpack.c.b16 %v1001, %v999
        %v1102 = vpack.c.b16 %v1002, %v1000
        %v1103 = vpack.c.b16 %v1005, %v1003
        %v1104 = vpack.c.b16 %v1006, %v1004
        %v1105 = vpack.c.b16 %v1009, %v1007
        %v1106 = vpack.c.b16 %v1010, %v1008
        %v1107 = vpack.c.b16 %v1013, %v1011
        %v1108 = vpack.c.b16 %v1014, %v1012
        %v1109 = vpack.c.b16 %v1017, %v1015
        %v1110 = vpack.c.b16 %v1018, %v1016
        %v1111 = vpack.c.b16 %v1021, %v1019
        %v1112 = vpack.c.b16 %v1022, %v1020
        %v1113 = vpack.c.b16 %v1025, %v1023
        %v1114 = vpack.c.b16 %v1026, %v1024
        %v1115 = vpack.c.b16 %v1029, %v1027
        %v1116 = vpack.c.b16 %v1030, %v1028
        %v1117 = vpack.c.b16 %v1033, %v1031
        %v1118 = vpack.c.b16 %v1034, %v1032
        %v1119 = vpack.c.b16 %v1037, %v1035
        %v1120 = vpack.c.b16 %v1038, %v1036
        %v1121 = vpack.c.b16 %v1041, %v1039
        %v1122 = vpack.c.b16 %v1042, %v1040
        %v1123 = vpack.c.b16 %v1045, %v1043
        %v1124 = vpack.c.b16 %v1046, %v1044
        %v1125 = vpack.c.b16 %v1049, %v1047
        %v1126 = vpack.c.b16 %v1050, %v1048
        %v1127 = vpack.c.b16 %v1053, %v1051
        %v1128 = vpack.c.b16 %v1054, %v1052
        %v1129 = vpack.c.b16 %v1057, %v1055
        %v1130 = vpack.c.b16 %v1058, %v1056
        %v1131 = vpack.c.b16 %v1061, %v1059
        %v1132 = vpack.c.b16 %v1062, %v1060
        %v1133 = vpack.c.b16 %v1065, %v1063
        %v1134 = vpack.c.b16 %v1066, %v1064
        %v1135 = vpack.c.b16 %v1069, %v1067
        %v1136 = vpack.c.b16 %v1070, %v1068
        %v1137 = vpack.c.b16 %v1073, %v1071
        %v1138 = vpack.c.b16 %v1074, %v1072
        %v1267 = vunpack.c.l.b16 %v819
        %v1268 = vunpack.c.h.b16 %v819
        %v1269 = vunpack.c.l.b16 %v820
        %v1270 = vunpack.c.h.b16 %v820
        %v1271 = vunpack.c.l.b16 %v821
        %v1272 = vunpack.c.h.b16 %v821
        %v1273 = vunpack.c.l.b16 %v822
        %v1274 = vunpack.c.h.b16 %v822
        %v1275 = vunpack.c.l.b16 %v823
        %v1276 = vunpack.c.h.b16 %v823
        %v1277 = vunpack.c.l.b16 %v824
        %v1278 = vunpack.c.h.b16 %v824
        %v1279 = vunpack.c.l.b16 %v825
        %v1280 = vunpack.c.h.b16 %v825
        %v1281 = vunpack.c.l.b16 %v826
        %v1282 = vunpack.c.h.b16 %v826
        %v1283 = vunpack.c.l.b16 %v827
        %v1284 = vunpack.c.h.b16 %v827
        %v1285 = vunpack.c.l.b16 %v828
        %v1286 = vunpack.c.h.b16 %v828
        %v1287 = vunpack.c.l.b16 %v829
        %v1288 = vunpack.c.h.b16 %v829
        %v1289 = vunpack.c.l.b16 %v830
        %v1290 = vunpack.c.h.b16 %v830
        %v1291 = vunpack.c.l.b16 %v831
        %v1292 = vunpack.c.h.b16 %v831
        %v1293 = vunpack.c.l.b16 %v832
        %v1294 = vunpack.c.h.b16 %v832
        %v1295 = vunpack.c.l.b16 %v833
        %v1296 = vunpack.c.h.b16 %v833
        %v1297 = vunpack.c.l.b16 %v834
        %v1298 = vunpack.c.h.b16 %v834
        %v1299 = vunpack.c.l.b16 %v835
        %v1300 = vunpack.c.h.b16 %v835
        %v1301 = vunpack.c.l.b16 %v836
        %v1302 = vunpack.c.h.b16 %v836
        %v1303 = vunpack.c.l.b16 %v837
        %v1304 = vunpack.c.h.b16 %v837
        %v1305 = vunpack.c.l.b16 %v838
        %v1306 = vunpack.c.h.b16 %v838
        %v1307 = vunpack.c.l.b16 %v839
        %v1308 = vunpack.c.h.b16 %v839
        %v1309 = vunpack.c.l.b16 %v840
        %v1310 = vunpack.c.h.b16 %v840
        %v1311 = vunpack.c.l.b16 %v841
        %v1312 = vunpack.c.h.b16 %v841
        %v1313 = vunpack.c.l.b16 %v842
        %v1314 = vunpack.c.h.b16 %v842
        %v1315 = vunpack.c.l.b16 %v843
        %v1316 = vunpack.c.h.b16 %v843
        %v1317 = vunpack.c.l.b16 %v844
        %v1318 = vunpack.c.h.b16 %v844
        %v1319 = vunpack.c.l.b16 %v845
        %v1320 = vunpack.c.h.b16 %v845
        %v1321 = vunpack.c.l.b16 %v846
        %v1322 = vunpack.c.h.b16 %v846
        %v1323 = vunpack.c.l.b16 %v847
        %v1324 = vunpack.c.h.b16 %v847
        %v1325 = vunpack.c.l.b16 %v848
        %v1326 = vunpack.c.h.b16 %v848
        %v1327 = vunpack.c.l.b16 %v849
        %v1328 = vunpack.c.h.b16 %v849
        %v1329 = vunpack.c.l.b16 %v850
        %v1330 = vunpack.c.h.b16 %v850
        %v1331 = vunpack.c.l.b16 %v851
        %v1332 = vunpack.c.h.b16 %v851
        %v1333 = vunpack.c.l.b16 %v852
        %v1334 = vunpack.c.h.b16 %v852
        %v1335 = vunpack.c.l.b16 %v853
        %v1336 = vunpack.c.h.b16 %v853
        %v1337 = vunpack.c.l.b16 %v854
        %v1338 = vunpack.c.h.b16 %v854
        %v1339 = vunpack.c.l.b16 %v855
        %v1340 = vunpack.c.h.b16 %v855
        %v1341 = vunpack.c.l.b16 %v856
        %v1342 = vunpack.c.h.b16 %v856
        %v1343 = vunpack.c.l.b16 %v857
        %v1344 = vunpack.c.h.b16 %v857
        %v1345 = vunpack.c.l.b16 %v858
        %v1346 = vunpack.c.h.b16 %v858
        %v1347 = vunpack.c.l.b16 %v859
        %v1348 = vunpack.c.h.b16 %v859
        %v1349 = vunpack.c.l.b16 %v860
        %v1350 = vunpack.c.h.b16 %v860
        %v1351 = vunpack.c.l.b16 %v861
        %v1352 = vunpack.c.h.b16 %v861
        %v1353 = vunpack.c.l.b16 %v862
        %v1354 = vunpack.c.h.b16 %v862
        %v1355 = vunpack.c.l.b16 %v863
        %v1356 = vunpack.c.h.b16 %v863
        %v1357 = vunpack.c.l.b16 %v864
        %v1358 = vunpack.c.h.b16 %v864
        %v1359 = vunpack.c.l.b16 %v865
        %v1360 = vunpack.c.h.b16 %v865
        %v1361 = vunpack.c.l.b16 %v866
        %v1362 = vunpack.c.h.b16 %v866
        %v1363 = vunpack.c.l.b16 %v867
        %v1364 = vunpack.c.h.b16 %v867
        %v1365 = vunpack.c.l.b16 %v868
        %v1366 = vunpack.c.h.b16 %v868
        %v1367 = vunpack.c.l.b16 %v869
        %v1368 = vunpack.c.h.b16 %v869
        %v1369 = vunpack.c.l.b16 %v870
        %v1370 = vunpack.c.h.b16 %v870
        %v1371 = vunpack.c.l.b16 %v871
        %v1372 = vunpack.c.h.b16 %v871
        %v1373 = vunpack.c.l.b16 %v872
        %v1374 = vunpack.c.h.b16 %v872
        %v1375 = vunpack.c.l.b16 %v873
        %v1376 = vunpack.c.h.b16 %v873
        %v1377 = vunpack.c.l.b16 %v874
        %v1378 = vunpack.c.h.b16 %v874
        %v1379 = vunpack.c.l.b16 %v875
        %v1380 = vunpack.c.h.b16 %v875
        %v1381 = vunpack.c.l.b16 %v876
        %v1382 = vunpack.c.h.b16 %v876
        %v1383 = vunpack.c.l.b16 %v877
        %v1384 = vunpack.c.h.b16 %v877
        %v1385 = vunpack.c.l.b16 %v878
        %v1386 = vunpack.c.h.b16 %v878
        %v1387 = vunpack.c.l.b16 %v879
        %v1388 = vunpack.c.h.b16 %v879
        %v1389 = vunpack.c.l.b16 %v880
        %v1390 = vunpack.c.h.b16 %v880
        %v1391 = vunpack.c.l.b16 %v881
        %v1392 = vunpack.c.h.b16 %v881
        %v1393 = vunpack.c.l.b16 %v882
        %v1394 = vunpack.c.h.b16 %v882
        %v1395 = vpack.c.b16 %v1271, %v1267
        %v1396 = vpack.c.b16 %v1272, %v1268
        %v1397 = vpack.c.b16 %v1273, %v1269
        %v1398 = vpack.c.b16 %v1274, %v1270
        %v1399 = vpack.c.b16 %v1279, %v1275
        %v1400 = vpack.c.b16 %v1280, %v1276
        %v1401 = vpack.c.b16 %v1281, %v1277
        %v1402 = vpack.c.b16 %v1282, %v1278
        %v1403 = vpack.c.b16 %v1287, %v1283
        %v1404 = vpack.c.b16 %v1288, %v1284
        %v1405 = vpack.c.b16 %v1289, %v1285
        %v1406 = vpack.c.b16 %v1290, %v1286
        %v1407 = vpack.c.b16 %v1295, %v1291
        %v1408 = vpack.c.b16 %v1296, %v1292
        %v1409 = vpack.c.b16 %v1297, %v1293
        %v1410 = vpack.c.b16 %v1298, %v1294
        %v1411 = vpack.c.b16 %v1303, %v1299
        %v1412 = vpack.c.b16 %v1304, %v1300
        %v1413 = vpack.c.b16 %v1305, %v1301
        %v1414 = vpack.c.b16 %v1306, %v1302
        %v1415 = vpack.c.b16 %v1311, %v1307
        %v1416 = vpack.c.b16 %v1312, %v1308
        %v1417 = vpack.c.b16 %v1313, %v1309
        %v1418 = vpack.c.b16 %v1314, %v1310
        %v1419 = vpack.c.b16 %v1319, %v1315
        %v1420 = vpack.c.b16 %v1320, %v1316
        %v1421 = vpack.c.b16 %v1321, %v1317
        %v1422 = vpack.c.b16 %v1322, %v1318
        %v1423 = vpack.c.b16 %v1327, %v1323
        %v1424 = vpack.c.b16 %v1328, %v1324
        %v1425 = vpack.c.b16 %v1329, %v1325
        %v1426 = vpack.c.b16 %v1330, %v1326
        %v1427 = vpack.c.b16 %v1335, %v1331
        %v1428 = vpack.c.b16 %v1336, %v1332
        %v1429 = vpack.c.b16 %v1337, %v1333
        %v1430 = vpack.c.b16 %v1338, %v1334
        %v1431 = vpack.c.b16 %v1343, %v1339
        %v1432 = vpack.c.b16 %v1344, %v1340
        %v1433 = vpack.c.b16 %v1345, %v1341
        %v1434 = vpack.c.b16 %v1346, %v1342
        %v1435 = vpack.c.b16 %v1351, %v1347
        %v1436 = vpack.c.b16 %v1352, %v1348
        %v1437 = vpack.c.b16 %v1353, %v1349
        %v1438 = vpack.c.b16 %v1354, %v1350
        %v1439 = vpack.c.b16 %v1359, %v1355
        %v1440 = vpack.c.b16 %v1360, %v1356
        %v1441 = vpack.c.b16 %v1361, %v1357
        %v1442 = vpack.c.b16 %v1362, %v1358
        %v1443 = vpack.c.b16 %v1367, %v1363
        %v1444 = vpack.c.b16 %v1368, %v1364
        %v1445 = vpack.c.b16 %v1369, %v1365
        %v1446 = vpack.c.b16 %v1370, %v1366
        %v1447 = vpack.c.b16 %v1375, %v1371
        %v1448 = vpack.c.b16 %v1376, %v1372
        %v1449 = vpack.c.b16 %v1377, %v1373
        %v1450 = vpack.c.b16 %v1378, %v1374
        %v1451 = vpack.c.b16 %v1383, %v1379
        %v1452 = vpack.c.b16 %v1384, %v1380
        %v1453 = vpack.c.b16 %v1385, %v1381
        %v1454 = vpack.c.b16 %v1386, %v1382
        %v1455 = vpack.c.b16 %v1391, %v1387
        %v1456 = vpack.c.b16 %v1392, %v1388
        %v1457 = vpack.c.b16 %v1393, %v1389
        %v1458 = vpack.c.b16 %v1394, %v1390
        %1523 = vmatprep.subr.bf16.mxu0 %v1396
        %1524 = vmatpush1.bf16.msra.mxu0 %v1395
        %1525 = vmatprep.subr.bf16.mxu0 %v1400
        %1526 = vmatpush1.bf16.msra.mxu0 %v1399
        %1527 = vmatprep.subr.bf16.mxu0 %v1404
        %1528 = vmatpush1.bf16.msra.mxu0 %v1403
        %1529 = vmatprep.subr.bf16.mxu0 %v1408
        %1530 = vmatpush1.bf16.msra.mxu0 %v1407
        %1531 = vmatprep.subr.bf16.mxu0 %v1412
        %1532 = vmatpush1.bf16.msra.mxu0 %v1411
        %1533 = vmatprep.subr.bf16.mxu0 %v1416
        %1534 = vmatpush1.bf16.msra.mxu0 %v1415
        %1535 = vmatprep.subr.bf16.mxu0 %v1420
        %1536 = vmatpush1.bf16.msra.mxu0 %v1419
        %1537 = vmatprep.subr.bf16.mxu0 %v1424
        %1538 = vmatpush1.bf16.msra.mxu0 %v1423
        %1539 = vmatprep.subr.bf16.mxu0 %v1428
        %1540 = vmatpush1.bf16.msra.mxu0 %v1427
        %1541 = vmatprep.subr.bf16.mxu0 %v1432
        %1542 = vmatpush1.bf16.msra.mxu0 %v1431
        %1543 = vmatprep.subr.bf16.mxu0 %v1436
        %1544 = vmatpush1.bf16.msra.mxu0 %v1435
        %1545 = vmatprep.subr.bf16.mxu0 %v1440
        %1546 = vmatpush1.bf16.msra.mxu0 %v1439
        %1547 = vmatprep.subr.bf16.mxu0 %v1444
        %1548 = vmatpush1.bf16.msra.mxu0 %v1443
        %1549 = vmatprep.subr.bf16.mxu0 %v1448
        %1550 = vmatpush1.bf16.msra.mxu0 %v1447
        %1551 = vmatprep.subr.bf16.mxu0 %v1452
        %1552 = vmatpush1.bf16.msra.mxu0 %v1451
        %1553 = vmatprep.subr.bf16.mxu0 %v1456
        %1554 = vmatpush1.bf16.msra.mxu0 %v1455
        %1555 = vmatprep.mubr.bf16.mxu0 %v1076
        %1556 = vmatmul.mubr.bf16.gmra.mrb[0].mxu0 %v1075
        %v1557 = vpop.f32.mrb[0].mxu0
        %v1558 = vadd.f32 0.0, %v1557
        %v1559 = vpop.f32.mrb[0].mxu0
        %v1560 = vadd.f32 0.0, %v1559
        %v1561 = vpop.f32.mrb[0].mxu0
        %v1562 = vadd.f32 0.0, %v1561
        %v1563 = vpop.f32.mrb[0].mxu0
        %v1564 = vadd.f32 0.0, %v1563
        %1565 = vmatprep.mubr.bf16.mxu0 %v1078
        %1566 = vmatmul.mubr.bf16.gmra.mrb[0].mxu0 %v1077
        %v1567 = vpop.f32.mrb[0].mxu0
        %v1568 = vadd.f32 0.0, %v1567
        %v1569 = vpop.f32.mrb[0].mxu0
        %v1570 = vadd.f32 0.0, %v1569
        %v1571 = vpop.f32.mrb[0].mxu0
        %v1572 = vadd.f32 0.0, %v1571
        %v1573 = vpop.f32.mrb[0].mxu0
        %v1574 = vadd.f32 0.0, %v1573
        %1575 = vmatprep.mubr.bf16.mxu0 %v1080
        %1576 = vmatmul.mubr.bf16.gmra.mrb[0].mxu0 %v1079
        %v1577 = vpop.f32.mrb[0].mxu0
        %v1578 = vadd.f32 0.0, %v1577
        %v1579 = vpop.f32.mrb[0].mxu0
        %v1580 = vadd.f32 0.0, %v1579
        %v1581 = vpop.f32.mrb[0].mxu0
        %v1582 = vadd.f32 0.0, %v1581
        %v1583 = vpop.f32.mrb[0].mxu0
        %v1584 = vadd.f32 0.0, %v1583
        %1585 = vmatprep.mubr.bf16.mxu0 %v1082
        %1586 = vmatmul.mubr.bf16.gmra.mrb[0].mxu0 %v1081
        %v1587 = vpop.f32.mrb[0].mxu0
        %v1588 = vadd.f32 0.0, %v1587
        %v1589 = vpop.f32.mrb[0].mxu0
        %v1590 = vadd.f32 0.0, %v1589
        %v1591 = vpop.f32.mrb[0].mxu0
        %v1592 = vadd.f32 0.0, %v1591
        %v1593 = vpop.f32.mrb[0].mxu0
        %v1594 = vadd.f32 0.0, %v1593
        %1595 = vmatprep.mubr.bf16.mxu0 %v1084
        %1596 = vmatmul.mubr.bf16.gmra.mrb[0].mxu0 %v1083
        %v1597 = vpop.f32.mrb[0].mxu0
        %v1598 = vadd.f32 0.0, %v1597
        %v1599 = vpop.f32.mrb[0].mxu0
        %v1600 = vadd.f32 0.0, %v1599
        %v1601 = vpop.f32.mrb[0].mxu0
        %v1602 = vadd.f32 0.0, %v1601
        %v1603 = vpop.f32.mrb[0].mxu0
        %v1604 = vadd.f32 0.0, %v1603
        %1605 = vmatprep.mubr.bf16.mxu0 %v1086
        %1606 = vmatmul.mubr.bf16.gmra.mrb[0].mxu0 %v1085
        %v1607 = vpop.f32.mrb[0].mxu0
        %v1608 = vadd.f32 0.0, %v1607
        %v1609 = vpop.f32.mrb[0].mxu0
        %v1610 = vadd.f32 0.0, %v1609
        %v1611 = vpop.f32.mrb[0].mxu0
        %v1612 = vadd.f32 0.0, %v1611
        %v1613 = vpop.f32.mrb[0].mxu0
        %v1614 = vadd.f32 0.0, %v1613
        %1615 = vmatprep.mubr.bf16.mxu0 %v1088
        %1616 = vmatmul.mubr.bf16.gmra.mrb[0].mxu0 %v1087
        %v1617 = vpop.f32.mrb[0].mxu0
        %v1618 = vadd.f32 0.0, %v1617
        %v1619 = vpop.f32.mrb[0].mxu0
        %v1620 = vadd.f32 0.0, %v1619
        %v1621 = vpop.f32.mrb[0].mxu0
        %v1622 = vadd.f32 0.0, %v1621
        %v1623 = vpop.f32.mrb[0].mxu0
        %v1624 = vadd.f32 0.0, %v1623
        %1625 = vmatprep.mubr.bf16.mxu0 %v1090
        %1626 = vmatmul.mubr.bf16.gmra.mrb[0].mxu0 %v1089
        %v1627 = vpop.f32.mrb[0].mxu0
        %v1628 = vadd.f32 0.0, %v1627
        %v1629 = vpop.f32.mrb[0].mxu0
        %v1630 = vadd.f32 0.0, %v1629
        %v1631 = vpop.f32.mrb[0].mxu0
        %v1632 = vadd.f32 0.0, %v1631
        %v1633 = vpop.f32.mrb[0].mxu0
        %v1634 = vadd.f32 0.0, %v1633
        %1635 = vmatprep.mubr.bf16.mxu0 %v1092
        %1636 = vmatmul.mubr.bf16.gmra.mrb[0].mxu0 %v1091
        %v1637 = vpop.f32.mrb[0].mxu0
        %v1638 = vadd.f32 0.0, %v1637
        %v1639 = vpop.f32.mrb[0].mxu0
        %v1640 = vadd.f32 0.0, %v1639
        %v1641 = vpop.f32.mrb[0].mxu0
        %v1642 = vadd.f32 0.0, %v1641
        %v1643 = vpop.f32.mrb[0].mxu0
        %v1644 = vadd.f32 0.0, %v1643
        %1645 = vmatprep.mubr.bf16.mxu0 %v1094
        %1646 = vmatmul.mubr.bf16.gmra.mrb[0].mxu0 %v1093
        %v1647 = vpop.f32.mrb[0].mxu0
        %v1648 = vadd.f32 0.0, %v1647
        %v1649 = vpop.f32.mrb[0].mxu0
        %v1650 = vadd.f32 0.0, %v1649
        %v1651 = vpop.f32.mrb[0].mxu0
        %v1652 = vadd.f32 0.0, %v1651
        %v1653 = vpop.f32.mrb[0].mxu0
        %v1654 = vadd.f32 0.0, %v1653
        %1655 = vmatprep.mubr.bf16.mxu0 %v1096
        %1656 = vmatmul.mubr.bf16.gmra.mrb[0].mxu0 %v1095
        %v1657 = vpop.f32.mrb[0].mxu0
        %v1658 = vadd.f32 0.0, %v1657
        %v1659 = vpop.f32.mrb[0].mxu0
        %v1660 = vadd.f32 0.0, %v1659
        %v1661 = vpop.f32.mrb[0].mxu0
        %v1662 = vadd.f32 0.0, %v1661
        %v1663 = vpop.f32.mrb[0].mxu0
        %v1664 = vadd.f32 0.0, %v1663
        %1665 = vmatprep.mubr.bf16.mxu0 %v1098
        %1666 = vmatmul.mubr.bf16.gmra.mrb[0].mxu0 %v1097
        %v1667 = vpop.f32.mrb[0].mxu0
        %v1668 = vadd.f32 0.0, %v1667
        %v1669 = vpop.f32.mrb[0].mxu0
        %v1670 = vadd.f32 0.0, %v1669
        %v1671 = vpop.f32.mrb[0].mxu0
        %v1672 = vadd.f32 0.0, %v1671
        %v1673 = vpop.f32.mrb[0].mxu0
        %v1674 = vadd.f32 0.0, %v1673
        %1675 = vmatprep.mubr.bf16.mxu0 %v1100
        %1676 = vmatmul.mubr.bf16.gmra.mrb[0].mxu0 %v1099
        %v1677 = vpop.f32.mrb[0].mxu0
        %v1678 = vadd.f32 0.0, %v1677
        %v1679 = vpop.f32.mrb[0].mxu0
        %v1680 = vadd.f32 0.0, %v1679
        %v1681 = vpop.f32.mrb[0].mxu0
        %v1682 = vadd.f32 0.0, %v1681
        %v1683 = vpop.f32.mrb[0].mxu0
        %v1684 = vadd.f32 0.0, %v1683
        %1685 = vmatprep.mubr.bf16.mxu0 %v1102
        %1686 = vmatmul.mubr.bf16.gmra.mrb[0].mxu0 %v1101
        %v1687 = vpop.f32.mrb[0].mxu0
        %v1688 = vadd.f32 0.0, %v1687
        %v1689 = vpop.f32.mrb[0].mxu0
        %v1690 = vadd.f32 0.0, %v1689
        %v1691 = vpop.f32.mrb[0].mxu0
        %v1692 = vadd.f32 0.0, %v1691
        %v1693 = vpop.f32.mrb[0].mxu0
        %v1694 = vadd.f32 0.0, %v1693
        %1695 = vmatprep.mubr.bf16.mxu0 %v1104
        %1696 = vmatmul.mubr.bf16.gmra.mrb[0].mxu0 %v1103
        %v1697 = vpop.f32.mrb[0].mxu0
        %v1698 = vadd.f32 0.0, %v1697
        %v1699 = vpop.f32.mrb[0].mxu0
        %v1700 = vadd.f32 0.0, %v1699
        %v1701 = vpop.f32.mrb[0].mxu0
        %v1702 = vadd.f32 0.0, %v1701
        %v1703 = vpop.f32.mrb[0].mxu0
        %v1704 = vadd.f32 0.0, %v1703
        %1705 = vmatprep.mubr.bf16.mxu0 %v1106
        %1706 = vmatmul.mubr.bf16.gmra.mrb[0].mxu0 %v1105
        %v1707 = vpop.f32.mrb[0].mxu0
        %v1708 = vadd.f32 0.0, %v1707
        %v1709 = vpop.f32.mrb[0].mxu0
        %v1710 = vadd.f32 0.0, %v1709
        %v1711 = vpop.f32.mrb[0].mxu0
        %v1712 = vadd.f32 0.0, %v1711
        %v1713 = vpop.f32.mrb[0].mxu0
        %v1714 = vadd.f32 0.0, %v1713
        %1715 = vmatprep.mubr.bf16.mxu0 %v1108
        %1716 = vmatmul.mubr.bf16.gmra.mrb[0].mxu0 %v1107
        %v1717 = vpop.f32.mrb[0].mxu0
        %v1718 = vadd.f32 0.0, %v1717
        %v1719 = vpop.f32.mrb[0].mxu0
        %v1720 = vadd.f32 0.0, %v1719
        %v1721 = vpop.f32.mrb[0].mxu0
        %v1722 = vadd.f32 0.0, %v1721
        %v1723 = vpop.f32.mrb[0].mxu0
        %v1724 = vadd.f32 0.0, %v1723
        %1725 = vmatprep.mubr.bf16.mxu0 %v1110
        %1726 = vmatmul.mubr.bf16.gmra.mrb[0].mxu0 %v1109
        %v1727 = vpop.f32.mrb[0].mxu0
        %v1728 = vadd.f32 0.0, %v1727
        %v1729 = vpop.f32.mrb[0].mxu0
        %v1730 = vadd.f32 0.0, %v1729
        %v1731 = vpop.f32.mrb[0].mxu0
        %v1732 = vadd.f32 0.0, %v1731
        %v1733 = vpop.f32.mrb[0].mxu0
        %v1734 = vadd.f32 0.0, %v1733
        %1735 = vmatprep.mubr.bf16.mxu0 %v1112
        %1736 = vmatmul.mubr.bf16.gmra.mrb[0].mxu0 %v1111
        %v1737 = vpop.f32.mrb[0].mxu0
        %v1738 = vadd.f32 0.0, %v1737
        %v1739 = vpop.f32.mrb[0].mxu0
        %v1740 = vadd.f32 0.0, %v1739
        %v1741 = vpop.f32.mrb[0].mxu0
        %v1742 = vadd.f32 0.0, %v1741
        %v1743 = vpop.f32.mrb[0].mxu0
        %v1744 = vadd.f32 0.0, %v1743
        %1745 = vmatprep.mubr.bf16.mxu0 %v1114
        %1746 = vmatmul.mubr.bf16.gmra.mrb[0].mxu0 %v1113
        %v1747 = vpop.f32.mrb[0].mxu0
        %v1748 = vadd.f32 0.0, %v1747
        %v1749 = vpop.f32.mrb[0].mxu0
        %v1750 = vadd.f32 0.0, %v1749
        %v1751 = vpop.f32.mrb[0].mxu0
        %v1752 = vadd.f32 0.0, %v1751
        %v1753 = vpop.f32.mrb[0].mxu0
        %v1754 = vadd.f32 0.0, %v1753
        %1755 = vmatprep.mubr.bf16.mxu0 %v1116
        %1756 = vmatmul.mubr.bf16.gmra.mrb[0].mxu0 %v1115
        %v1757 = vpop.f32.mrb[0].mxu0
        %v1758 = vadd.f32 0.0, %v1757
        %v1759 = vpop.f32.mrb[0].mxu0
        %v1760 = vadd.f32 0.0, %v1759
        %v1761 = vpop.f32.mrb[0].mxu0
        %v1762 = vadd.f32 0.0, %v1761
        %v1763 = vpop.f32.mrb[0].mxu0
        %v1764 = vadd.f32 0.0, %v1763
        %1765 = vmatprep.mubr.bf16.mxu0 %v1118
        %1766 = vmatmul.mubr.bf16.gmra.mrb[0].mxu0 %v1117
        %v1767 = vpop.f32.mrb[0].mxu0
        %v1768 = vadd.f32 0.0, %v1767
        %v1769 = vpop.f32.mrb[0].mxu0
        %v1770 = vadd.f32 0.0, %v1769
        %v1771 = vpop.f32.mrb[0].mxu0
        %v1772 = vadd.f32 0.0, %v1771
        %v1773 = vpop.f32.mrb[0].mxu0
        %v1774 = vadd.f32 0.0, %v1773
        %1775 = vmatprep.mubr.bf16.mxu0 %v1120
        %1776 = vmatmul.mubr.bf16.gmra.mrb[0].mxu0 %v1119
        %v1777 = vpop.f32.mrb[0].mxu0
        %v1778 = vadd.f32 0.0, %v1777
        %v1779 = vpop.f32.mrb[0].mxu0
        %v1780 = vadd.f32 0.0, %v1779
        %v1781 = vpop.f32.mrb[0].mxu0
        %v1782 = vadd.f32 0.0, %v1781
        %v1783 = vpop.f32.mrb[0].mxu0
        %v1784 = vadd.f32 0.0, %v1783
        %1785 = vmatprep.mubr.bf16.mxu0 %v1122
        %1786 = vmatmul.mubr.bf16.gmra.mrb[0].mxu0 %v1121
        %v1787 = vpop.f32.mrb[0].mxu0
        %v1788 = vadd.f32 0.0, %v1787
        %v1789 = vpop.f32.mrb[0].mxu0
        %v1790 = vadd.f32 0.0, %v1789
        %v1791 = vpop.f32.mrb[0].mxu0
        %v1792 = vadd.f32 0.0, %v1791
        %v1793 = vpop.f32.mrb[0].mxu0
        %v1794 = vadd.f32 0.0, %v1793
        %1795 = vmatprep.mubr.bf16.mxu0 %v1124
        %1796 = vmatmul.mubr.bf16.gmra.mrb[0].mxu0 %v1123
        %v1797 = vpop.f32.mrb[0].mxu0
        %v1798 = vadd.f32 0.0, %v1797
        %v1799 = vpop.f32.mrb[0].mxu0
        %v1800 = vadd.f32 0.0, %v1799
        %v1801 = vpop.f32.mrb[0].mxu0
        %v1802 = vadd.f32 0.0, %v1801
        %v1803 = vpop.f32.mrb[0].mxu0
        %v1804 = vadd.f32 0.0, %v1803
        %1805 = vmatprep.mubr.bf16.mxu0 %v1126
        %1806 = vmatmul.mubr.bf16.gmra.mrb[0].mxu0 %v1125
        %v1807 = vpop.f32.mrb[0].mxu0
        %v1808 = vadd.f32 0.0, %v1807
        %v1809 = vpop.f32.mrb[0].mxu0
        %v1810 = vadd.f32 0.0, %v1809
        %v1811 = vpop.f32.mrb[0].mxu0
        %v1812 = vadd.f32 0.0, %v1811
        %v1813 = vpop.f32.mrb[0].mxu0
        %v1814 = vadd.f32 0.0, %v1813
        %1815 = vmatprep.mubr.bf16.mxu0 %v1128
        %1816 = vmatmul.mubr.bf16.gmra.mrb[0].mxu0 %v1127
        %v1817 = vpop.f32.mrb[0].mxu0
        %v1818 = vadd.f32 0.0, %v1817
        %v1819 = vpop.f32.mrb[0].mxu0
        %v1820 = vadd.f32 0.0, %v1819
        %v1821 = vpop.f32.mrb[0].mxu0
        %v1822 = vadd.f32 0.0, %v1821
        %v1823 = vpop.f32.mrb[0].mxu0
        %v1824 = vadd.f32 0.0, %v1823
        %1825 = vmatprep.mubr.bf16.mxu0 %v1130
        %1826 = vmatmul.mubr.bf16.gmra.mrb[0].mxu0 %v1129
        %v1827 = vpop.f32.mrb[0].mxu0
        %v1828 = vadd.f32 0.0, %v1827
        %v1829 = vpop.f32.mrb[0].mxu0
        %v1830 = vadd.f32 0.0, %v1829
        %v1831 = vpop.f32.mrb[0].mxu0
        %v1832 = vadd.f32 0.0, %v1831
        %v1833 = vpop.f32.mrb[0].mxu0
        %v1834 = vadd.f32 0.0, %v1833
        %1835 = vmatprep.mubr.bf16.mxu0 %v1132
        %1836 = vmatmul.mubr.bf16.gmra.mrb[0].mxu0 %v1131
        %v1837 = vpop.f32.mrb[0].mxu0
        %v1838 = vadd.f32 0.0, %v1837
        %v1839 = vpop.f32.mrb[0].mxu0
        %v1840 = vadd.f32 0.0, %v1839
        %v1841 = vpop.f32.mrb[0].mxu0
        %v1842 = vadd.f32 0.0, %v1841
        %v1843 = vpop.f32.mrb[0].mxu0
        %v1844 = vadd.f32 0.0, %v1843
        %1845 = vmatprep.mubr.bf16.mxu0 %v1134
        %1846 = vmatmul.mubr.bf16.gmra.mrb[0].mxu0 %v1133
        %v1847 = vpop.f32.mrb[0].mxu0
        %v1848 = vadd.f32 0.0, %v1847
        %v1849 = vpop.f32.mrb[0].mxu0
        %v1850 = vadd.f32 0.0, %v1849
        %v1851 = vpop.f32.mrb[0].mxu0
        %v1852 = vadd.f32 0.0, %v1851
        %v1853 = vpop.f32.mrb[0].mxu0
        %v1854 = vadd.f32 0.0, %v1853
        %1855 = vmatprep.mubr.bf16.mxu0 %v1136
        %1856 = vmatmul.mubr.bf16.gmra.mrb[0].mxu0 %v1135
        %v1857 = vpop.f32.mrb[0].mxu0
        %v1858 = vadd.f32 0.0, %v1857
        %v1859 = vpop.f32.mrb[0].mxu0
        %v1860 = vadd.f32 0.0, %v1859
        %v1861 = vpop.f32.mrb[0].mxu0
        %v1862 = vadd.f32 0.0, %v1861
        %v1863 = vpop.f32.mrb[0].mxu0
        %v1864 = vadd.f32 0.0, %v1863
        %1865 = vmatprep.mubr.bf16.mxu0 %v1138
        %1866 = vmatmul.mubr.bf16.gmra.mrb[0].mxu0 %v1137
        %v1867 = vpop.f32.mrb[0].mxu0
        %v1868 = vadd.f32 0.0, %v1867
        %v1869 = vpop.f32.mrb[0].mxu0
        %v1870 = vadd.f32 0.0, %v1869
        %v1871 = vpop.f32.mrb[0].mxu0
        %v1872 = vadd.f32 0.0, %v1871
        %v1873 = vpop.f32.mrb[0].mxu0
        %v1874 = vadd.f32 0.0, %v1873
        %1875 = vdwg.mxu0
        %1876 = vmatprep.subr.bf16.mxu0 %v1398
        %1877 = vmatpush1.bf16.msra.mxu0 %v1397
        %1878 = vmatprep.subr.bf16.mxu0 %v1402
        %1879 = vmatpush1.bf16.msra.mxu0 %v1401
        %1880 = vmatprep.subr.bf16.mxu0 %v1406
        %1881 = vmatpush1.bf16.msra.mxu0 %v1405
        %1882 = vmatprep.subr.bf16.mxu0 %v1410
        %1883 = vmatpush1.bf16.msra.mxu0 %v1409
        %1884 = vmatprep.subr.bf16.mxu0 %v1414
        %1885 = vmatpush1.bf16.msra.mxu0 %v1413
        %1886 = vmatprep.subr.bf16.mxu0 %v1418
        %1887 = vmatpush1.bf16.msra.mxu0 %v1417
        %1888 = vmatprep.subr.bf16.mxu0 %v1422
        %1889 = vmatpush1.bf16.msra.mxu0 %v1421
        %1890 = vmatprep.subr.bf16.mxu0 %v1426
        %1891 = vmatpush1.bf16.msra.mxu0 %v1425
        %1892 = vmatprep.subr.bf16.mxu0 %v1430
        %1893 = vmatpush1.bf16.msra.mxu0 %v1429
        %1894 = vmatprep.subr.bf16.mxu0 %v1434
        %1895 = vmatpush1.bf16.msra.mxu0 %v1433
        %1896 = vmatprep.subr.bf16.mxu0 %v1438
        %1897 = vmatpush1.bf16.msra.mxu0 %v1437
        %1898 = vmatprep.subr.bf16.mxu0 %v1442
        %1899 = vmatpush1.bf16.msra.mxu0 %v1441
        %1900 = vmatprep.subr.bf16.mxu0 %v1446
        %1901 = vmatpush1.bf16.msra.mxu0 %v1445
        %1902 = vmatprep.subr.bf16.mxu0 %v1450
        %1903 = vmatpush1.bf16.msra.mxu0 %v1449
        %1904 = vmatprep.subr.bf16.mxu0 %v1454
        %1905 = vmatpush1.bf16.msra.mxu0 %v1453
        %1906 = vmatprep.subr.bf16.mxu0 %v1458
        %1907 = vmatpush1.bf16.msra.mxu0 %v1457
        %1908 = vmatprep.mubr.bf16.mxu0 %v1076
        %1909 = vmatmul.mubr.bf16.gmra.mrb[0].mxu0 %v1075
        %v1910 = vpop.f32.mrb[0].mxu0
        %v1911 = vadd.f32 0.0, %v1910
        %v1912 = vpop.f32.mrb[0].mxu0
        %v1913 = vadd.f32 0.0, %v1912
        %v1914 = vpop.f32.mrb[0].mxu0
        %v1915 = vadd.f32 0.0, %v1914
        %v1916 = vpop.f32.mrb[0].mxu0
        %v1917 = vadd.f32 0.0, %v1916
        %1918 = vmatprep.mubr.bf16.mxu0 %v1078
        %1919 = vmatmul.mubr.bf16.gmra.mrb[0].mxu0 %v1077
        %v1920 = vpop.f32.mrb[0].mxu0
        %v1921 = vadd.f32 0.0, %v1920
        %v1922 = vpop.f32.mrb[0].mxu0
        %v1923 = vadd.f32 0.0, %v1922
        %v1924 = vpop.f32.mrb[0].mxu0
        %v1925 = vadd.f32 0.0, %v1924
        %v1926 = vpop.f32.mrb[0].mxu0
        %v1927 = vadd.f32 0.0, %v1926
        %1928 = vmatprep.mubr.bf16.mxu0 %v1080
        %1929 = vmatmul.mubr.bf16.gmra.mrb[0].mxu0 %v1079
        %v1930 = vpop.f32.mrb[0].mxu0
        %v1931 = vadd.f32 0.0, %v1930
        %v1932 = vpop.f32.mrb[0].mxu0
        %v1933 = vadd.f32 0.0, %v1932
        %v1934 = vpop.f32.mrb[0].mxu0
        %v1935 = vadd.f32 0.0, %v1934
        %v1936 = vpop.f32.mrb[0].mxu0
        %v1937 = vadd.f32 0.0, %v1936
        %1938 = vmatprep.mubr.bf16.mxu0 %v1082
        %1939 = vmatmul.mubr.bf16.gmra.mrb[0].mxu0 %v1081
        %v1940 = vpop.f32.mrb[0].mxu0
        %v1941 = vadd.f32 0.0, %v1940
        %v1942 = vpop.f32.mrb[0].mxu0
        %v1943 = vadd.f32 0.0, %v1942
        %v1944 = vpop.f32.mrb[0].mxu0
        %v1945 = vadd.f32 0.0, %v1944
        %v1946 = vpop.f32.mrb[0].mxu0
        %v1947 = vadd.f32 0.0, %v1946
        %1948 = vmatprep.mubr.bf16.mxu0 %v1084
        %1949 = vmatmul.mubr.bf16.gmra.mrb[0].mxu0 %v1083
        %v1950 = vpop.f32.mrb[0].mxu0
        %v1951 = vadd.f32 0.0, %v1950
        %v1952 = vpop.f32.mrb[0].mxu0
        %v1953 = vadd.f32 0.0, %v1952
        %v1954 = vpop.f32.mrb[0].mxu0
        %v1955 = vadd.f32 0.0, %v1954
        %v1956 = vpop.f32.mrb[0].mxu0
        %v1957 = vadd.f32 0.0, %v1956
        %1958 = vmatprep.mubr.bf16.mxu0 %v1086
        %1959 = vmatmul.mubr.bf16.gmra.mrb[0].mxu0 %v1085
        %v1960 = vpop.f32.mrb[0].mxu0
        %v1961 = vadd.f32 0.0, %v1960
        %v1962 = vpop.f32.mrb[0].mxu0
        %v1963 = vadd.f32 0.0, %v1962
        %v1964 = vpop.f32.mrb[0].mxu0
        %v1965 = vadd.f32 0.0, %v1964
        %v1966 = vpop.f32.mrb[0].mxu0
        %v1967 = vadd.f32 0.0, %v1966
        %1968 = vmatprep.mubr.bf16.mxu0 %v1088
        %1969 = vmatmul.mubr.bf16.gmra.mrb[0].mxu0 %v1087
        %v1970 = vpop.f32.mrb[0].mxu0
        %v1971 = vadd.f32 0.0, %v1970
        %v1972 = vpop.f32.mrb[0].mxu0
        %v1973 = vadd.f32 0.0, %v1972
        %v1974 = vpop.f32.mrb[0].mxu0
        %v1975 = vadd.f32 0.0, %v1974
        %v1976 = vpop.f32.mrb[0].mxu0
        %v1977 = vadd.f32 0.0, %v1976
        %1978 = vmatprep.mubr.bf16.mxu0 %v1090
        %1979 = vmatmul.mubr.bf16.gmra.mrb[0].mxu0 %v1089
        %v1980 = vpop.f32.mrb[0].mxu0
        %v1981 = vadd.f32 0.0, %v1980
        %v1982 = vpop.f32.mrb[0].mxu0
        %v1983 = vadd.f32 0.0, %v1982
        %v1984 = vpop.f32.mrb[0].mxu0
        %v1985 = vadd.f32 0.0, %v1984
        %v1986 = vpop.f32.mrb[0].mxu0
        %v1987 = vadd.f32 0.0, %v1986
        %1988 = vmatprep.mubr.bf16.mxu0 %v1092
        %1989 = vmatmul.mubr.bf16.gmra.mrb[0].mxu0 %v1091
        %v1990 = vpop.f32.mrb[0].mxu0
        %v1991 = vadd.f32 0.0, %v1990
        %v1992 = vpop.f32.mrb[0].mxu0
        %v1993 = vadd.f32 0.0, %v1992
        %v1994 = vpop.f32.mrb[0].mxu0
        %v1995 = vadd.f32 0.0, %v1994
        %v1996 = vpop.f32.mrb[0].mxu0
        %v1997 = vadd.f32 0.0, %v1996
        %1998 = vmatprep.mubr.bf16.mxu0 %v1094
        %1999 = vmatmul.mubr.bf16.gmra.mrb[0].mxu0 %v1093
        %v2000 = vpop.f32.mrb[0].mxu0
        %v2001 = vadd.f32 0.0, %v2000
        %v2002 = vpop.f32.mrb[0].mxu0
        %v2003 = vadd.f32 0.0, %v2002
        %v2004 = vpop.f32.mrb[0].mxu0
        %v2005 = vadd.f32 0.0, %v2004
        %v2006 = vpop.f32.mrb[0].mxu0
        %v2007 = vadd.f32 0.0, %v2006
        %2008 = vmatprep.mubr.bf16.mxu0 %v1096
        %2009 = vmatmul.mubr.bf16.gmra.mrb[0].mxu0 %v1095
        %v2010 = vpop.f32.mrb[0].mxu0
        %v2011 = vadd.f32 0.0, %v2010
        %v2012 = vpop.f32.mrb[0].mxu0
        %v2013 = vadd.f32 0.0, %v2012
        %v2014 = vpop.f32.mrb[0].mxu0
        %v2015 = vadd.f32 0.0, %v2014
        %v2016 = vpop.f32.mrb[0].mxu0
        %v2017 = vadd.f32 0.0, %v2016
        %2018 = vmatprep.mubr.bf16.mxu0 %v1098
        %2019 = vmatmul.mubr.bf16.gmra.mrb[0].mxu0 %v1097
        %v2020 = vpop.f32.mrb[0].mxu0
        %v2021 = vadd.f32 0.0, %v2020
        %v2022 = vpop.f32.mrb[0].mxu0
        %v2023 = vadd.f32 0.0, %v2022
        %v2024 = vpop.f32.mrb[0].mxu0
        %v2025 = vadd.f32 0.0, %v2024
        %v2026 = vpop.f32.mrb[0].mxu0
        %v2027 = vadd.f32 0.0, %v2026
        %2028 = vmatprep.mubr.bf16.mxu0 %v1100
        %2029 = vmatmul.mubr.bf16.gmra.mrb[0].mxu0 %v1099
        %v2030 = vpop.f32.mrb[0].mxu0
        %v2031 = vadd.f32 0.0, %v2030
        %v2032 = vpop.f32.mrb[0].mxu0
        %v2033 = vadd.f32 0.0, %v2032
        %v2034 = vpop.f32.mrb[0].mxu0
        %v2035 = vadd.f32 0.0, %v2034
        %v2036 = vpop.f32.mrb[0].mxu0
        %v2037 = vadd.f32 0.0, %v2036
        %2038 = vmatprep.mubr.bf16.mxu0 %v1102
        %2039 = vmatmul.mubr.bf16.gmra.mrb[0].mxu0 %v1101
        %v2040 = vpop.f32.mrb[0].mxu0
        %v2041 = vadd.f32 0.0, %v2040
        %v2042 = vpop.f32.mrb[0].mxu0
        %v2043 = vadd.f32 0.0, %v2042
        %v2044 = vpop.f32.mrb[0].mxu0
        %v2045 = vadd.f32 0.0, %v2044
        %v2046 = vpop.f32.mrb[0].mxu0
        %v2047 = vadd.f32 0.0, %v2046
        %2048 = vmatprep.mubr.bf16.mxu0 %v1104
        %2049 = vmatmul.mubr.bf16.gmra.mrb[0].mxu0 %v1103
        %v2050 = vpop.f32.mrb[0].mxu0
        %v2051 = vadd.f32 0.0, %v2050
        %v2052 = vpop.f32.mrb[0].mxu0
        %v2053 = vadd.f32 0.0, %v2052
        %v2054 = vpop.f32.mrb[0].mxu0
        %v2055 = vadd.f32 0.0, %v2054
        %v2056 = vpop.f32.mrb[0].mxu0
        %v2057 = vadd.f32 0.0, %v2056
        %2058 = vmatprep.mubr.bf16.mxu0 %v1106
        %2059 = vmatmul.mubr.bf16.gmra.mrb[0].mxu0 %v1105
        %v2060 = vpop.f32.mrb[0].mxu0
        %v2061 = vadd.f32 0.0, %v2060
        %v2062 = vpop.f32.mrb[0].mxu0
        %v2063 = vadd.f32 0.0, %v2062
        %v2064 = vpop.f32.mrb[0].mxu0
        %v2065 = vadd.f32 0.0, %v2064
        %v2066 = vpop.f32.mrb[0].mxu0
        %v2067 = vadd.f32 0.0, %v2066
        %2068 = vmatprep.mubr.bf16.mxu0 %v1108
        %2069 = vmatmul.mubr.bf16.gmra.mrb[0].mxu0 %v1107
        %v2070 = vpop.f32.mrb[0].mxu0
        %v2071 = vadd.f32 0.0, %v2070
        %v2072 = vpop.f32.mrb[0].mxu0
        %v2073 = vadd.f32 0.0, %v2072
        %v2074 = vpop.f32.mrb[0].mxu0
        %v2075 = vadd.f32 0.0, %v2074
        %v2076 = vpop.f32.mrb[0].mxu0
        %v2077 = vadd.f32 0.0, %v2076
        %2078 = vmatprep.mubr.bf16.mxu0 %v1110
        %2079 = vmatmul.mubr.bf16.gmra.mrb[0].mxu0 %v1109
        %v2080 = vpop.f32.mrb[0].mxu0
        %v2081 = vadd.f32 0.0, %v2080
        %v2082 = vpop.f32.mrb[0].mxu0
        %v2083 = vadd.f32 0.0, %v2082
        %v2084 = vpop.f32.mrb[0].mxu0
        %v2085 = vadd.f32 0.0, %v2084
        %v2086 = vpop.f32.mrb[0].mxu0
        %v2087 = vadd.f32 0.0, %v2086
        %2088 = vmatprep.mubr.bf16.mxu0 %v1112
        %2089 = vmatmul.mubr.bf16.gmra.mrb[0].mxu0 %v1111
        %v2090 = vpop.f32.mrb[0].mxu0
        %v2091 = vadd.f32 0.0, %v2090
        %v2092 = vpop.f32.mrb[0].mxu0
        %v2093 = vadd.f32 0.0, %v2092
        %v2094 = vpop.f32.mrb[0].mxu0
        %v2095 = vadd.f32 0.0, %v2094
        %v2096 = vpop.f32.mrb[0].mxu0
        %v2097 = vadd.f32 0.0, %v2096
        %2098 = vmatprep.mubr.bf16.mxu0 %v1114
        %2099 = vmatmul.mubr.bf16.gmra.mrb[0].mxu0 %v1113
        %v2100 = vpop.f32.mrb[0].mxu0
        %v2101 = vadd.f32 0.0, %v2100
        %v2102 = vpop.f32.mrb[0].mxu0
        %v2103 = vadd.f32 0.0, %v2102
        %v2104 = vpop.f32.mrb[0].mxu0
        %v2105 = vadd.f32 0.0, %v2104
        %v2106 = vpop.f32.mrb[0].mxu0
        %v2107 = vadd.f32 0.0, %v2106
        %2108 = vmatprep.mubr.bf16.mxu0 %v1116
        %2109 = vmatmul.mubr.bf16.gmra.mrb[0].mxu0 %v1115
        %v2110 = vpop.f32.mrb[0].mxu0
        %v2111 = vadd.f32 0.0, %v2110
        %v2112 = vpop.f32.mrb[0].mxu0
        %v2113 = vadd.f32 0.0, %v2112
        %v2114 = vpop.f32.mrb[0].mxu0
        %v2115 = vadd.f32 0.0, %v2114
        %v2116 = vpop.f32.mrb[0].mxu0
        %v2117 = vadd.f32 0.0, %v2116
        %2118 = vmatprep.mubr.bf16.mxu0 %v1118
        %2119 = vmatmul.mubr.bf16.gmra.mrb[0].mxu0 %v1117
        %v2120 = vpop.f32.mrb[0].mxu0
        %v2121 = vadd.f32 0.0, %v2120
        %v2122 = vpop.f32.mrb[0].mxu0
        %v2123 = vadd.f32 0.0, %v2122
        %v2124 = vpop.f32.mrb[0].mxu0
        %v2125 = vadd.f32 0.0, %v2124
        %v2126 = vpop.f32.mrb[0].mxu0
        %v2127 = vadd.f32 0.0, %v2126
        %2128 = vmatprep.mubr.bf16.mxu0 %v1120
        %2129 = vmatmul.mubr.bf16.gmra.mrb[0].mxu0 %v1119
        %v2130 = vpop.f32.mrb[0].mxu0
        %v2131 = vadd.f32 0.0, %v2130
        %v2132 = vpop.f32.mrb[0].mxu0
        %v2133 = vadd.f32 0.0, %v2132
        %v2134 = vpop.f32.mrb[0].mxu0
        %v2135 = vadd.f32 0.0, %v2134
        %v2136 = vpop.f32.mrb[0].mxu0
        %v2137 = vadd.f32 0.0, %v2136
        %2138 = vmatprep.mubr.bf16.mxu0 %v1122
        %2139 = vmatmul.mubr.bf16.gmra.mrb[0].mxu0 %v1121
        %v2140 = vpop.f32.mrb[0].mxu0
        %v2141 = vadd.f32 0.0, %v2140
        %v2142 = vpop.f32.mrb[0].mxu0
        %v2143 = vadd.f32 0.0, %v2142
        %v2144 = vpop.f32.mrb[0].mxu0
        %v2145 = vadd.f32 0.0, %v2144
        %v2146 = vpop.f32.mrb[0].mxu0
        %v2147 = vadd.f32 0.0, %v2146
        %2148 = vmatprep.mubr.bf16.mxu0 %v1124
        %2149 = vmatmul.mubr.bf16.gmra.mrb[0].mxu0 %v1123
        %v2150 = vpop.f32.mrb[0].mxu0
        %v2151 = vadd.f32 0.0, %v2150
        %v2152 = vpop.f32.mrb[0].mxu0
        %v2153 = vadd.f32 0.0, %v2152
        %v2154 = vpop.f32.mrb[0].mxu0
        %v2155 = vadd.f32 0.0, %v2154
        %v2156 = vpop.f32.mrb[0].mxu0
        %v2157 = vadd.f32 0.0, %v2156
        %2158 = vmatprep.mubr.bf16.mxu0 %v1126
        %2159 = vmatmul.mubr.bf16.gmra.mrb[0].mxu0 %v1125
        %v2160 = vpop.f32.mrb[0].mxu0
        %v2161 = vadd.f32 0.0, %v2160
        %v2162 = vpop.f32.mrb[0].mxu0
        %v2163 = vadd.f32 0.0, %v2162
        %v2164 = vpop.f32.mrb[0].mxu0
        %v2165 = vadd.f32 0.0, %v2164
        %v2166 = vpop.f32.mrb[0].mxu0
        %v2167 = vadd.f32 0.0, %v2166
        %2168 = vmatprep.mubr.bf16.mxu0 %v1128
        %2169 = vmatmul.mubr.bf16.gmra.mrb[0].mxu0 %v1127
        %v2170 = vpop.f32.mrb[0].mxu0
        %v2171 = vadd.f32 0.0, %v2170
        %v2172 = vpop.f32.mrb[0].mxu0
        %v2173 = vadd.f32 0.0, %v2172
        %v2174 = vpop.f32.mrb[0].mxu0
        %v2175 = vadd.f32 0.0, %v2174
        %v2176 = vpop.f32.mrb[0].mxu0
        %v2177 = vadd.f32 0.0, %v2176
        %2178 = vmatprep.mubr.bf16.mxu0 %v1130
        %2179 = vmatmul.mubr.bf16.gmra.mrb[0].mxu0 %v1129
        %v2180 = vpop.f32.mrb[0].mxu0
        %v2181 = vadd.f32 0.0, %v2180
        %v2182 = vpop.f32.mrb[0].mxu0
        %v2183 = vadd.f32 0.0, %v2182
        %v2184 = vpop.f32.mrb[0].mxu0
        %v2185 = vadd.f32 0.0, %v2184
        %v2186 = vpop.f32.mrb[0].mxu0
        %v2187 = vadd.f32 0.0, %v2186
        %2188 = vmatprep.mubr.bf16.mxu0 %v1132
        %2189 = vmatmul.mubr.bf16.gmra.mrb[0].mxu0 %v1131
        %v2190 = vpop.f32.mrb[0].mxu0
        %v2191 = vadd.f32 0.0, %v2190
        %v2192 = vpop.f32.mrb[0].mxu0
        %v2193 = vadd.f32 0.0, %v2192
        %v2194 = vpop.f32.mrb[0].mxu0
        %v2195 = vadd.f32 0.0, %v2194
        %v2196 = vpop.f32.mrb[0].mxu0
        %v2197 = vadd.f32 0.0, %v2196
        %2198 = vmatprep.mubr.bf16.mxu0 %v1134
        %2199 = vmatmul.mubr.bf16.gmra.mrb[0].mxu0 %v1133
        %v2200 = vpop.f32.mrb[0].mxu0
        %v2201 = vadd.f32 0.0, %v2200
        %v2202 = vpop.f32.mrb[0].mxu0
        %v2203 = vadd.f32 0.0, %v2202
        %v2204 = vpop.f32.mrb[0].mxu0
        %v2205 = vadd.f32 0.0, %v2204
        %v2206 = vpop.f32.mrb[0].mxu0
        %v2207 = vadd.f32 0.0, %v2206
        %2208 = vmatprep.mubr.bf16.mxu0 %v1136
        %2209 = vmatmul.mubr.bf16.gmra.mrb[0].mxu0 %v1135
        %v2210 = vpop.f32.mrb[0].mxu0
        %v2211 = vadd.f32 0.0, %v2210
        %v2212 = vpop.f32.mrb[0].mxu0
        %v2213 = vadd.f32 0.0, %v2212
        %v2214 = vpop.f32.mrb[0].mxu0
        %v2215 = vadd.f32 0.0, %v2214
        %v2216 = vpop.f32.mrb[0].mxu0
        %v2217 = vadd.f32 0.0, %v2216
        %2218 = vmatprep.mubr.bf16.mxu0 %v1138
        %2219 = vmatmul.mubr.bf16.gmra.mrb[0].mxu0 %v1137
        %v2220 = vpop.f32.mrb[0].mxu0
        %v2221 = vadd.f32 0.0, %v2220
        %v2222 = vpop.f32.mrb[0].mxu0
        %v2223 = vadd.f32 0.0, %v2222
        %v2224 = vpop.f32.mrb[0].mxu0
        %v2225 = vadd.f32 0.0, %v2224
        %v2226 = vpop.f32.mrb[0].mxu0
        %v2227 = vadd.f32 0.0, %v2226
        %2228 = vdwg.mxu0
        %v2229 = vadd.f32 %v499, %v1558
        %v2230 = vadd.f32 %v500, %v1560
        %v2231 = vadd.f32 %v501, %v1911
        %v2232 = vadd.f32 %v502, %v1913
        %v2233 = vadd.f32 %v503, %v1562
        %v2234 = vadd.f32 %v504, %v1564
        %v2235 = vadd.f32 %v505, %v1915
        %v2236 = vadd.f32 %v506, %v1917
        %v2237 = vadd.f32 %v507, %v1568
        %v2238 = vadd.f32 %v508, %v1570
        %v2239 = vadd.f32 %v509, %v1921
        %v2240 = vadd.f32 %v510, %v1923
        %v2241 = vadd.f32 %v511, %v1572
        %v2242 = vadd.f32 %v512, %v1574
        %v2243 = vadd.f32 %v513, %v1925
        %v2244 = vadd.f32 %v514, %v1927
        %v2245 = vadd.f32 %v515, %v1578
        %v2246 = vadd.f32 %v516, %v1580
        %v2247 = vadd.f32 %v517, %v1931
        %v2248 = vadd.f32 %v518, %v1933
        %v2249 = vadd.f32 %v519, %v1582
        %v2250 = vadd.f32 %v520, %v1584
        %v2251 = vadd.f32 %v521, %v1935
        %v2252 = vadd.f32 %v522, %v1937
        %v2253 = vadd.f32 %v523, %v1588
        %v2254 = vadd.f32 %v524, %v1590
        %v2255 = vadd.f32 %v525, %v1941
        %v2256 = vadd.f32 %v526, %v1943
        %v2257 = vadd.f32 %v527, %v1592
        %v2258 = vadd.f32 %v528, %v1594
        %v2259 = vadd.f32 %v529, %v1945
        %v2260 = vadd.f32 %v530, %v1947
        %v2261 = vadd.f32 %v531, %v1598
        %v2262 = vadd.f32 %v532, %v1600
        %v2263 = vadd.f32 %v533, %v1951
        %v2264 = vadd.f32 %v534, %v1953
        %v2265 = vadd.f32 %v535, %v1602
        %v2266 = vadd.f32 %v536, %v1604
        %v2267 = vadd.f32 %v537, %v1955
        %v2268 = vadd.f32 %v538, %v1957
        %v2269 = vadd.f32 %v539, %v1608
        %v2270 = vadd.f32 %v540, %v1610
        %v2271 = vadd.f32 %v541, %v1961
        %v2272 = vadd.f32 %v542, %v1963
        %v2273 = vadd.f32 %v543, %v1612
        %v2274 = vadd.f32 %v544, %v1614
        %v2275 = vadd.f32 %v545, %v1965
        %v2276 = vadd.f32 %v546, %v1967
        %v2277 = vadd.f32 %v547, %v1618
        %v2278 = vadd.f32 %v548, %v1620
        %v2279 = vadd.f32 %v549, %v1971
        %v2280 = vadd.f32 %v550, %v1973
        %v2281 = vadd.f32 %v551, %v1622
        %v2282 = vadd.f32 %v552, %v1624
        %v2283 = vadd.f32 %v553, %v1975
        %v2284 = vadd.f32 %v554, %v1977
        %v2285 = vadd.f32 %v555, %v1628
        %v2286 = vadd.f32 %v556, %v1630
        %v2287 = vadd.f32 %v557, %v1981
        %v2288 = vadd.f32 %v558, %v1983
        %v2289 = vadd.f32 %v559, %v1632
        %v2290 = vadd.f32 %v560, %v1634
        %v2291 = vadd.f32 %v561, %v1985
        %v2292 = vadd.f32 %v562, %v1987
        %v2293 = vadd.f32 %v563, %v1638
        %v2294 = vadd.f32 %v564, %v1640
        %v2295 = vadd.f32 %v565, %v1991
        %v2296 = vadd.f32 %v566, %v1993
        %v2297 = vadd.f32 %v567, %v1642
        %v2298 = vadd.f32 %v568, %v1644
        %v2299 = vadd.f32 %v569, %v1995
        %v2300 = vadd.f32 %v570, %v1997
        %v2301 = vadd.f32 %v571, %v1648
        %v2302 = vadd.f32 %v572, %v1650
        %v2303 = vadd.f32 %v573, %v2001
        %v2304 = vadd.f32 %v574, %v2003
        %v2305 = vadd.f32 %v575, %v1652
        %v2306 = vadd.f32 %v576, %v1654
        %v2307 = vadd.f32 %v577, %v2005
        %v2308 = vadd.f32 %v578, %v2007
        %v2309 = vadd.f32 %v579, %v1658
        %v2310 = vadd.f32 %v580, %v1660
        %v2311 = vadd.f32 %v581, %v2011
        %v2312 = vadd.f32 %v582, %v2013
        %v2313 = vadd.f32 %v583, %v1662
        %v2314 = vadd.f32 %v584, %v1664
        %v2315 = vadd.f32 %v585, %v2015
        %v2316 = vadd.f32 %v586, %v2017
        %v2317 = vadd.f32 %v587, %v1668
        %v2318 = vadd.f32 %v588, %v1670
        %v2319 = vadd.f32 %v589, %v2021
        %v2320 = vadd.f32 %v590, %v2023
        %v2321 = vadd.f32 %v591, %v1672
        %v2322 = vadd.f32 %v592, %v1674
        %v2323 = vadd.f32 %v593, %v2025
        %v2324 = vadd.f32 %v594, %v2027
        %v2325 = vadd.f32 %v595, %v1678
        %v2326 = vadd.f32 %v596, %v1680
        %v2327 = vadd.f32 %v597, %v2031
        %v2328 = vadd.f32 %v598, %v2033
        %v2329 = vadd.f32 %v599, %v1682
        %v2330 = vadd.f32 %v600, %v1684
        %v2331 = vadd.f32 %v601, %v2035
        %v2332 = vadd.f32 %v602, %v2037
        %v2333 = vadd.f32 %v603, %v1688
        %v2334 = vadd.f32 %v604, %v1690
        %v2335 = vadd.f32 %v605, %v2041
        %v2336 = vadd.f32 %v606, %v2043
        %v2337 = vadd.f32 %v607, %v1692
        %v2338 = vadd.f32 %v608, %v1694
        %v2339 = vadd.f32 %v609, %v2045
        %v2340 = vadd.f32 %v610, %v2047
        %v2341 = vadd.f32 %v611, %v1698
        %v2342 = vadd.f32 %v612, %v1700
        %v2343 = vadd.f32 %v613, %v2051
        %v2344 = vadd.f32 %v614, %v2053
        %v2345 = vadd.f32 %v615, %v1702
        %v2346 = vadd.f32 %v616, %v1704
        %v2347 = vadd.f32 %v617, %v2055
        %v2348 = vadd.f32 %v618, %v2057
        %v2349 = vadd.f32 %v619, %v1708
        %v2350 = vadd.f32 %v620, %v1710
        %v2351 = vadd.f32 %v621, %v2061
        %v2352 = vadd.f32 %v622, %v2063
        %v2353 = vadd.f32 %v623, %v1712
        %v2354 = vadd.f32 %v624, %v1714
        %v2355 = vadd.f32 %v625, %v2065
        %v2356 = vadd.f32 %v626, %v2067
        %v2357 = vadd.f32 %v627, %v1718
        %v2358 = vadd.f32 %v628, %v1720
        %v2359 = vadd.f32 %v629, %v2071
        %v2360 = vadd.f32 %v630, %v2073
        %v2361 = vadd.f32 %v631, %v1722
        %v2362 = vadd.f32 %v632, %v1724
        %v2363 = vadd.f32 %v633, %v2075
        %v2364 = vadd.f32 %v634, %v2077
        %v2365 = vadd.f32 %v635, %v1728
        %v2366 = vadd.f32 %v636, %v1730
        %v2367 = vadd.f32 %v637, %v2081
        %v2368 = vadd.f32 %v638, %v2083
        %v2369 = vadd.f32 %v639, %v1732
        %v2370 = vadd.f32 %v640, %v1734
        %v2371 = vadd.f32 %v641, %v2085
        %v2372 = vadd.f32 %v642, %v2087
        %v2373 = vadd.f32 %v643, %v1738
        %v2374 = vadd.f32 %v644, %v1740
        %v2375 = vadd.f32 %v645, %v2091
        %v2376 = vadd.f32 %v646, %v2093
        %v2377 = vadd.f32 %v647, %v1742
        %v2378 = vadd.f32 %v648, %v1744
        %v2379 = vadd.f32 %v649, %v2095
        %v2380 = vadd.f32 %v650, %v2097
        %v2381 = vadd.f32 %v651, %v1748
        %v2382 = vadd.f32 %v652, %v1750
        %v2383 = vadd.f32 %v653, %v2101
        %v2384 = vadd.f32 %v654, %v2103
        %v2385 = vadd.f32 %v655, %v1752
        %v2386 = vadd.f32 %v656, %v1754
        %v2387 = vadd.f32 %v657, %v2105
        %v2388 = vadd.f32 %v658, %v2107
        %v2389 = vadd.f32 %v659, %v1758
        %v2390 = vadd.f32 %v660, %v1760
        %v2391 = vadd.f32 %v661, %v2111
        %v2392 = vadd.f32 %v662, %v2113
        %v2393 = vadd.f32 %v663, %v1762
        %v2394 = vadd.f32 %v664, %v1764
        %v2395 = vadd.f32 %v665, %v2115
        %v2396 = vadd.f32 %v666, %v2117
        %v2397 = vadd.f32 %v667, %v1768
        %v2398 = vadd.f32 %v668, %v1770
        %v2399 = vadd.f32 %v669, %v2121
        %v2400 = vadd.f32 %v670, %v2123
        %v2401 = vadd.f32 %v671, %v1772
        %v2402 = vadd.f32 %v672, %v1774
        %v2403 = vadd.f32 %v673, %v2125
        %v2404 = vadd.f32 %v674, %v2127
        %v2405 = vadd.f32 %v675, %v1778
        %v2406 = vadd.f32 %v676, %v1780
        %v2407 = vadd.f32 %v677, %v2131
        %v2408 = vadd.f32 %v678, %v2133
        %v2409 = vadd.f32 %v679, %v1782
        %v2410 = vadd.f32 %v680, %v1784
        %v2411 = vadd.f32 %v681, %v2135
        %v2412 = vadd.f32 %v682, %v2137
        %v2413 = vadd.f32 %v683, %v1788
        %v2414 = vadd.f32 %v684, %v1790
        %v2415 = vadd.f32 %v685, %v2141
        %v2416 = vadd.f32 %v686, %v2143
        %v2417 = vadd.f32 %v687, %v1792
        %v2418 = vadd.f32 %v688, %v1794
        %v2419 = vadd.f32 %v689, %v2145
        %v2420 = vadd.f32 %v690, %v2147
        %v2421 = vadd.f32 %v691, %v1798
        %v2422 = vadd.f32 %v692, %v1800
        %v2423 = vadd.f32 %v693, %v2151
        %v2424 = vadd.f32 %v694, %v2153
        %v2425 = vadd.f32 %v695, %v1802
        %v2426 = vadd.f32 %v696, %v1804
        %v2427 = vadd.f32 %v697, %v2155
        %v2428 = vadd.f32 %v698, %v2157
        %v2429 = vadd.f32 %v699, %v1808
        %v2430 = vadd.f32 %v700, %v1810
        %v2431 = vadd.f32 %v701, %v2161
        %v2432 = vadd.f32 %v702, %v2163
        %v2433 = vadd.f32 %v703, %v1812
        %v2434 = vadd.f32 %v704, %v1814
        %v2435 = vadd.f32 %v705, %v2165
        %v2436 = vadd.f32 %v706, %v2167
        %v2437 = vadd.f32 %v707, %v1818
        %v2438 = vadd.f32 %v708, %v1820
        %v2439 = vadd.f32 %v709, %v2171
        %v2440 = vadd.f32 %v710, %v2173
        %v2441 = vadd.f32 %v711, %v1822
        %v2442 = vadd.f32 %v712, %v1824
        %v2443 = vadd.f32 %v713, %v2175
        %v2444 = vadd.f32 %v714, %v2177
        %v2445 = vadd.f32 %v715, %v1828
        %v2446 = vadd.f32 %v716, %v1830
        %v2447 = vadd.f32 %v717, %v2181
        %v2448 = vadd.f32 %v718, %v2183
        %v2449 = vadd.f32 %v719, %v1832
        %v2450 = vadd.f32 %v720, %v1834
        %v2451 = vadd.f32 %v721, %v2185
        %v2452 = vadd.f32 %v722, %v2187
        %v2453 = vadd.f32 %v723, %v1838
        %v2454 = vadd.f32 %v724, %v1840
        %v2455 = vadd.f32 %v725, %v2191
        %v2456 = vadd.f32 %v726, %v2193
        %v2457 = vadd.f32 %v727, %v1842
        %v2458 = vadd.f32 %v728, %v1844
        %v2459 = vadd.f32 %v729, %v2195
        %v2460 = vadd.f32 %v730, %v2197
        %v2461 = vadd.f32 %v731, %v1848
        %v2462 = vadd.f32 %v732, %v1850
        %v2463 = vadd.f32 %v733, %v2201
        %v2464 = vadd.f32 %v734, %v2203
        %v2465 = vadd.f32 %v735, %v1852
        %v2466 = vadd.f32 %v736, %v1854
        %v2467 = vadd.f32 %v737, %v2205
        %v2468 = vadd.f32 %v738, %v2207
        %v2469 = vadd.f32 %v739, %v1858
        %v2470 = vadd.f32 %v740, %v1860
        %v2471 = vadd.f32 %v741, %v2211
        %v2472 = vadd.f32 %v742, %v2213
        %v2473 = vadd.f32 %v743, %v1862
        %v2474 = vadd.f32 %v744, %v1864
        %v2475 = vadd.f32 %v745, %v2215
        %v2476 = vadd.f32 %v746, %v2217
        %v2477 = vadd.f32 %v747, %v1868
        %v2478 = vadd.f32 %v748, %v1870
        %v2479 = vadd.f32 %v749, %v2221
        %v2480 = vadd.f32 %v750, %v2223
        %v2481 = vadd.f32 %v751, %v1872
        %v2482 = vadd.f32 %v752, %v1874
        %v2483 = vadd.f32 %v753, %v2225
        %v2484 = vadd.f32 %v754, %v2227
        %2485 = vst [vmem:[#allocation2] sm:$0xff] %v2229
        %2486 = vst [vmem:[#allocation2 + $0x8] sm:$0xff] %v2230
        %2487 = vst [vmem:[#allocation2 + $0x10] sm:$0xff] %v2231
        %2488 = vst [vmem:[#allocation2 + $0x18] sm:$0xff] %v2232
        %2489 = vst [vmem:[#allocation2 + $0x20] sm:$0xff] %v2233
        %2490 = vst [vmem:[#allocation2 + $0x28] sm:$0xff] %v2234
        %2491 = vst [vmem:[#allocation2 + $0x30] sm:$0xff] %v2235
        %2492 = vst [vmem:[#allocation2 + $0x38] sm:$0xff] %v2236
        %2493 = vst [vmem:[#allocation2 + $0x40] sm:$0xff] %v2237
        %2494 = vst [vmem:[#allocation2 + $0x48] sm:$0xff] %v2238
        %2495 = vst [vmem:[#allocation2 + $0x50] sm:$0xff] %v2239
        %2496 = vst [vmem:[#allocation2 + $0x58] sm:$0xff] %v2240
        %2497 = vst [vmem:[#allocation2 + $0x60] sm:$0xff] %v2241
        %2498 = vst [vmem:[#allocation2 + $0x68] sm:$0xff] %v2242
        %2499 = vst [vmem:[#allocation2 + $0x70] sm:$0xff] %v2243
        %2500 = vst [vmem:[#allocation2 + $0x78] sm:$0xff] %v2244
        %2501 = vst [vmem:[#allocation2 + $0x80] sm:$0xff] %v2245
        %2502 = vst [vmem:[#allocation2 + $0x88] sm:$0xff] %v2246
        %2503 = vst [vmem:[#allocation2 + $0x90] sm:$0xff] %v2247
        %2504 = vst [vmem:[#allocation2 + $0x98] sm:$0xff] %v2248
        %2505 = vst [vmem:[#allocation2 + $0xa0] sm:$0xff] %v2249
        %2506 = vst [vmem:[#allocation2 + $0xa8] sm:$0xff] %v2250
        %2507 = vst [vmem:[#allocation2 + $0xb0] sm:$0xff] %v2251
        %2508 = vst [vmem:[#allocation2 + $0xb8] sm:$0xff] %v2252
        %2509 = vst [vmem:[#allocation2 + $0xc0] sm:$0xff] %v2253
        %2510 = vst [vmem:[#allocation2 + $0xc8] sm:$0xff] %v2254
        %2511 = vst [vmem:[#allocation2 + $0xd0] sm:$0xff] %v2255
        %2512 = vst [vmem:[#allocation2 + $0xd8] sm:$0xff] %v2256
        %2513 = vst [vmem:[#allocation2 + $0xe0] sm:$0xff] %v2257
        %2514 = vst [vmem:[#allocation2 + $0xe8] sm:$0xff] %v2258
        %2515 = vst [vmem:[#allocation2 + $0xf0] sm:$0xff] %v2259
        %2516 = vst [vmem:[#allocation2 + $0xf8] sm:$0xff] %v2260
        %2517 = vst [vmem:[#allocation2 + $0x100] sm:$0xff] %v2261
        %2518 = vst [vmem:[#allocation2 + $0x108] sm:$0xff] %v2262
        %2519 = vst [vmem:[#allocation2 + $0x110] sm:$0xff] %v2263
        %2520 = vst [vmem:[#allocation2 + $0x118] sm:$0xff] %v2264
        %2521 = vst [vmem:[#allocation2 + $0x120] sm:$0xff] %v2265
        %2522 = vst [vmem:[#allocation2 + $0x128] sm:$0xff] %v2266
        %2523 = vst [vmem:[#allocation2 + $0x130] sm:$0xff] %v2267
        %2524 = vst [vmem:[#allocation2 + $0x138] sm:$0xff] %v2268
        %2525 = vst [vmem:[#allocation2 + $0x140] sm:$0xff] %v2269
        %2526 = vst [vmem:[#allocation2 + $0x148] sm:$0xff] %v2270
        %2527 = vst [vmem:[#allocation2 + $0x150] sm:$0xff] %v2271
        %2528 = vst [vmem:[#allocation2 + $0x158] sm:$0xff] %v2272
        %2529 = vst [vmem:[#allocation2 + $0x160] sm:$0xff] %v2273
        %2530 = vst [vmem:[#allocation2 + $0x168] sm:$0xff] %v2274
        %2531 = vst [vmem:[#allocation2 + $0x170] sm:$0xff] %v2275
        %2532 = vst [vmem:[#allocation2 + $0x178] sm:$0xff] %v2276
        %2533 = vst [vmem:[#allocation2 + $0x180] sm:$0xff] %v2277
        %2534 = vst [vmem:[#allocation2 + $0x188] sm:$0xff] %v2278
        %2535 = vst [vmem:[#allocation2 + $0x190] sm:$0xff] %v2279
        %2536 = vst [vmem:[#allocation2 + $0x198] sm:$0xff] %v2280
        %2537 = vst [vmem:[#allocation2 + $0x1a0] sm:$0xff] %v2281
        %2538 = vst [vmem:[#allocation2 + $0x1a8] sm:$0xff] %v2282
        %2539 = vst [vmem:[#allocation2 + $0x1b0] sm:$0xff] %v2283
        %2540 = vst [vmem:[#allocation2 + $0x1b8] sm:$0xff] %v2284
        %2541 = vst [vmem:[#allocation2 + $0x1c0] sm:$0xff] %v2285
        %2542 = vst [vmem:[#allocation2 + $0x1c8] sm:$0xff] %v2286
        %2543 = vst [vmem:[#allocation2 + $0x1d0] sm:$0xff] %v2287
        %2544 = vst [vmem:[#allocation2 + $0x1d8] sm:$0xff] %v2288
        %2545 = vst [vmem:[#allocation2 + $0x1e0] sm:$0xff] %v2289
        %2546 = vst [vmem:[#allocation2 + $0x1e8] sm:$0xff] %v2290
        %2547 = vst [vmem:[#allocation2 + $0x1f0] sm:$0xff] %v2291
        %2548 = vst [vmem:[#allocation2 + $0x1f8] sm:$0xff] %v2292
        %2549 = vst [vmem:[#allocation2 + $0x200] sm:$0xff] %v2293
        %2550 = vst [vmem:[#allocation2 + $0x208] sm:$0xff] %v2294
        %2551 = vst [vmem:[#allocation2 + $0x210] sm:$0xff] %v2295
        %2552 = vst [vmem:[#allocation2 + $0x218] sm:$0xff] %v2296
        %2553 = vst [vmem:[#allocation2 + $0x220] sm:$0xff] %v2297
        %2554 = vst [vmem:[#allocation2 + $0x228] sm:$0xff] %v2298
        %2555 = vst [vmem:[#allocation2 + $0x230] sm:$0xff] %v2299
        %2556 = vst [vmem:[#allocation2 + $0x238] sm:$0xff] %v2300
        %2557 = vst [vmem:[#allocation2 + $0x240] sm:$0xff] %v2301
        %2558 = vst [vmem:[#allocation2 + $0x248] sm:$0xff] %v2302
        %2559 = vst [vmem:[#allocation2 + $0x250] sm:$0xff] %v2303
        %2560 = vst [vmem:[#allocation2 + $0x258] sm:$0xff] %v2304
        %2561 = vst [vmem:[#allocation2 + $0x260] sm:$0xff] %v2305
        %2562 = vst [vmem:[#allocation2 + $0x268] sm:$0xff] %v2306
        %2563 = vst [vmem:[#allocation2 + $0x270] sm:$0xff] %v2307
        %2564 = vst [vmem:[#allocation2 + $0x278] sm:$0xff] %v2308
        %2565 = vst [vmem:[#allocation2 + $0x280] sm:$0xff] %v2309
        %2566 = vst [vmem:[#allocation2 + $0x288] sm:$0xff] %v2310
        %2567 = vst [vmem:[#allocation2 + $0x290] sm:$0xff] %v2311
        %2568 = vst [vmem:[#allocation2 + $0x298] sm:$0xff] %v2312
        %2569 = vst [vmem:[#allocation2 + $0x2a0] sm:$0xff] %v2313
        %2570 = vst [vmem:[#allocation2 + $0x2a8] sm:$0xff] %v2314
        %2571 = vst [vmem:[#allocation2 + $0x2b0] sm:$0xff] %v2315
        %2572 = vst [vmem:[#allocation2 + $0x2b8] sm:$0xff] %v2316
        %2573 = vst [vmem:[#allocation2 + $0x2c0] sm:$0xff] %v2317
        %2574 = vst [vmem:[#allocation2 + $0x2c8] sm:$0xff] %v2318
        %2575 = vst [vmem:[#allocation2 + $0x2d0] sm:$0xff] %v2319
        %2576 = vst [vmem:[#allocation2 + $0x2d8] sm:$0xff] %v2320
        %2577 = vst [vmem:[#allocation2 + $0x2e0] sm:$0xff] %v2321
        %2578 = vst [vmem:[#allocation2 + $0x2e8] sm:$0xff] %v2322
        %2579 = vst [vmem:[#allocation2 + $0x2f0] sm:$0xff] %v2323
        %2580 = vst [vmem:[#allocation2 + $0x2f8] sm:$0xff] %v2324
        %2581 = vst [vmem:[#allocation2 + $0x300] sm:$0xff] %v2325
        %2582 = vst [vmem:[#allocation2 + $0x308] sm:$0xff] %v2326
        %2583 = vst [vmem:[#allocation2 + $0x310] sm:$0xff] %v2327
        %2584 = vst [vmem:[#allocation2 + $0x318] sm:$0xff] %v2328
        %2585 = vst [vmem:[#allocation2 + $0x320] sm:$0xff] %v2329
        %2586 = vst [vmem:[#allocation2 + $0x328] sm:$0xff] %v2330
        %2587 = vst [vmem:[#allocation2 + $0x330] sm:$0xff] %v2331
        %2588 = vst [vmem:[#allocation2 + $0x338] sm:$0xff] %v2332
        %2589 = vst [vmem:[#allocation2 + $0x340] sm:$0xff] %v2333
        %2590 = vst [vmem:[#allocation2 + $0x348] sm:$0xff] %v2334
        %2591 = vst [vmem:[#allocation2 + $0x350] sm:$0xff] %v2335
        %2592 = vst [vmem:[#allocation2 + $0x358] sm:$0xff] %v2336
        %2593 = vst [vmem:[#allocation2 + $0x360] sm:$0xff] %v2337
        %2594 = vst [vmem:[#allocation2 + $0x368] sm:$0xff] %v2338
        %2595 = vst [vmem:[#allocation2 + $0x370] sm:$0xff] %v2339
        %2596 = vst [vmem:[#allocation2 + $0x378] sm:$0xff] %v2340
        %2597 = vst [vmem:[#allocation2 + $0x380] sm:$0xff] %v2341
        %2598 = vst [vmem:[#allocation2 + $0x388] sm:$0xff] %v2342
        %2599 = vst [vmem:[#allocation2 + $0x390] sm:$0xff] %v2343
        %2600 = vst [vmem:[#allocation2 + $0x398] sm:$0xff] %v2344
        %2601 = vst [vmem:[#allocation2 + $0x3a0] sm:$0xff] %v2345
        %2602 = vst [vmem:[#allocation2 + $0x3a8] sm:$0xff] %v2346
        %2603 = vst [vmem:[#allocation2 + $0x3b0] sm:$0xff] %v2347
        %2604 = vst [vmem:[#allocation2 + $0x3b8] sm:$0xff] %v2348
        %2605 = vst [vmem:[#allocation2 + $0x3c0] sm:$0xff] %v2349
        %2606 = vst [vmem:[#allocation2 + $0x3c8] sm:$0xff] %v2350
        %2607 = vst [vmem:[#allocation2 + $0x3d0] sm:$0xff] %v2351
        %2608 = vst [vmem:[#allocation2 + $0x3d8] sm:$0xff] %v2352
        %2609 = vst [vmem:[#allocation2 + $0x3e0] sm:$0xff] %v2353
        %2610 = vst [vmem:[#allocation2 + $0x3e8] sm:$0xff] %v2354
        %2611 = vst [vmem:[#allocation2 + $0x3f0] sm:$0xff] %v2355
        %2612 = vst [vmem:[#allocation2 + $0x3f8] sm:$0xff] %v2356
        %2613 = vst [vmem:[#allocation2 + $0x400] sm:$0xff] %v2357
        %2614 = vst [vmem:[#allocation2 + $0x408] sm:$0xff] %v2358
        %2615 = vst [vmem:[#allocation2 + $0x410] sm:$0xff] %v2359
        %2616 = vst [vmem:[#allocation2 + $0x418] sm:$0xff] %v2360
        %2617 = vst [vmem:[#allocation2 + $0x420] sm:$0xff] %v2361
        %2618 = vst [vmem:[#allocation2 + $0x428] sm:$0xff] %v2362
        %2619 = vst [vmem:[#allocation2 + $0x430] sm:$0xff] %v2363
        %2620 = vst [vmem:[#allocation2 + $0x438] sm:$0xff] %v2364
        %2621 = vst [vmem:[#allocation2 + $0x440] sm:$0xff] %v2365
        %2622 = vst [vmem:[#allocation2 + $0x448] sm:$0xff] %v2366
        %2623 = vst [vmem:[#allocation2 + $0x450] sm:$0xff] %v2367
        %2624 = vst [vmem:[#allocation2 + $0x458] sm:$0xff] %v2368
        %2625 = vst [vmem:[#allocation2 + $0x460] sm:$0xff] %v2369
        %2626 = vst [vmem:[#allocation2 + $0x468] sm:$0xff] %v2370
        %2627 = vst [vmem:[#allocation2 + $0x470] sm:$0xff] %v2371
        %2628 = vst [vmem:[#allocation2 + $0x478] sm:$0xff] %v2372
        %2629 = vst [vmem:[#allocation2 + $0x480] sm:$0xff] %v2373
        %2630 = vst [vmem:[#allocation2 + $0x488] sm:$0xff] %v2374
        %2631 = vst [vmem:[#allocation2 + $0x490] sm:$0xff] %v2375
        %2632 = vst [vmem:[#allocation2 + $0x498] sm:$0xff] %v2376
        %2633 = vst [vmem:[#allocation2 + $0x4a0] sm:$0xff] %v2377
        %2634 = vst [vmem:[#allocation2 + $0x4a8] sm:$0xff] %v2378
        %2635 = vst [vmem:[#allocation2 + $0x4b0] sm:$0xff] %v2379
        %2636 = vst [vmem:[#allocation2 + $0x4b8] sm:$0xff] %v2380
        %2637 = vst [vmem:[#allocation2 + $0x4c0] sm:$0xff] %v2381
        %2638 = vst [vmem:[#allocation2 + $0x4c8] sm:$0xff] %v2382
        %2639 = vst [vmem:[#allocation2 + $0x4d0] sm:$0xff] %v2383
        %2640 = vst [vmem:[#allocation2 + $0x4d8] sm:$0xff] %v2384
        %2641 = vst [vmem:[#allocation2 + $0x4e0] sm:$0xff] %v2385
        %2642 = vst [vmem:[#allocation2 + $0x4e8] sm:$0xff] %v2386
        %2643 = vst [vmem:[#allocation2 + $0x4f0] sm:$0xff] %v2387
        %2644 = vst [vmem:[#allocation2 + $0x4f8] sm:$0xff] %v2388
        %2645 = vst [vmem:[#allocation2 + $0x500] sm:$0xff] %v2389
        %2646 = vst [vmem:[#allocation2 + $0x508] sm:$0xff] %v2390
        %2647 = vst [vmem:[#allocation2 + $0x510] sm:$0xff] %v2391
        %2648 = vst [vmem:[#allocation2 + $0x518] sm:$0xff] %v2392
        %2649 = vst [vmem:[#allocation2 + $0x520] sm:$0xff] %v2393
        %2650 = vst [vmem:[#allocation2 + $0x528] sm:$0xff] %v2394
        %2651 = vst [vmem:[#allocation2 + $0x530] sm:$0xff] %v2395
        %2652 = vst [vmem:[#allocation2 + $0x538] sm:$0xff] %v2396
        %2653 = vst [vmem:[#allocation2 + $0x540] sm:$0xff] %v2397
        %2654 = vst [vmem:[#allocation2 + $0x548] sm:$0xff] %v2398
        %2655 = vst [vmem:[#allocation2 + $0x550] sm:$0xff] %v2399
        %2656 = vst [vmem:[#allocation2 + $0x558] sm:$0xff] %v2400
        %2657 = vst [vmem:[#allocation2 + $0x560] sm:$0xff] %v2401
        %2658 = vst [vmem:[#allocation2 + $0x568] sm:$0xff] %v2402
        %2659 = vst [vmem:[#allocation2 + $0x570] sm:$0xff] %v2403
        %2660 = vst [vmem:[#allocation2 + $0x578] sm:$0xff] %v2404
        %2661 = vst [vmem:[#allocation2 + $0x580] sm:$0xff] %v2405
        %2662 = vst [vmem:[#allocation2 + $0x588] sm:$0xff] %v2406
        %2663 = vst [vmem:[#allocation2 + $0x590] sm:$0xff] %v2407
        %2664 = vst [vmem:[#allocation2 + $0x598] sm:$0xff] %v2408
        %2665 = vst [vmem:[#allocation2 + $0x5a0] sm:$0xff] %v2409
        %2666 = vst [vmem:[#allocation2 + $0x5a8] sm:$0xff] %v2410
        %2667 = vst [vmem:[#allocation2 + $0x5b0] sm:$0xff] %v2411
        %2668 = vst [vmem:[#allocation2 + $0x5b8] sm:$0xff] %v2412
        %2669 = vst [vmem:[#allocation2 + $0x5c0] sm:$0xff] %v2413
        %2670 = vst [vmem:[#allocation2 + $0x5c8] sm:$0xff] %v2414
        %2671 = vst [vmem:[#allocation2 + $0x5d0] sm:$0xff] %v2415
        %2672 = vst [vmem:[#allocation2 + $0x5d8] sm:$0xff] %v2416
        %2673 = vst [vmem:[#allocation2 + $0x5e0] sm:$0xff] %v2417
        %2674 = vst [vmem:[#allocation2 + $0x5e8] sm:$0xff] %v2418
        %2675 = vst [vmem:[#allocation2 + $0x5f0] sm:$0xff] %v2419
        %2676 = vst [vmem:[#allocation2 + $0x5f8] sm:$0xff] %v2420
        %2677 = vst [vmem:[#allocation2 + $0x600] sm:$0xff] %v2421
        %2678 = vst [vmem:[#allocation2 + $0x608] sm:$0xff] %v2422
        %2679 = vst [vmem:[#allocation2 + $0x610] sm:$0xff] %v2423
        %2680 = vst [vmem:[#allocation2 + $0x618] sm:$0xff] %v2424
        %2681 = vst [vmem:[#allocation2 + $0x620] sm:$0xff] %v2425
        %2682 = vst [vmem:[#allocation2 + $0x628] sm:$0xff] %v2426
        %2683 = vst [vmem:[#allocation2 + $0x630] sm:$0xff] %v2427
        %2684 = vst [vmem:[#allocation2 + $0x638] sm:$0xff] %v2428
        %2685 = vst [vmem:[#allocation2 + $0x640] sm:$0xff] %v2429
        %2686 = vst [vmem:[#allocation2 + $0x648] sm:$0xff] %v2430
        %2687 = vst [vmem:[#allocation2 + $0x650] sm:$0xff] %v2431
        %2688 = vst [vmem:[#allocation2 + $0x658] sm:$0xff] %v2432
        %2689 = vst [vmem:[#allocation2 + $0x660] sm:$0xff] %v2433
        %2690 = vst [vmem:[#allocation2 + $0x668] sm:$0xff] %v2434
        %2691 = vst [vmem:[#allocation2 + $0x670] sm:$0xff] %v2435
        %2692 = vst [vmem:[#allocation2 + $0x678] sm:$0xff] %v2436
        %2693 = vst [vmem:[#allocation2 + $0x680] sm:$0xff] %v2437
        %2694 = vst [vmem:[#allocation2 + $0x688] sm:$0xff] %v2438
        %2695 = vst [vmem:[#allocation2 + $0x690] sm:$0xff] %v2439
        %2696 = vst [vmem:[#allocation2 + $0x698] sm:$0xff] %v2440
        %2697 = vst [vmem:[#allocation2 + $0x6a0] sm:$0xff] %v2441
        %2698 = vst [vmem:[#allocation2 + $0x6a8] sm:$0xff] %v2442
        %2699 = vst [vmem:[#allocation2 + $0x6b0] sm:$0xff] %v2443
        %2700 = vst [vmem:[#allocation2 + $0x6b8] sm:$0xff] %v2444
        %2701 = vst [vmem:[#allocation2 + $0x6c0] sm:$0xff] %v2445
        %2702 = vst [vmem:[#allocation2 + $0x6c8] sm:$0xff] %v2446
        %2703 = vst [vmem:[#allocation2 + $0x6d0] sm:$0xff] %v2447
        %2704 = vst [vmem:[#allocation2 + $0x6d8] sm:$0xff] %v2448
        %2705 = vst [vmem:[#allocation2 + $0x6e0] sm:$0xff] %v2449
        %2706 = vst [vmem:[#allocation2 + $0x6e8] sm:$0xff] %v2450
        %2707 = vst [vmem:[#allocation2 + $0x6f0] sm:$0xff] %v2451
        %2708 = vst [vmem:[#allocation2 + $0x6f8] sm:$0xff] %v2452
        %2709 = vst [vmem:[#allocation2 + $0x700] sm:$0xff] %v2453
        %2710 = vst [vmem:[#allocation2 + $0x708] sm:$0xff] %v2454
        %2711 = vst [vmem:[#allocation2 + $0x710] sm:$0xff] %v2455
        %2712 = vst [vmem:[#allocation2 + $0x718] sm:$0xff] %v2456
        %2713 = vst [vmem:[#allocation2 + $0x720] sm:$0xff] %v2457
        %2714 = vst [vmem:[#allocation2 + $0x728] sm:$0xff] %v2458
        %2715 = vst [vmem:[#allocation2 + $0x730] sm:$0xff] %v2459
        %2716 = vst [vmem:[#allocation2 + $0x738] sm:$0xff] %v2460
        %2717 = vst [vmem:[#allocation2 + $0x740] sm:$0xff] %v2461
        %2718 = vst [vmem:[#allocation2 + $0x748] sm:$0xff] %v2462
        %2719 = vst [vmem:[#allocation2 + $0x750] sm:$0xff] %v2463
        %2720 = vst [vmem:[#allocation2 + $0x758] sm:$0xff] %v2464
        %2721 = vst [vmem:[#allocation2 + $0x760] sm:$0xff] %v2465
        %2722 = vst [vmem:[#allocation2 + $0x768] sm:$0xff] %v2466
        %2723 = vst [vmem:[#allocation2 + $0x770] sm:$0xff] %v2467
        %2724 = vst [vmem:[#allocation2 + $0x778] sm:$0xff] %v2468
        %2725 = vst [vmem:[#allocation2 + $0x780] sm:$0xff] %v2469
        %2726 = vst [vmem:[#allocation2 + $0x788] sm:$0xff] %v2470
        %2727 = vst [vmem:[#allocation2 + $0x790] sm:$0xff] %v2471
        %2728 = vst [vmem:[#allocation2 + $0x798] sm:$0xff] %v2472
        %2729 = vst [vmem:[#allocation2 + $0x7a0] sm:$0xff] %v2473
        %2730 = vst [vmem:[#allocation2 + $0x7a8] sm:$0xff] %v2474
        %2731 = vst [vmem:[#allocation2 + $0x7b0] sm:$0xff] %v2475
        %2732 = vst [vmem:[#allocation2 + $0x7b8] sm:$0xff] %v2476
        %2733 = vst [vmem:[#allocation2 + $0x7c0] sm:$0xff] %v2477
        %2734 = vst [vmem:[#allocation2 + $0x7c8] sm:$0xff] %v2478
        %2735 = vst [vmem:[#allocation2 + $0x7d0] sm:$0xff] %v2479
        %2736 = vst [vmem:[#allocation2 + $0x7d8] sm:$0xff] %v2480
        %2737 = vst [vmem:[#allocation2 + $0x7e0] sm:$0xff] %v2481
        %2738 = vst [vmem:[#allocation2 + $0x7e8] sm:$0xff] %v2482
        %2739 = vst [vmem:[#allocation2 + $0x7f0] sm:$0xff] %v2483
        %2740 = vst [vmem:[#allocation2 + $0x7f8] sm:$0xff] %v2484
        // Predicated region
        $region41: #{tpu_custom_call.1} parent=27 // pred_check
          %p2741 = pneg %p239
        $region42: #{tpu_custom_call.1} parent=27 // pred_check_branch
          %2743 = sbr.rel (%p2741) target = $region44
        $region43: #{tpu_custom_call.1} parent=27 // pred_region
          %v2744 = vld [vmem:[#allocation2] sm:$0xff]
          %v2745 = vld [vmem:[#allocation2 + $0x8] sm:$0xff]
          %v2746 = vld [vmem:[#allocation2 + $0x10] sm:$0xff]
          %v2747 = vld [vmem:[#allocation2 + $0x18] sm:$0xff]
          %v2748 = vld [vmem:[#allocation2 + $0x20] sm:$0xff]
          %v2749 = vld [vmem:[#allocation2 + $0x28] sm:$0xff]
          %v2750 = vld [vmem:[#allocation2 + $0x30] sm:$0xff]
          %v2751 = vld [vmem:[#allocation2 + $0x38] sm:$0xff]
          %v2752 = vld [vmem:[#allocation2 + $0x40] sm:$0xff]
          %v2753 = vld [vmem:[#allocation2 + $0x48] sm:$0xff]
          %v2754 = vld [vmem:[#allocation2 + $0x50] sm:$0xff]
          %v2755 = vld [vmem:[#allocation2 + $0x58] sm:$0xff]
          %v2756 = vld [vmem:[#allocation2 + $0x60] sm:$0xff]
          %v2757 = vld [vmem:[#allocation2 + $0x68] sm:$0xff]
          %v2758 = vld [vmem:[#allocation2 + $0x70] sm:$0xff]
          %v2759 = vld [vmem:[#allocation2 + $0x78] sm:$0xff]
          %v2760 = vld [vmem:[#allocation2 + $0x80] sm:$0xff]
          %v2761 = vld [vmem:[#allocation2 + $0x88] sm:$0xff]
          %v2762 = vld [vmem:[#allocation2 + $0x90] sm:$0xff]
          %v2763 = vld [vmem:[#allocation2 + $0x98] sm:$0xff]
          %v2764 = vld [vmem:[#allocation2 + $0xa0] sm:$0xff]
          %v2765 = vld [vmem:[#allocation2 + $0xa8] sm:$0xff]
          %v2766 = vld [vmem:[#allocation2 + $0xb0] sm:$0xff]
          %v2767 = vld [vmem:[#allocation2 + $0xb8] sm:$0xff]
          %v2768 = vld [vmem:[#allocation2 + $0xc0] sm:$0xff]
          %v2769 = vld [vmem:[#allocation2 + $0xc8] sm:$0xff]
          %v2770 = vld [vmem:[#allocation2 + $0xd0] sm:$0xff]
          %v2771 = vld [vmem:[#allocation2 + $0xd8] sm:$0xff]
          %v2772 = vld [vmem:[#allocation2 + $0xe0] sm:$0xff]
          %v2773 = vld [vmem:[#allocation2 + $0xe8] sm:$0xff]
          %v2774 = vld [vmem:[#allocation2 + $0xf0] sm:$0xff]
          %v2775 = vld [vmem:[#allocation2 + $0xf8] sm:$0xff]
          %v2776 = vld [vmem:[#allocation2 + $0x100] sm:$0xff]
          %v2777 = vld [vmem:[#allocation2 + $0x108] sm:$0xff]
          %v2778 = vld [vmem:[#allocation2 + $0x110] sm:$0xff]
          %v2779 = vld [vmem:[#allocation2 + $0x118] sm:$0xff]
          %v2780 = vld [vmem:[#allocation2 + $0x120] sm:$0xff]
          %v2781 = vld [vmem:[#allocation2 + $0x128] sm:$0xff]
          %v2782 = vld [vmem:[#allocation2 + $0x130] sm:$0xff]
          %v2783 = vld [vmem:[#allocation2 + $0x138] sm:$0xff]
          %v2784 = vld [vmem:[#allocation2 + $0x140] sm:$0xff]
          %v2785 = vld [vmem:[#allocation2 + $0x148] sm:$0xff]
          %v2786 = vld [vmem:[#allocation2 + $0x150] sm:$0xff]
          %v2787 = vld [vmem:[#allocation2 + $0x158] sm:$0xff]
          %v2788 = vld [vmem:[#allocation2 + $0x160] sm:$0xff]
          %v2789 = vld [vmem:[#allocation2 + $0x168] sm:$0xff]
          %v2790 = vld [vmem:[#allocation2 + $0x170] sm:$0xff]
          %v2791 = vld [vmem:[#allocation2 + $0x178] sm:$0xff]
          %v2792 = vld [vmem:[#allocation2 + $0x180] sm:$0xff]
          %v2793 = vld [vmem:[#allocation2 + $0x188] sm:$0xff]
          %v2794 = vld [vmem:[#allocation2 + $0x190] sm:$0xff]
          %v2795 = vld [vmem:[#allocation2 + $0x198] sm:$0xff]
          %v2796 = vld [vmem:[#allocation2 + $0x1a0] sm:$0xff]
          %v2797 = vld [vmem:[#allocation2 + $0x1a8] sm:$0xff]
          %v2798 = vld [vmem:[#allocation2 + $0x1b0] sm:$0xff]
          %v2799 = vld [vmem:[#allocation2 + $0x1b8] sm:$0xff]
          %v2800 = vld [vmem:[#allocation2 + $0x1c0] sm:$0xff]
          %v2801 = vld [vmem:[#allocation2 + $0x1c8] sm:$0xff]
          %v2802 = vld [vmem:[#allocation2 + $0x1d0] sm:$0xff]
          %v2803 = vld [vmem:[#allocation2 + $0x1d8] sm:$0xff]
          %v2804 = vld [vmem:[#allocation2 + $0x1e0] sm:$0xff]
          %v2805 = vld [vmem:[#allocation2 + $0x1e8] sm:$0xff]
          %v2806 = vld [vmem:[#allocation2 + $0x1f0] sm:$0xff]
          %v2807 = vld [vmem:[#allocation2 + $0x1f8] sm:$0xff]
          %v2808 = vld [vmem:[#allocation2 + $0x200] sm:$0xff]
          %v2809 = vld [vmem:[#allocation2 + $0x208] sm:$0xff]
          %v2810 = vld [vmem:[#allocation2 + $0x210] sm:$0xff]
          %v2811 = vld [vmem:[#allocation2 + $0x218] sm:$0xff]
          %v2812 = vld [vmem:[#allocation2 + $0x220] sm:$0xff]
          %v2813 = vld [vmem:[#allocation2 + $0x228] sm:$0xff]
          %v2814 = vld [vmem:[#allocation2 + $0x230] sm:$0xff]
          %v2815 = vld [vmem:[#allocation2 + $0x238] sm:$0xff]
          %v2816 = vld [vmem:[#allocation2 + $0x240] sm:$0xff]
          %v2817 = vld [vmem:[#allocation2 + $0x248] sm:$0xff]
          %v2818 = vld [vmem:[#allocation2 + $0x250] sm:$0xff]
          %v2819 = vld [vmem:[#allocation2 + $0x258] sm:$0xff]
          %v2820 = vld [vmem:[#allocation2 + $0x260] sm:$0xff]
          %v2821 = vld [vmem:[#allocation2 + $0x268] sm:$0xff]
          %v2822 = vld [vmem:[#allocation2 + $0x270] sm:$0xff]
          %v2823 = vld [vmem:[#allocation2 + $0x278] sm:$0xff]
          %v2824 = vld [vmem:[#allocation2 + $0x280] sm:$0xff]
          %v2825 = vld [vmem:[#allocation2 + $0x288] sm:$0xff]
          %v2826 = vld [vmem:[#allocation2 + $0x290] sm:$0xff]
          %v2827 = vld [vmem:[#allocation2 + $0x298] sm:$0xff]
          %v2828 = vld [vmem:[#allocation2 + $0x2a0] sm:$0xff]
          %v2829 = vld [vmem:[#allocation2 + $0x2a8] sm:$0xff]
          %v2830 = vld [vmem:[#allocation2 + $0x2b0] sm:$0xff]
          %v2831 = vld [vmem:[#allocation2 + $0x2b8] sm:$0xff]
          %v2832 = vld [vmem:[#allocation2 + $0x2c0] sm:$0xff]
          %v2833 = vld [vmem:[#allocation2 + $0x2c8] sm:$0xff]
          %v2834 = vld [vmem:[#allocation2 + $0x2d0] sm:$0xff]
          %v2835 = vld [vmem:[#allocation2 + $0x2d8] sm:$0xff]
          %v2836 = vld [vmem:[#allocation2 + $0x2e0] sm:$0xff]
          %v2837 = vld [vmem:[#allocation2 + $0x2e8] sm:$0xff]
          %v2838 = vld [vmem:[#allocation2 + $0x2f0] sm:$0xff]
          %v2839 = vld [vmem:[#allocation2 + $0x2f8] sm:$0xff]
          %v2840 = vld [vmem:[#allocation2 + $0x300] sm:$0xff]
          %v2841 = vld [vmem:[#allocation2 + $0x308] sm:$0xff]
          %v2842 = vld [vmem:[#allocation2 + $0x310] sm:$0xff]
          %v2843 = vld [vmem:[#allocation2 + $0x318] sm:$0xff]
          %v2844 = vld [vmem:[#allocation2 + $0x320] sm:$0xff]
          %v2845 = vld [vmem:[#allocation2 + $0x328] sm:$0xff]
          %v2846 = vld [vmem:[#allocation2 + $0x330] sm:$0xff]
          %v2847 = vld [vmem:[#allocation2 + $0x338] sm:$0xff]
          %v2848 = vld [vmem:[#allocation2 + $0x340] sm:$0xff]
          %v2849 = vld [vmem:[#allocation2 + $0x348] sm:$0xff]
          %v2850 = vld [vmem:[#allocation2 + $0x350] sm:$0xff]
          %v2851 = vld [vmem:[#allocation2 + $0x358] sm:$0xff]
          %v2852 = vld [vmem:[#allocation2 + $0x360] sm:$0xff]
          %v2853 = vld [vmem:[#allocation2 + $0x368] sm:$0xff]
          %v2854 = vld [vmem:[#allocation2 + $0x370] sm:$0xff]
          %v2855 = vld [vmem:[#allocation2 + $0x378] sm:$0xff]
          %v2856 = vld [vmem:[#allocation2 + $0x380] sm:$0xff]
          %v2857 = vld [vmem:[#allocation2 + $0x388] sm:$0xff]
          %v2858 = vld [vmem:[#allocation2 + $0x390] sm:$0xff]
          %v2859 = vld [vmem:[#allocation2 + $0x398] sm:$0xff]
          %v2860 = vld [vmem:[#allocation2 + $0x3a0] sm:$0xff]
          %v2861 = vld [vmem:[#allocation2 + $0x3a8] sm:$0xff]
          %v2862 = vld [vmem:[#allocation2 + $0x3b0] sm:$0xff]
          %v2863 = vld [vmem:[#allocation2 + $0x3b8] sm:$0xff]
          %v2864 = vld [vmem:[#allocation2 + $0x3c0] sm:$0xff]
          %v2865 = vld [vmem:[#allocation2 + $0x3c8] sm:$0xff]
          %v2866 = vld [vmem:[#allocation2 + $0x3d0] sm:$0xff]
          %v2867 = vld [vmem:[#allocation2 + $0x3d8] sm:$0xff]
          %v2868 = vld [vmem:[#allocation2 + $0x3e0] sm:$0xff]
          %v2869 = vld [vmem:[#allocation2 + $0x3e8] sm:$0xff]
          %v2870 = vld [vmem:[#allocation2 + $0x3f0] sm:$0xff]
          %v2871 = vld [vmem:[#allocation2 + $0x3f8] sm:$0xff]
          %v2872 = vld [vmem:[#allocation2 + $0x400] sm:$0xff]
          %v2873 = vld [vmem:[#allocation2 + $0x408] sm:$0xff]
          %v2874 = vld [vmem:[#allocation2 + $0x410] sm:$0xff]
          %v2875 = vld [vmem:[#allocation2 + $0x418] sm:$0xff]
          %v2876 = vld [vmem:[#allocation2 + $0x420] sm:$0xff]
          %v2877 = vld [vmem:[#allocation2 + $0x428] sm:$0xff]
          %v2878 = vld [vmem:[#allocation2 + $0x430] sm:$0xff]
          %v2879 = vld [vmem:[#allocation2 + $0x438] sm:$0xff]
          %v2880 = vld [vmem:[#allocation2 + $0x440] sm:$0xff]
          %v2881 = vld [vmem:[#allocation2 + $0x448] sm:$0xff]
          %v2882 = vld [vmem:[#allocation2 + $0x450] sm:$0xff]
          %v2883 = vld [vmem:[#allocation2 + $0x458] sm:$0xff]
          %v2884 = vld [vmem:[#allocation2 + $0x460] sm:$0xff]
          %v2885 = vld [vmem:[#allocation2 + $0x468] sm:$0xff]
          %v2886 = vld [vmem:[#allocation2 + $0x470] sm:$0xff]
          %v2887 = vld [vmem:[#allocation2 + $0x478] sm:$0xff]
          %v2888 = vld [vmem:[#allocation2 + $0x480] sm:$0xff]
          %v2889 = vld [vmem:[#allocation2 + $0x488] sm:$0xff]
          %v2890 = vld [vmem:[#allocation2 + $0x490] sm:$0xff]
          %v2891 = vld [vmem:[#allocation2 + $0x498] sm:$0xff]
          %v2892 = vld [vmem:[#allocation2 + $0x4a0] sm:$0xff]
          %v2893 = vld [vmem:[#allocation2 + $0x4a8] sm:$0xff]
          %v2894 = vld [vmem:[#allocation2 + $0x4b0] sm:$0xff]
          %v2895 = vld [vmem:[#allocation2 + $0x4b8] sm:$0xff]
          %v2896 = vld [vmem:[#allocation2 + $0x4c0] sm:$0xff]
          %v2897 = vld [vmem:[#allocation2 + $0x4c8] sm:$0xff]
          %v2898 = vld [vmem:[#allocation2 + $0x4d0] sm:$0xff]
          %v2899 = vld [vmem:[#allocation2 + $0x4d8] sm:$0xff]
          %v2900 = vld [vmem:[#allocation2 + $0x4e0] sm:$0xff]
          %v2901 = vld [vmem:[#allocation2 + $0x4e8] sm:$0xff]
          %v2902 = vld [vmem:[#allocation2 + $0x4f0] sm:$0xff]
          %v2903 = vld [vmem:[#allocation2 + $0x4f8] sm:$0xff]
          %v2904 = vld [vmem:[#allocation2 + $0x500] sm:$0xff]
          %v2905 = vld [vmem:[#allocation2 + $0x508] sm:$0xff]
          %v2906 = vld [vmem:[#allocation2 + $0x510] sm:$0xff]
          %v2907 = vld [vmem:[#allocation2 + $0x518] sm:$0xff]
          %v2908 = vld [vmem:[#allocation2 + $0x520] sm:$0xff]
          %v2909 = vld [vmem:[#allocation2 + $0x528] sm:$0xff]
          %v2910 = vld [vmem:[#allocation2 + $0x530] sm:$0xff]
          %v2911 = vld [vmem:[#allocation2 + $0x538] sm:$0xff]
          %v2912 = vld [vmem:[#allocation2 + $0x540] sm:$0xff]
          %v2913 = vld [vmem:[#allocation2 + $0x548] sm:$0xff]
          %v2914 = vld [vmem:[#allocation2 + $0x550] sm:$0xff]
          %v2915 = vld [vmem:[#allocation2 + $0x558] sm:$0xff]
          %v2916 = vld [vmem:[#allocation2 + $0x560] sm:$0xff]
          %v2917 = vld [vmem:[#allocation2 + $0x568] sm:$0xff]
          %v2918 = vld [vmem:[#allocation2 + $0x570] sm:$0xff]
          %v2919 = vld [vmem:[#allocation2 + $0x578] sm:$0xff]
          %v2920 = vld [vmem:[#allocation2 + $0x580] sm:$0xff]
          %v2921 = vld [vmem:[#allocation2 + $0x588] sm:$0xff]
          %v2922 = vld [vmem:[#allocation2 + $0x590] sm:$0xff]
          %v2923 = vld [vmem:[#allocation2 + $0x598] sm:$0xff]
          %v2924 = vld [vmem:[#allocation2 + $0x5a0] sm:$0xff]
          %v2925 = vld [vmem:[#allocation2 + $0x5a8] sm:$0xff]
          %v2926 = vld [vmem:[#allocation2 + $0x5b0] sm:$0xff]
          %v2927 = vld [vmem:[#allocation2 + $0x5b8] sm:$0xff]
          %v2928 = vld [vmem:[#allocation2 + $0x5c0] sm:$0xff]
          %v2929 = vld [vmem:[#allocation2 + $0x5c8] sm:$0xff]
          %v2930 = vld [vmem:[#allocation2 + $0x5d0] sm:$0xff]
          %v2931 = vld [vmem:[#allocation2 + $0x5d8] sm:$0xff]
          %v2932 = vld [vmem:[#allocation2 + $0x5e0] sm:$0xff]
          %v2933 = vld [vmem:[#allocation2 + $0x5e8] sm:$0xff]
          %v2934 = vld [vmem:[#allocation2 + $0x5f0] sm:$0xff]
          %v2935 = vld [vmem:[#allocation2 + $0x5f8] sm:$0xff]
          %v2936 = vld [vmem:[#allocation2 + $0x600] sm:$0xff]
          %v2937 = vld [vmem:[#allocation2 + $0x608] sm:$0xff]
          %v2938 = vld [vmem:[#allocation2 + $0x610] sm:$0xff]
          %v2939 = vld [vmem:[#allocation2 + $0x618] sm:$0xff]
          %v2940 = vld [vmem:[#allocation2 + $0x620] sm:$0xff]
          %v2941 = vld [vmem:[#allocation2 + $0x628] sm:$0xff]
          %v2942 = vld [vmem:[#allocation2 + $0x630] sm:$0xff]
          %v2943 = vld [vmem:[#allocation2 + $0x638] sm:$0xff]
          %v2944 = vld [vmem:[#allocation2 + $0x640] sm:$0xff]
          %v2945 = vld [vmem:[#allocation2 + $0x648] sm:$0xff]
          %v2946 = vld [vmem:[#allocation2 + $0x650] sm:$0xff]
          %v2947 = vld [vmem:[#allocation2 + $0x658] sm:$0xff]
          %v2948 = vld [vmem:[#allocation2 + $0x660] sm:$0xff]
          %v2949 = vld [vmem:[#allocation2 + $0x668] sm:$0xff]
          %v2950 = vld [vmem:[#allocation2 + $0x670] sm:$0xff]
          %v2951 = vld [vmem:[#allocation2 + $0x678] sm:$0xff]
          %v2952 = vld [vmem:[#allocation2 + $0x680] sm:$0xff]
          %v2953 = vld [vmem:[#allocation2 + $0x688] sm:$0xff]
          %v2954 = vld [vmem:[#allocation2 + $0x690] sm:$0xff]
          %v2955 = vld [vmem:[#allocation2 + $0x698] sm:$0xff]
          %v2956 = vld [vmem:[#allocation2 + $0x6a0] sm:$0xff]
          %v2957 = vld [vmem:[#allocation2 + $0x6a8] sm:$0xff]
          %v2958 = vld [vmem:[#allocation2 + $0x6b0] sm:$0xff]
          %v2959 = vld [vmem:[#allocation2 + $0x6b8] sm:$0xff]
          %v2960 = vld [vmem:[#allocation2 + $0x6c0] sm:$0xff]
          %v2961 = vld [vmem:[#allocation2 + $0x6c8] sm:$0xff]
          %v2962 = vld [vmem:[#allocation2 + $0x6d0] sm:$0xff]
          %v2963 = vld [vmem:[#allocation2 + $0x6d8] sm:$0xff]
          %v2964 = vld [vmem:[#allocation2 + $0x6e0] sm:$0xff]
          %v2965 = vld [vmem:[#allocation2 + $0x6e8] sm:$0xff]
          %v2966 = vld [vmem:[#allocation2 + $0x6f0] sm:$0xff]
          %v2967 = vld [vmem:[#allocation2 + $0x6f8] sm:$0xff]
          %v2968 = vld [vmem:[#allocation2 + $0x700] sm:$0xff]
          %v2969 = vld [vmem:[#allocation2 + $0x708] sm:$0xff]
          %v2970 = vld [vmem:[#allocation2 + $0x710] sm:$0xff]
          %v2971 = vld [vmem:[#allocation2 + $0x718] sm:$0xff]
          %v2972 = vld [vmem:[#allocation2 + $0x720] sm:$0xff]
          %v2973 = vld [vmem:[#allocation2 + $0x728] sm:$0xff]
          %v2974 = vld [vmem:[#allocation2 + $0x730] sm:$0xff]
          %v2975 = vld [vmem:[#allocation2 + $0x738] sm:$0xff]
          %v2976 = vld [vmem:[#allocation2 + $0x740] sm:$0xff]
          %v2977 = vld [vmem:[#allocation2 + $0x748] sm:$0xff]
          %v2978 = vld [vmem:[#allocation2 + $0x750] sm:$0xff]
          %v2979 = vld [vmem:[#allocation2 + $0x758] sm:$0xff]
          %v2980 = vld [vmem:[#allocation2 + $0x760] sm:$0xff]
          %v2981 = vld [vmem:[#allocation2 + $0x768] sm:$0xff]
          %v2982 = vld [vmem:[#allocation2 + $0x770] sm:$0xff]
          %v2983 = vld [vmem:[#allocation2 + $0x778] sm:$0xff]
          %v2984 = vld [vmem:[#allocation2 + $0x780] sm:$0xff]
          %v2985 = vld [vmem:[#allocation2 + $0x788] sm:$0xff]
          %v2986 = vld [vmem:[#allocation2 + $0x790] sm:$0xff]
          %v2987 = vld [vmem:[#allocation2 + $0x798] sm:$0xff]
          %v2988 = vld [vmem:[#allocation2 + $0x7a0] sm:$0xff]
          %v2989 = vld [vmem:[#allocation2 + $0x7a8] sm:$0xff]
          %v2990 = vld [vmem:[#allocation2 + $0x7b0] sm:$0xff]
          %v2991 = vld [vmem:[#allocation2 + $0x7b8] sm:$0xff]
          %v2992 = vld [vmem:[#allocation2 + $0x7c0] sm:$0xff]
          %v2993 = vld [vmem:[#allocation2 + $0x7c8] sm:$0xff]
          %v2994 = vld [vmem:[#allocation2 + $0x7d0] sm:$0xff]
          %v2995 = vld [vmem:[#allocation2 + $0x7d8] sm:$0xff]
          %v2996 = vld [vmem:[#allocation2 + $0x7e0] sm:$0xff]
          %v2997 = vld [vmem:[#allocation2 + $0x7e8] sm:$0xff]
          %v2998 = vld [vmem:[#allocation2 + $0x7f0] sm:$0xff]
          %v2999 = vld [vmem:[#allocation2 + $0x7f8] sm:$0xff]
          %v3000 = vpack.c.bf16 %v2748, %v2744
          %v3001 = vpack.c.bf16 %v2749, %v2745
          %v3002 = vpack.c.bf16 %v2750, %v2746
          %v3003 = vpack.c.bf16 %v2751, %v2747
          %v3004 = vpack.c.bf16 %v2756, %v2752
          %v3005 = vpack.c.bf16 %v2757, %v2753
          %v3006 = vpack.c.bf16 %v2758, %v2754
          %v3007 = vpack.c.bf16 %v2759, %v2755
          %v3008 = vpack.c.bf16 %v2764, %v2760
          %v3009 = vpack.c.bf16 %v2765, %v2761
          %v3010 = vpack.c.bf16 %v2766, %v2762
          %v3011 = vpack.c.bf16 %v2767, %v2763
          %v3012 = vpack.c.bf16 %v2772, %v2768
          %v3013 = vpack.c.bf16 %v2773, %v2769
          %v3014 = vpack.c.bf16 %v2774, %v2770
          %v3015 = vpack.c.bf16 %v2775, %v2771
          %v3016 = vpack.c.bf16 %v2780, %v2776
          %v3017 = vpack.c.bf16 %v2781, %v2777
          %v3018 = vpack.c.bf16 %v2782, %v2778
          %v3019 = vpack.c.bf16 %v2783, %v2779
          %v3020 = vpack.c.bf16 %v2788, %v2784
          %v3021 = vpack.c.bf16 %v2789, %v2785
          %v3022 = vpack.c.bf16 %v2790, %v2786
          %v3023 = vpack.c.bf16 %v2791, %v2787
          %v3024 = vpack.c.bf16 %v2796, %v2792
          %v3025 = vpack.c.bf16 %v2797, %v2793
          %v3026 = vpack.c.bf16 %v2798, %v2794
          %v3027 = vpack.c.bf16 %v2799, %v2795
          %v3028 = vpack.c.bf16 %v2804, %v2800
          %v3029 = vpack.c.bf16 %v2805, %v2801
          %v3030 = vpack.c.bf16 %v2806, %v2802
          %v3031 = vpack.c.bf16 %v2807, %v2803
          %v3032 = vpack.c.bf16 %v2812, %v2808
          %v3033 = vpack.c.bf16 %v2813, %v2809
          %v3034 = vpack.c.bf16 %v2814, %v2810
          %v3035 = vpack.c.bf16 %v2815, %v2811
          %v3036 = vpack.c.bf16 %v2820, %v2816
          %v3037 = vpack.c.bf16 %v2821, %v2817
          %v3038 = vpack.c.bf16 %v2822, %v2818
          %v3039 = vpack.c.bf16 %v2823, %v2819
          %v3040 = vpack.c.bf16 %v2828, %v2824
          %v3041 = vpack.c.bf16 %v2829, %v2825
          %v3042 = vpack.c.bf16 %v2830, %v2826
          %v3043 = vpack.c.bf16 %v2831, %v2827
          %v3044 = vpack.c.bf16 %v2836, %v2832
          %v3045 = vpack.c.bf16 %v2837, %v2833
          %v3046 = vpack.c.bf16 %v2838, %v2834
          %v3047 = vpack.c.bf16 %v2839, %v2835
          %v3048 = vpack.c.bf16 %v2844, %v2840
          %v3049 = vpack.c.bf16 %v2845, %v2841
          %v3050 = vpack.c.bf16 %v2846, %v2842
          %v3051 = vpack.c.bf16 %v2847, %v2843
          %v3052 = vpack.c.bf16 %v2852, %v2848
          %v3053 = vpack.c.bf16 %v2853, %v2849
          %v3054 = vpack.c.bf16 %v2854, %v2850
          %v3055 = vpack.c.bf16 %v2855, %v2851
          %v3056 = vpack.c.bf16 %v2860, %v2856
          %v3057 = vpack.c.bf16 %v2861, %v2857
          %v3058 = vpack.c.bf16 %v2862, %v2858
          %v3059 = vpack.c.bf16 %v2863, %v2859
          %v3060 = vpack.c.bf16 %v2868, %v2864
          %v3061 = vpack.c.bf16 %v2869, %v2865
          %v3062 = vpack.c.bf16 %v2870, %v2866
          %v3063 = vpack.c.bf16 %v2871, %v2867
          %v3064 = vpack.c.bf16 %v2876, %v2872
          %v3065 = vpack.c.bf16 %v2877, %v2873
          %v3066 = vpack.c.bf16 %v2878, %v2874
          %v3067 = vpack.c.bf16 %v2879, %v2875
          %v3068 = vpack.c.bf16 %v2884, %v2880
          %v3069 = vpack.c.bf16 %v2885, %v2881
          %v3070 = vpack.c.bf16 %v2886, %v2882
          %v3071 = vpack.c.bf16 %v2887, %v2883
          %v3072 = vpack.c.bf16 %v2892, %v2888
          %v3073 = vpack.c.bf16 %v2893, %v2889
          %v3074 = vpack.c.bf16 %v2894, %v2890
          %v3075 = vpack.c.bf16 %v2895, %v2891
          %v3076 = vpack.c.bf16 %v2900, %v2896
          %v3077 = vpack.c.bf16 %v2901, %v2897
          %v3078 = vpack.c.bf16 %v2902, %v2898
          %v3079 = vpack.c.bf16 %v2903, %v2899
          %v3080 = vpack.c.bf16 %v2908, %v2904
          %v3081 = vpack.c.bf16 %v2909, %v2905
          %v3082 = vpack.c.bf16 %v2910, %v2906
          %v3083 = vpack.c.bf16 %v2911, %v2907
          %v3084 = vpack.c.bf16 %v2916, %v2912
          %v3085 = vpack.c.bf16 %v2917, %v2913
          %v3086 = vpack.c.bf16 %v2918, %v2914
          %v3087 = vpack.c.bf16 %v2919, %v2915
          %v3088 = vpack.c.bf16 %v2924, %v2920
          %v3089 = vpack.c.bf16 %v2925, %v2921
          %v3090 = vpack.c.bf16 %v2926, %v2922
          %v3091 = vpack.c.bf16 %v2927, %v2923
          %v3092 = vpack.c.bf16 %v2932, %v2928
          %v3093 = vpack.c.bf16 %v2933, %v2929
          %v3094 = vpack.c.bf16 %v2934, %v2930
          %v3095 = vpack.c.bf16 %v2935, %v2931
          %v3096 = vpack.c.bf16 %v2940, %v2936
          %v3097 = vpack.c.bf16 %v2941, %v2937
          %v3098 = vpack.c.bf16 %v2942, %v2938
          %v3099 = vpack.c.bf16 %v2943, %v2939
          %v3100 = vpack.c.bf16 %v2948, %v2944
          %v3101 = vpack.c.bf16 %v2949, %v2945
          %v3102 = vpack.c.bf16 %v2950, %v2946
          %v3103 = vpack.c.bf16 %v2951, %v2947
          %v3104 = vpack.c.bf16 %v2956, %v2952
          %v3105 = vpack.c.bf16 %v2957, %v2953
          %v3106 = vpack.c.bf16 %v2958, %v2954
          %v3107 = vpack.c.bf16 %v2959, %v2955
          %v3108 = vpack.c.bf16 %v2964, %v2960
          %v3109 = vpack.c.bf16 %v2965, %v2961
          %v3110 = vpack.c.bf16 %v2966, %v2962
          %v3111 = vpack.c.bf16 %v2967, %v2963
          %v3112 = vpack.c.bf16 %v2972, %v2968
          %v3113 = vpack.c.bf16 %v2973, %v2969
          %v3114 = vpack.c.bf16 %v2974, %v2970
          %v3115 = vpack.c.bf16 %v2975, %v2971
          %v3116 = vpack.c.bf16 %v2980, %v2976
          %v3117 = vpack.c.bf16 %v2981, %v2977
          %v3118 = vpack.c.bf16 %v2982, %v2978
          %v3119 = vpack.c.bf16 %v2983, %v2979
          %v3120 = vpack.c.bf16 %v2988, %v2984
          %v3121 = vpack.c.bf16 %v2989, %v2985
          %v3122 = vpack.c.bf16 %v2990, %v2986
          %v3123 = vpack.c.bf16 %v2991, %v2987
          %v3124 = vpack.c.bf16 %v2996, %v2992
          %v3125 = vpack.c.bf16 %v2997, %v2993
          %v3126 = vpack.c.bf16 %v2998, %v2994
          %v3127 = vpack.c.bf16 %v2999, %v2995
          %v3256 = vunpack.c.l.b16 %v3000
          %v3257 = vunpack.c.l.b16 %v3001
          %v3258 = vunpack.c.l.b16 %v3002
          %v3259 = vunpack.c.l.b16 %v3003
          %v3260 = vunpack.c.h.b16 %v3000
          %v3261 = vunpack.c.h.b16 %v3001
          %v3262 = vunpack.c.h.b16 %v3002
          %v3263 = vunpack.c.h.b16 %v3003
          %v3264 = vunpack.c.l.b16 %v3004
          %v3265 = vunpack.c.l.b16 %v3005
          %v3266 = vunpack.c.l.b16 %v3006
          %v3267 = vunpack.c.l.b16 %v3007
          %v3268 = vunpack.c.h.b16 %v3004
          %v3269 = vunpack.c.h.b16 %v3005
          %v3270 = vunpack.c.h.b16 %v3006
          %v3271 = vunpack.c.h.b16 %v3007
          %v3272 = vunpack.c.l.b16 %v3008
          %v3273 = vunpack.c.l.b16 %v3009
          %v3274 = vunpack.c.l.b16 %v3010
          %v3275 = vunpack.c.l.b16 %v3011
          %v3276 = vunpack.c.h.b16 %v3008
          %v3277 = vunpack.c.h.b16 %v3009
          %v3278 = vunpack.c.h.b16 %v3010
          %v3279 = vunpack.c.h.b16 %v3011
          %v3280 = vunpack.c.l.b16 %v3012
          %v3281 = vunpack.c.l.b16 %v3013
          %v3282 = vunpack.c.l.b16 %v3014
          %v3283 = vunpack.c.l.b16 %v3015
          %v3284 = vunpack.c.h.b16 %v3012
          %v3285 = vunpack.c.h.b16 %v3013
          %v3286 = vunpack.c.h.b16 %v3014
          %v3287 = vunpack.c.h.b16 %v3015
          %v3288 = vunpack.c.l.b16 %v3016
          %v3289 = vunpack.c.l.b16 %v3017
          %v3290 = vunpack.c.l.b16 %v3018
          %v3291 = vunpack.c.l.b16 %v3019
          %v3292 = vunpack.c.h.b16 %v3016
          %v3293 = vunpack.c.h.b16 %v3017
          %v3294 = vunpack.c.h.b16 %v3018
          %v3295 = vunpack.c.h.b16 %v3019
          %v3296 = vunpack.c.l.b16 %v3020
          %v3297 = vunpack.c.l.b16 %v3021
          %v3298 = vunpack.c.l.b16 %v3022
          %v3299 = vunpack.c.l.b16 %v3023
          %v3300 = vunpack.c.h.b16 %v3020
          %v3301 = vunpack.c.h.b16 %v3021
          %v3302 = vunpack.c.h.b16 %v3022
          %v3303 = vunpack.c.h.b16 %v3023
          %v3304 = vunpack.c.l.b16 %v3024
          %v3305 = vunpack.c.l.b16 %v3025
          %v3306 = vunpack.c.l.b16 %v3026
          %v3307 = vunpack.c.l.b16 %v3027
          %v3308 = vunpack.c.h.b16 %v3024
          %v3309 = vunpack.c.h.b16 %v3025
          %v3310 = vunpack.c.h.b16 %v3026
          %v3311 = vunpack.c.h.b16 %v3027
          %v3312 = vunpack.c.l.b16 %v3028
          %v3313 = vunpack.c.l.b16 %v3029
          %v3314 = vunpack.c.l.b16 %v3030
          %v3315 = vunpack.c.l.b16 %v3031
          %v3316 = vunpack.c.h.b16 %v3028
          %v3317 = vunpack.c.h.b16 %v3029
          %v3318 = vunpack.c.h.b16 %v3030
          %v3319 = vunpack.c.h.b16 %v3031
          %v3320 = vunpack.c.l.b16 %v3032
          %v3321 = vunpack.c.l.b16 %v3033
          %v3322 = vunpack.c.l.b16 %v3034
          %v3323 = vunpack.c.l.b16 %v3035
          %v3324 = vunpack.c.h.b16 %v3032
          %v3325 = vunpack.c.h.b16 %v3033
          %v3326 = vunpack.c.h.b16 %v3034
          %v3327 = vunpack.c.h.b16 %v3035
          %v3328 = vunpack.c.l.b16 %v3036
          %v3329 = vunpack.c.l.b16 %v3037
          %v3330 = vunpack.c.l.b16 %v3038
          %v3331 = vunpack.c.l.b16 %v3039
          %v3332 = vunpack.c.h.b16 %v3036
          %v3333 = vunpack.c.h.b16 %v3037
          %v3334 = vunpack.c.h.b16 %v3038
          %v3335 = vunpack.c.h.b16 %v3039
          %v3336 = vunpack.c.l.b16 %v3040
          %v3337 = vunpack.c.l.b16 %v3041
          %v3338 = vunpack.c.l.b16 %v3042
          %v3339 = vunpack.c.l.b16 %v3043
          %v3340 = vunpack.c.h.b16 %v3040
          %v3341 = vunpack.c.h.b16 %v3041
          %v3342 = vunpack.c.h.b16 %v3042
          %v3343 = vunpack.c.h.b16 %v3043
          %v3344 = vunpack.c.l.b16 %v3044
          %v3345 = vunpack.c.l.b16 %v3045
          %v3346 = vunpack.c.l.b16 %v3046
          %v3347 = vunpack.c.l.b16 %v3047
          %v3348 = vunpack.c.h.b16 %v3044
          %v3349 = vunpack.c.h.b16 %v3045
          %v3350 = vunpack.c.h.b16 %v3046
          %v3351 = vunpack.c.h.b16 %v3047
          %v3352 = vunpack.c.l.b16 %v3048
          %v3353 = vunpack.c.l.b16 %v3049
          %v3354 = vunpack.c.l.b16 %v3050
          %v3355 = vunpack.c.l.b16 %v3051
          %v3356 = vunpack.c.h.b16 %v3048
          %v3357 = vunpack.c.h.b16 %v3049
          %v3358 = vunpack.c.h.b16 %v3050
          %v3359 = vunpack.c.h.b16 %v3051
          %v3360 = vunpack.c.l.b16 %v3052
          %v3361 = vunpack.c.l.b16 %v3053
          %v3362 = vunpack.c.l.b16 %v3054
          %v3363 = vunpack.c.l.b16 %v3055
          %v3364 = vunpack.c.h.b16 %v3052
          %v3365 = vunpack.c.h.b16 %v3053
          %v3366 = vunpack.c.h.b16 %v3054
          %v3367 = vunpack.c.h.b16 %v3055
          %v3368 = vunpack.c.l.b16 %v3056
          %v3369 = vunpack.c.l.b16 %v3057
          %v3370 = vunpack.c.l.b16 %v3058
          %v3371 = vunpack.c.l.b16 %v3059
          %v3372 = vunpack.c.h.b16 %v3056
          %v3373 = vunpack.c.h.b16 %v3057
          %v3374 = vunpack.c.h.b16 %v3058
          %v3375 = vunpack.c.h.b16 %v3059
          %v3376 = vunpack.c.l.b16 %v3060
          %v3377 = vunpack.c.l.b16 %v3061
          %v3378 = vunpack.c.l.b16 %v3062
          %v3379 = vunpack.c.l.b16 %v3063
          %v3380 = vunpack.c.h.b16 %v3060
          %v3381 = vunpack.c.h.b16 %v3061
          %v3382 = vunpack.c.h.b16 %v3062
          %v3383 = vunpack.c.h.b16 %v3063
          %v3384 = vunpack.c.l.b16 %v3064
          %v3385 = vunpack.c.l.b16 %v3065
          %v3386 = vunpack.c.l.b16 %v3066
          %v3387 = vunpack.c.l.b16 %v3067
          %v3388 = vunpack.c.h.b16 %v3064
          %v3389 = vunpack.c.h.b16 %v3065
          %v3390 = vunpack.c.h.b16 %v3066
          %v3391 = vunpack.c.h.b16 %v3067
          %v3392 = vunpack.c.l.b16 %v3068
          %v3393 = vunpack.c.l.b16 %v3069
          %v3394 = vunpack.c.l.b16 %v3070
          %v3395 = vunpack.c.l.b16 %v3071
          %v3396 = vunpack.c.h.b16 %v3068
          %v3397 = vunpack.c.h.b16 %v3069
          %v3398 = vunpack.c.h.b16 %v3070
          %v3399 = vunpack.c.h.b16 %v3071
          %v3400 = vunpack.c.l.b16 %v3072
          %v3401 = vunpack.c.l.b16 %v3073
          %v3402 = vunpack.c.l.b16 %v3074
          %v3403 = vunpack.c.l.b16 %v3075
          %v3404 = vunpack.c.h.b16 %v3072
          %v3405 = vunpack.c.h.b16 %v3073
          %v3406 = vunpack.c.h.b16 %v3074
          %v3407 = vunpack.c.h.b16 %v3075
          %v3408 = vunpack.c.l.b16 %v3076
          %v3409 = vunpack.c.l.b16 %v3077
          %v3410 = vunpack.c.l.b16 %v3078
          %v3411 = vunpack.c.l.b16 %v3079
          %v3412 = vunpack.c.h.b16 %v3076
          %v3413 = vunpack.c.h.b16 %v3077
          %v3414 = vunpack.c.h.b16 %v3078
          %v3415 = vunpack.c.h.b16 %v3079
          %v3416 = vunpack.c.l.b16 %v3080
          %v3417 = vunpack.c.l.b16 %v3081
          %v3418 = vunpack.c.l.b16 %v3082
          %v3419 = vunpack.c.l.b16 %v3083
          %v3420 = vunpack.c.h.b16 %v3080
          %v3421 = vunpack.c.h.b16 %v3081
          %v3422 = vunpack.c.h.b16 %v3082
          %v3423 = vunpack.c.h.b16 %v3083
          %v3424 = vunpack.c.l.b16 %v3084
          %v3425 = vunpack.c.l.b16 %v3085
          %v3426 = vunpack.c.l.b16 %v3086
          %v3427 = vunpack.c.l.b16 %v3087
          %v3428 = vunpack.c.h.b16 %v3084
          %v3429 = vunpack.c.h.b16 %v3085
          %v3430 = vunpack.c.h.b16 %v3086
          %v3431 = vunpack.c.h.b16 %v3087
          %v3432 = vunpack.c.l.b16 %v3088
          %v3433 = vunpack.c.l.b16 %v3089
          %v3434 = vunpack.c.l.b16 %v3090
          %v3435 = vunpack.c.l.b16 %v3091
          %v3436 = vunpack.c.h.b16 %v3088
          %v3437 = vunpack.c.h.b16 %v3089
          %v3438 = vunpack.c.h.b16 %v3090
          %v3439 = vunpack.c.h.b16 %v3091
          %v3440 = vunpack.c.l.b16 %v3092
          %v3441 = vunpack.c.l.b16 %v3093
          %v3442 = vunpack.c.l.b16 %v3094
          %v3443 = vunpack.c.l.b16 %v3095
          %v3444 = vunpack.c.h.b16 %v3092
          %v3445 = vunpack.c.h.b16 %v3093
          %v3446 = vunpack.c.h.b16 %v3094
          %v3447 = vunpack.c.h.b16 %v3095
          %v3448 = vunpack.c.l.b16 %v3096
          %v3449 = vunpack.c.l.b16 %v3097
          %v3450 = vunpack.c.l.b16 %v3098
          %v3451 = vunpack.c.l.b16 %v3099
          %v3452 = vunpack.c.h.b16 %v3096
          %v3453 = vunpack.c.h.b16 %v3097
          %v3454 = vunpack.c.h.b16 %v3098
          %v3455 = vunpack.c.h.b16 %v3099
          %v3456 = vunpack.c.l.b16 %v3100
          %v3457 = vunpack.c.l.b16 %v3101
          %v3458 = vunpack.c.l.b16 %v3102
          %v3459 = vunpack.c.l.b16 %v3103
          %v3460 = vunpack.c.h.b16 %v3100
          %v3461 = vunpack.c.h.b16 %v3101
          %v3462 = vunpack.c.h.b16 %v3102
          %v3463 = vunpack.c.h.b16 %v3103
          %v3464 = vunpack.c.l.b16 %v3104
          %v3465 = vunpack.c.l.b16 %v3105
          %v3466 = vunpack.c.l.b16 %v3106
          %v3467 = vunpack.c.l.b16 %v3107
          %v3468 = vunpack.c.h.b16 %v3104
          %v3469 = vunpack.c.h.b16 %v3105
          %v3470 = vunpack.c.h.b16 %v3106
          %v3471 = vunpack.c.h.b16 %v3107
          %v3472 = vunpack.c.l.b16 %v3108
          %v3473 = vunpack.c.l.b16 %v3109
          %v3474 = vunpack.c.l.b16 %v3110
          %v3475 = vunpack.c.l.b16 %v3111
          %v3476 = vunpack.c.h.b16 %v3108
          %v3477 = vunpack.c.h.b16 %v3109
          %v3478 = vunpack.c.h.b16 %v3110
          %v3479 = vunpack.c.h.b16 %v3111
          %v3480 = vunpack.c.l.b16 %v3112
          %v3481 = vunpack.c.l.b16 %v3113
          %v3482 = vunpack.c.l.b16 %v3114
          %v3483 = vunpack.c.l.b16 %v3115
          %v3484 = vunpack.c.h.b16 %v3112
          %v3485 = vunpack.c.h.b16 %v3113
          %v3486 = vunpack.c.h.b16 %v3114
          %v3487 = vunpack.c.h.b16 %v3115
          %v3488 = vunpack.c.l.b16 %v3116
          %v3489 = vunpack.c.l.b16 %v3117
          %v3490 = vunpack.c.l.b16 %v3118
          %v3491 = vunpack.c.l.b16 %v3119
          %v3492 = vunpack.c.h.b16 %v3116
          %v3493 = vunpack.c.h.b16 %v3117
          %v3494 = vunpack.c.h.b16 %v3118
          %v3495 = vunpack.c.h.b16 %v3119
          %v3496 = vunpack.c.l.b16 %v3120
          %v3497 = vunpack.c.l.b16 %v3121
          %v3498 = vunpack.c.l.b16 %v3122
          %v3499 = vunpack.c.l.b16 %v3123
          %v3500 = vunpack.c.h.b16 %v3120
          %v3501 = vunpack.c.h.b16 %v3121
          %v3502 = vunpack.c.h.b16 %v3122
          %v3503 = vunpack.c.h.b16 %v3123
          %v3504 = vunpack.c.l.b16 %v3124
          %v3505 = vunpack.c.l.b16 %v3125
          %v3506 = vunpack.c.l.b16 %v3126
          %v3507 = vunpack.c.l.b16 %v3127
          %v3508 = vunpack.c.h.b16 %v3124
          %v3509 = vunpack.c.h.b16 %v3125
          %v3510 = vunpack.c.h.b16 %v3126
          %v3511 = vunpack.c.h.b16 %v3127
          %v3512 = vpack.c.b16 %v3257, %v3256
          %v3513 = vpack.c.b16 %v3259, %v3258
          %v3514 = vpack.c.b16 %v3261, %v3260
          %v3515 = vpack.c.b16 %v3263, %v3262
          %v3516 = vpack.c.b16 %v3265, %v3264
          %v3517 = vpack.c.b16 %v3267, %v3266
          %v3518 = vpack.c.b16 %v3269, %v3268
          %v3519 = vpack.c.b16 %v3271, %v3270
          %v3520 = vpack.c.b16 %v3273, %v3272
          %v3521 = vpack.c.b16 %v3275, %v3274
          %v3522 = vpack.c.b16 %v3277, %v3276
          %v3523 = vpack.c.b16 %v3279, %v3278
          %v3524 = vpack.c.b16 %v3281, %v3280
          %v3525 = vpack.c.b16 %v3283, %v3282
          %v3526 = vpack.c.b16 %v3285, %v3284
          %v3527 = vpack.c.b16 %v3287, %v3286
          %v3528 = vpack.c.b16 %v3289, %v3288
          %v3529 = vpack.c.b16 %v3291, %v3290
          %v3530 = vpack.c.b16 %v3293, %v3292
          %v3531 = vpack.c.b16 %v3295, %v3294
          %v3532 = vpack.c.b16 %v3297, %v3296
          %v3533 = vpack.c.b16 %v3299, %v3298
          %v3534 = vpack.c.b16 %v3301, %v3300
          %v3535 = vpack.c.b16 %v3303, %v3302
          %v3536 = vpack.c.b16 %v3305, %v3304
          %v3537 = vpack.c.b16 %v3307, %v3306
          %v3538 = vpack.c.b16 %v3309, %v3308
          %v3539 = vpack.c.b16 %v3311, %v3310
          %v3540 = vpack.c.b16 %v3313, %v3312
          %v3541 = vpack.c.b16 %v3315, %v3314
          %v3542 = vpack.c.b16 %v3317, %v3316
          %v3543 = vpack.c.b16 %v3319, %v3318
          %v3544 = vpack.c.b16 %v3321, %v3320
          %v3545 = vpack.c.b16 %v3323, %v3322
          %v3546 = vpack.c.b16 %v3325, %v3324
          %v3547 = vpack.c.b16 %v3327, %v3326
          %v3548 = vpack.c.b16 %v3329, %v3328
          %v3549 = vpack.c.b16 %v3331, %v3330
          %v3550 = vpack.c.b16 %v3333, %v3332
          %v3551 = vpack.c.b16 %v3335, %v3334
          %v3552 = vpack.c.b16 %v3337, %v3336
          %v3553 = vpack.c.b16 %v3339, %v3338
          %v3554 = vpack.c.b16 %v3341, %v3340
          %v3555 = vpack.c.b16 %v3343, %v3342
          %v3556 = vpack.c.b16 %v3345, %v3344
          %v3557 = vpack.c.b16 %v3347, %v3346
          %v3558 = vpack.c.b16 %v3349, %v3348
          %v3559 = vpack.c.b16 %v3351, %v3350
          %v3560 = vpack.c.b16 %v3353, %v3352
          %v3561 = vpack.c.b16 %v3355, %v3354
          %v3562 = vpack.c.b16 %v3357, %v3356
          %v3563 = vpack.c.b16 %v3359, %v3358
          %v3564 = vpack.c.b16 %v3361, %v3360
          %v3565 = vpack.c.b16 %v3363, %v3362
          %v3566 = vpack.c.b16 %v3365, %v3364
          %v3567 = vpack.c.b16 %v3367, %v3366
          %v3568 = vpack.c.b16 %v3369, %v3368
          %v3569 = vpack.c.b16 %v3371, %v3370
          %v3570 = vpack.c.b16 %v3373, %v3372
          %v3571 = vpack.c.b16 %v3375, %v3374
          %v3572 = vpack.c.b16 %v3377, %v3376
          %v3573 = vpack.c.b16 %v3379, %v3378
          %v3574 = vpack.c.b16 %v3381, %v3380
          %v3575 = vpack.c.b16 %v3383, %v3382
          %v3576 = vpack.c.b16 %v3385, %v3384
          %v3577 = vpack.c.b16 %v3387, %v3386
          %v3578 = vpack.c.b16 %v3389, %v3388
          %v3579 = vpack.c.b16 %v3391, %v3390
          %v3580 = vpack.c.b16 %v3393, %v3392
          %v3581 = vpack.c.b16 %v3395, %v3394
          %v3582 = vpack.c.b16 %v3397, %v3396
          %v3583 = vpack.c.b16 %v3399, %v3398
          %v3584 = vpack.c.b16 %v3401, %v3400
          %v3585 = vpack.c.b16 %v3403, %v3402
          %v3586 = vpack.c.b16 %v3405, %v3404
          %v3587 = vpack.c.b16 %v3407, %v3406
          %v3588 = vpack.c.b16 %v3409, %v3408
          %v3589 = vpack.c.b16 %v3411, %v3410
          %v3590 = vpack.c.b16 %v3413, %v3412
          %v3591 = vpack.c.b16 %v3415, %v3414
          %v3592 = vpack.c.b16 %v3417, %v3416
          %v3593 = vpack.c.b16 %v3419, %v3418
          %v3594 = vpack.c.b16 %v3421, %v3420
          %v3595 = vpack.c.b16 %v3423, %v3422
          %v3596 = vpack.c.b16 %v3425, %v3424
          %v3597 = vpack.c.b16 %v3427, %v3426
          %v3598 = vpack.c.b16 %v3429, %v3428
          %v3599 = vpack.c.b16 %v3431, %v3430
          %v3600 = vpack.c.b16 %v3433, %v3432
          %v3601 = vpack.c.b16 %v3435, %v3434
          %v3602 = vpack.c.b16 %v3437, %v3436
          %v3603 = vpack.c.b16 %v3439, %v3438
          %v3604 = vpack.c.b16 %v3441, %v3440
          %v3605 = vpack.c.b16 %v3443, %v3442
          %v3606 = vpack.c.b16 %v3445, %v3444
          %v3607 = vpack.c.b16 %v3447, %v3446
          %v3608 = vpack.c.b16 %v3449, %v3448
          %v3609 = vpack.c.b16 %v3451, %v3450
          %v3610 = vpack.c.b16 %v3453, %v3452
          %v3611 = vpack.c.b16 %v3455, %v3454
          %v3612 = vpack.c.b16 %v3457, %v3456
          %v3613 = vpack.c.b16 %v3459, %v3458
          %v3614 = vpack.c.b16 %v3461, %v3460
          %v3615 = vpack.c.b16 %v3463, %v3462
          %v3616 = vpack.c.b16 %v3465, %v3464
          %v3617 = vpack.c.b16 %v3467, %v3466
          %v3618 = vpack.c.b16 %v3469, %v3468
          %v3619 = vpack.c.b16 %v3471, %v3470
          %v3620 = vpack.c.b16 %v3473, %v3472
          %v3621 = vpack.c.b16 %v3475, %v3474
          %v3622 = vpack.c.b16 %v3477, %v3476
          %v3623 = vpack.c.b16 %v3479, %v3478
          %v3624 = vpack.c.b16 %v3481, %v3480
          %v3625 = vpack.c.b16 %v3483, %v3482
          %v3626 = vpack.c.b16 %v3485, %v3484
          %v3627 = vpack.c.b16 %v3487, %v3486
          %v3628 = vpack.c.b16 %v3489, %v3488
          %v3629 = vpack.c.b16 %v3491, %v3490
          %v3630 = vpack.c.b16 %v3493, %v3492
          %v3631 = vpack.c.b16 %v3495, %v3494
          %v3632 = vpack.c.b16 %v3497, %v3496
          %v3633 = vpack.c.b16 %v3499, %v3498
          %v3634 = vpack.c.b16 %v3501, %v3500
          %v3635 = vpack.c.b16 %v3503, %v3502
          %v3636 = vpack.c.b16 %v3505, %v3504
          %v3637 = vpack.c.b16 %v3507, %v3506
          %v3638 = vpack.c.b16 %v3509, %v3508
          %v3639 = vpack.c.b16 %v3511, %v3510
          %3768 = vst [vmem:[%s232] sm:$0xff] %v3512
          %3769 = vst [vmem:[%s232 + $0x8] sm:$0xff] %v3513
          %3770 = vst [vmem:[%s232 + $0x10] sm:$0xff] %v3514
          %3771 = vst [vmem:[%s232 + $0x18] sm:$0xff] %v3515
          %3772 = vst [vmem:[%s232 + $0x20] sm:$0xff] %v3516
          %3773 = vst [vmem:[%s232 + $0x28] sm:$0xff] %v3517
          %3774 = vst [vmem:[%s232 + $0x30] sm:$0xff] %v3518
          %3775 = vst [vmem:[%s232 + $0x38] sm:$0xff] %v3519
          %3776 = vst [vmem:[%s232 + $0x40] sm:$0xff] %v3520
          %3777 = vst [vmem:[%s232 + $0x48] sm:$0xff] %v3521
          %3778 = vst [vmem:[%s232 + $0x50] sm:$0xff] %v3522
          %3779 = vst [vmem:[%s232 + $0x58] sm:$0xff] %v3523
          %3780 = vst [vmem:[%s232 + $0x60] sm:$0xff] %v3524
          %3781 = vst [vmem:[%s232 + $0x68] sm:$0xff] %v3525
          %3782 = vst [vmem:[%s232 + $0x70] sm:$0xff] %v3526
          %3783 = vst [vmem:[%s232 + $0x78] sm:$0xff] %v3527
          %3784 = vst [vmem:[%s232 + $0x80] sm:$0xff] %v3528
          %3785 = vst [vmem:[%s232 + $0x88] sm:$0xff] %v3529
          %3786 = vst [vmem:[%s232 + $0x90] sm:$0xff] %v3530
          %3787 = vst [vmem:[%s232 + $0x98] sm:$0xff] %v3531
          %3788 = vst [vmem:[%s232 + $0xa0] sm:$0xff] %v3532
          %3789 = vst [vmem:[%s232 + $0xa8] sm:$0xff] %v3533
          %3790 = vst [vmem:[%s232 + $0xb0] sm:$0xff] %v3534
          %3791 = vst [vmem:[%s232 + $0xb8] sm:$0xff] %v3535
          %3792 = vst [vmem:[%s232 + $0xc0] sm:$0xff] %v3536
          %3793 = vst [vmem:[%s232 + $0xc8] sm:$0xff] %v3537
          %3794 = vst [vmem:[%s232 + $0xd0] sm:$0xff] %v3538
          %3795 = vst [vmem:[%s232 + $0xd8] sm:$0xff] %v3539
          %3796 = vst [vmem:[%s232 + $0xe0] sm:$0xff] %v3540
          %3797 = vst [vmem:[%s232 + $0xe8] sm:$0xff] %v3541
          %3798 = vst [vmem:[%s232 + $0xf0] sm:$0xff] %v3542
          %3799 = vst [vmem:[%s232 + $0xf8] sm:$0xff] %v3543
          %3800 = vst [vmem:[%s232 + $0x100] sm:$0xff] %v3544
          %3801 = vst [vmem:[%s232 + $0x108] sm:$0xff] %v3545
          %3802 = vst [vmem:[%s232 + $0x110] sm:$0xff] %v3546
          %3803 = vst [vmem:[%s232 + $0x118] sm:$0xff] %v3547
          %3804 = vst [vmem:[%s232 + $0x120] sm:$0xff] %v3548
          %3805 = vst [vmem:[%s232 + $0x128] sm:$0xff] %v3549
          %3806 = vst [vmem:[%s232 + $0x130] sm:$0xff] %v3550
          %3807 = vst [vmem:[%s232 + $0x138] sm:$0xff] %v3551
          %3808 = vst [vmem:[%s232 + $0x140] sm:$0xff] %v3552
          %3809 = vst [vmem:[%s232 + $0x148] sm:$0xff] %v3553
          %3810 = vst [vmem:[%s232 + $0x150] sm:$0xff] %v3554
          %3811 = vst [vmem:[%s232 + $0x158] sm:$0xff] %v3555
          %3812 = vst [vmem:[%s232 + $0x160] sm:$0xff] %v3556
          %3813 = vst [vmem:[%s232 + $0x168] sm:$0xff] %v3557
          %3814 = vst [vmem:[%s232 + $0x170] sm:$0xff] %v3558
          %3815 = vst [vmem:[%s232 + $0x178] sm:$0xff] %v3559
          %3816 = vst [vmem:[%s232 + $0x180] sm:$0xff] %v3560
          %3817 = vst [vmem:[%s232 + $0x188] sm:$0xff] %v3561
          %3818 = vst [vmem:[%s232 + $0x190] sm:$0xff] %v3562
          %3819 = vst [vmem:[%s232 + $0x198] sm:$0xff] %v3563
          %3820 = vst [vmem:[%s232 + $0x1a0] sm:$0xff] %v3564
          %3821 = vst [vmem:[%s232 + $0x1a8] sm:$0xff] %v3565
          %3822 = vst [vmem:[%s232 + $0x1b0] sm:$0xff] %v3566
          %3823 = vst [vmem:[%s232 + $0x1b8] sm:$0xff] %v3567
          %3824 = vst [vmem:[%s232 + $0x1c0] sm:$0xff] %v3568
          %3825 = vst [vmem:[%s232 + $0x1c8] sm:$0xff] %v3569
          %3826 = vst [vmem:[%s232 + $0x1d0] sm:$0xff] %v3570
          %3827 = vst [vmem:[%s232 + $0x1d8] sm:$0xff] %v3571
          %3828 = vst [vmem:[%s232 + $0x1e0] sm:$0xff] %v3572
          %3829 = vst [vmem:[%s232 + $0x1e8] sm:$0xff] %v3573
          %3830 = vst [vmem:[%s232 + $0x1f0] sm:$0xff] %v3574
          %3831 = vst [vmem:[%s232 + $0x1f8] sm:$0xff] %v3575
          %3832 = vst [vmem:[%s232 + $0x200] sm:$0xff] %v3576
          %3833 = vst [vmem:[%s232 + $0x208] sm:$0xff] %v3577
          %3834 = vst [vmem:[%s232 + $0x210] sm:$0xff] %v3578
          %3835 = vst [vmem:[%s232 + $0x218] sm:$0xff] %v3579
          %3836 = vst [vmem:[%s232 + $0x220] sm:$0xff] %v3580
          %3837 = vst [vmem:[%s232 + $0x228] sm:$0xff] %v3581
          %3838 = vst [vmem:[%s232 + $0x230] sm:$0xff] %v3582
          %3839 = vst [vmem:[%s232 + $0x238] sm:$0xff] %v3583
          %3840 = vst [vmem:[%s232 + $0x240] sm:$0xff] %v3584
          %3841 = vst [vmem:[%s232 + $0x248] sm:$0xff] %v3585
          %3842 = vst [vmem:[%s232 + $0x250] sm:$0xff] %v3586
          %3843 = vst [vmem:[%s232 + $0x258] sm:$0xff] %v3587
          %3844 = vst [vmem:[%s232 + $0x260] sm:$0xff] %v3588
          %3845 = vst [vmem:[%s232 + $0x268] sm:$0xff] %v3589
          %3846 = vst [vmem:[%s232 + $0x270] sm:$0xff] %v3590
          %3847 = vst [vmem:[%s232 + $0x278] sm:$0xff] %v3591
          %3848 = vst [vmem:[%s232 + $0x280] sm:$0xff] %v3592
          %3849 = vst [vmem:[%s232 + $0x288] sm:$0xff] %v3593
          %3850 = vst [vmem:[%s232 + $0x290] sm:$0xff] %v3594
          %3851 = vst [vmem:[%s232 + $0x298] sm:$0xff] %v3595
          %3852 = vst [vmem:[%s232 + $0x2a0] sm:$0xff] %v3596
          %3853 = vst [vmem:[%s232 + $0x2a8] sm:$0xff] %v3597
          %3854 = vst [vmem:[%s232 + $0x2b0] sm:$0xff] %v3598
          %3855 = vst [vmem:[%s232 + $0x2b8] sm:$0xff] %v3599
          %3856 = vst [vmem:[%s232 + $0x2c0] sm:$0xff] %v3600
          %3857 = vst [vmem:[%s232 + $0x2c8] sm:$0xff] %v3601
          %3858 = vst [vmem:[%s232 + $0x2d0] sm:$0xff] %v3602
          %3859 = vst [vmem:[%s232 + $0x2d8] sm:$0xff] %v3603
          %3860 = vst [vmem:[%s232 + $0x2e0] sm:$0xff] %v3604
          %3861 = vst [vmem:[%s232 + $0x2e8] sm:$0xff] %v3605
          %3862 = vst [vmem:[%s232 + $0x2f0] sm:$0xff] %v3606
          %3863 = vst [vmem:[%s232 + $0x2f8] sm:$0xff] %v3607
          %3864 = vst [vmem:[%s232 + $0x300] sm:$0xff] %v3608
          %3865 = vst [vmem:[%s232 + $0x308] sm:$0xff] %v3609
          %3866 = vst [vmem:[%s232 + $0x310] sm:$0xff] %v3610
          %3867 = vst [vmem:[%s232 + $0x318] sm:$0xff] %v3611
          %3868 = vst [vmem:[%s232 + $0x320] sm:$0xff] %v3612
          %3869 = vst [vmem:[%s232 + $0x328] sm:$0xff] %v3613
          %3870 = vst [vmem:[%s232 + $0x330] sm:$0xff] %v3614
          %3871 = vst [vmem:[%s232 + $0x338] sm:$0xff] %v3615
          %3872 = vst [vmem:[%s232 + $0x340] sm:$0xff] %v3616
          %3873 = vst [vmem:[%s232 + $0x348] sm:$0xff] %v3617
          %3874 = vst [vmem:[%s232 + $0x350] sm:$0xff] %v3618
          %3875 = vst [vmem:[%s232 + $0x358] sm:$0xff] %v3619
          %3876 = vst [vmem:[%s232 + $0x360] sm:$0xff] %v3620
          %3877 = vst [vmem:[%s232 + $0x368] sm:$0xff] %v3621
          %3878 = vst [vmem:[%s232 + $0x370] sm:$0xff] %v3622
          %3879 = vst [vmem:[%s232 + $0x378] sm:$0xff] %v3623
          %3880 = vst [vmem:[%s232 + $0x380] sm:$0xff] %v3624
          %3881 = vst [vmem:[%s232 + $0x388] sm:$0xff] %v3625
          %3882 = vst [vmem:[%s232 + $0x390] sm:$0xff] %v3626
          %3883 = vst [vmem:[%s232 + $0x398] sm:$0xff] %v3627
          %3884 = vst [vmem:[%s232 + $0x3a0] sm:$0xff] %v3628
          %3885 = vst [vmem:[%s232 + $0x3a8] sm:$0xff] %v3629
          %3886 = vst [vmem:[%s232 + $0x3b0] sm:$0xff] %v3630
          %3887 = vst [vmem:[%s232 + $0x3b8] sm:$0xff] %v3631
          %3888 = vst [vmem:[%s232 + $0x3c0] sm:$0xff] %v3632
          %3889 = vst [vmem:[%s232 + $0x3c8] sm:$0xff] %v3633
          %3890 = vst [vmem:[%s232 + $0x3d0] sm:$0xff] %v3634
          %3891 = vst [vmem:[%s232 + $0x3d8] sm:$0xff] %v3635
          %3892 = vst [vmem:[%s232 + $0x3e0] sm:$0xff] %v3636
          %3893 = vst [vmem:[%s232 + $0x3e8] sm:$0xff] %v3637
          %3894 = vst [vmem:[%s232 + $0x3f0] sm:$0xff] %v3638
          %3895 = vst [vmem:[%s232 + $0x3f8] sm:$0xff] %v3639
        $region44: #{tpu_custom_call.1} parent=27 // pred_fallthru
          _
        %s3896 = sand.u32 %s107, 1
        %s3897 = scalar_lea.sflag [#allocation5], %s3896
        %s3898 = sand.u32 %s107, 1
        %s3899 = smul.addr %s3898, 1024
        %s3900 = scalar_lea.vmem [#allocation8], %s3899
        // Predicated region
        $region45: #{tpu_custom_call.1} parent=27 // pred_check
          %p3901 = pneg %p117
        $region46: #{tpu_custom_call.1} parent=27 // pred_check_branch
          %3903 = sbr.rel (%p3901) target = $region48
        $region47: #{tpu_custom_call.1} parent=27 // pred_region
          %s3904 = smul.u32 64, %s27
          %s3905 = smul.u32 4, %s28
          %s3907 = ssub.s32 16384, 16384
          %3908 = vsyncadd %s3897, %s3907
          %s3909 = smul.addr %s3904, 8
          %s3910 = sadd.s32 %s3905, %s3909
          %s3911 = smul.addr %s3910, 64
          %s3912 = scalar_lea.hbm %s2, %s3911
          %s3913 = sshll.u32 %s3900, 4
          %s3914 = int_to_ptr.vmem [resolvable:$true] %s3913
          %3919 = dma.vmem_to_hbm [thread:$0]  %s3914, 16384, %s3912, %s3897, 256, 512, 16
        $region48: #{tpu_custom_call.1} parent=27 // pred_fallthru
          _
      $region28: #{tpu_custom_call.1} parent=5 // pred_fallthru
        _
      %p3920 = scmp.le.s32.totalorder 2, %s17
      // Predicated region
      $region49: #{tpu_custom_call.1} parent=5 // pred_check
        %p3921 = pneg %p3920
      $region50: #{tpu_custom_call.1} parent=5 // pred_check_branch
        %3923 = sbr.rel (%p3921) target = $region52
      $region51: #{tpu_custom_call.1} parent=5 // pred_region
        %s3924 = ssub.s32 %s17, 2
        // Predicated region
        $region53: #{tpu_custom_call.1} parent=51 // pred_check
          %p3925 = pneg %p123
        $region54: #{tpu_custom_call.1} parent=51 // pred_check_branch
          %3927 = sbr.rel (%p3925) target = $region56
        $region55: #{tpu_custom_call.1} parent=51 // pred_region
          %s3928 = sand.u32 %s108, 1
          %s3929 = scalar_lea.sflag [#allocation5], %s3928
          %s3930 = sand.u32 %s108, 1
          %s3931 = smul.addr %s3930, 1024
          %s3932 = scalar_lea.vmem [#allocation8], %s3931
          %3933 = dma.done %s3929, 16384
        $region56: #{tpu_custom_call.1} parent=51 // pred_fallthru
          _
      $region52: #{tpu_custom_call.1} parent=5 // pred_fallthru
        _
    $region6: #{tpu_custom_call.1} parent=1 // loop_footer
      %s21 = sadd.s32 1, %s17
    $region7: #{tpu_custom_call.1} parent=1 // loop_footer_branch
      %16 = sbr.rel target = $region3
    $region8: #{tpu_custom_call.1} parent=1 // loop_exit
      _
    %3934 = vsyncpa [#allocation4], 1
    %s3935 = scalar_lea.sflag [#allocation4], 1
    %3936 = vsyncpa %s3935, 1
    %3937 = vsyncpa [#allocation7], 1
    %s3938 = scalar_lea.sflag [#allocation7], 1
    %3939 = vsyncpa %s3938, 1
    %3940 = vsyncpa [#allocation5], 1
    %s3941 = scalar_lea.sflag [#allocation5], 1
    %3942 = vsyncpa %s3941, 1

</llo_original>
